<compile_context>
chip_gen: v7x
topology: tpu7x:2x2x1
jax: 0.10.0
libtpu: 0.0.40
codegen_flags: <defaults>
</compile_context>

<pallas_src>
import functools

import jax
import jax.numpy as jnp
from jax.experimental import pallas as pl
from jax.experimental.pallas import tpu as pltpu

KSIZE = 7
PAD = (KSIZE - 1) // 2
BN_EPS = 1e-5


def cbam_kernel(H, W, x_ref, w1_ref, b1_ref, w2_ref, b2_ref, wc_ref, out_ref):
    # x_ref:  (1, C, H*W) VMEM (lane-dense)
    # w1_ref: (hidden, C) VMEM   b1_ref: (hidden, 1) VMEM
    # w2_ref: (C, hidden) VMEM   b2_ref: (C, 1)      VMEM
    # wc_ref: (2*7*7 + 1,) SMEM  (BN-folded conv weights + bias, flattened)
    # out_ref: (1, C, H*W) VMEM
    x2d = x_ref[0]                                     # (C, HW) float32

    # ---------------- Channel gate ----------------
    avg_col = jnp.mean(x2d, axis=1, keepdims=True)     # (C, 1)  lane reduce
    max_col = jnp.max(x2d, axis=1, keepdims=True)      # (C, 1)
    pools = jnp.concatenate([avg_col, max_col], axis=1)            # (C, 2)

    # Batched MLP over both pooled vectors (one pass instead of 4 N=1 matmuls).
    h = jnp.dot(w1_ref[...], pools, preferred_element_type=jnp.float32) + b1_ref[...]
    h = jnp.maximum(h, 0.0)                                         # (hidden, 2)
    att = jnp.dot(w2_ref[...], h, preferred_element_type=jnp.float32) + b2_ref[...]
    ch_scale = jax.nn.sigmoid(att[:, 0:1] + att[:, 1:2])            # (C, 1)

    # ---------------- Spatial gate ----------------
    cmax_flat = jnp.max(x2d, axis=0, keepdims=True)                 # (1, HW)
    cmean_flat = jnp.mean(x2d, axis=0, keepdims=True)               # (1, HW)

    def to_hw(flat):  # (1, HW) -> (H, W), built with concats (stays in registers)
        return jnp.concatenate([flat[:, i * W:(i + 1) * W] for i in range(H)], axis=0)

    def pad2d(m):     # (H, W) -> (H+2*PAD, W+2*PAD), zero border, in registers
        zr = jnp.zeros((PAD, W), jnp.float32)
        m = jnp.concatenate([zr, m, zr], axis=0)
        zc = jnp.zeros((H + 2 * PAD, PAD), jnp.float32)
        return jnp.concatenate([zc, m, zc], axis=1)

    pmax = pad2d(to_hw(cmax_flat))
    pmean = pad2d(to_hw(cmean_flat))

    # 7x7 conv (stride 1, pad 3), 2 in-channels -> 1 out-channel, BatchNorm2d(1)
    # folded into weights/bias.  ki (sublane) shift hoisted out of the kj loop.
    acc = jnp.full((H, W), wc_ref[2 * KSIZE * KSIZE], dtype=jnp.float32)  # bias
    for c, pm in enumerate((pmax, pmean)):
        for ki in range(KSIZE):
            row_slab = pm[ki:ki + H, :]                 # (H, W + 2*PAD)
            for kj in range(KSIZE):
                w = wc_ref[c * KSIZE * KSIZE + ki * KSIZE + kj]
                acc = acc + w * row_slab[:, kj:kj + W]
    sp = jax.nn.sigmoid(acc)                            # (H, W)

    # Flatten back to a lane-dense row (1, HW) with lane concats (cheap XLU work).
    sp_flat = jnp.concatenate([sp[i:i + 1, :] for i in range(H)], axis=1)  # (1, HW)

    # -------- Combine: channel_out * spatial_out; single lane-dense store ------
    out_ref[0] = (ch_scale * sp_flat).astype(out_ref.dtype)         # (C, HW)


def cbam_pallas(x, w1, b1, w2, b2, wc_flat):
    B, C, H, W = x.shape
    HW = H * W
    hidden = w1.shape[0]
    x2 = x.reshape(B, C, HW)          # free metadata reshape for contiguous NCHW
    out2 = pl.pallas_call(
        functools.partial(cbam_kernel, H, W),
        out_shape=jax.ShapeDtypeStruct((B, C, HW), jnp.float32),
        grid_spec=pltpu.PrefetchScalarGridSpec(
            num_scalar_prefetch=0,
            grid=(B,),
            in_specs=[
                pl.BlockSpec((1, C, HW), lambda b: (b, 0, 0)),
                pl.BlockSpec((hidden, C), lambda b: (0, 0)),
                pl.BlockSpec((hidden, 1), lambda b: (0, 0)),
                pl.BlockSpec((C, hidden), lambda b: (0, 0)),
                pl.BlockSpec((C, 1), lambda b: (0, 0)),
                pl.BlockSpec(memory_space=pltpu.MemorySpace.SMEM),
            ],
            out_specs=pl.BlockSpec((1, C, HW), lambda b: (b, 0, 0)),
        ),
        compiler_params=pltpu.CompilerParams(dimension_semantics=("parallel",)),
    )(x2, w1, b1, w2, b2, wc_flat)
    return out2.reshape(B, C, H, W)


def init_params(C, reduction, key):
    hidden = C // reduction
    k1, k2, k3, k4, k5, k6 = jax.random.split(key, 6)
    # ChannelGate MLP: Linear(C, C//r) -> ReLU -> Linear(C//r, C)
    w1 = 0.1 * jax.random.normal(k1, (hidden, C), jnp.float32)   # torch (out, in)
    b1 = 0.1 * jax.random.normal(k2, (hidden, 1), jnp.float32)
    w2 = 0.1 * jax.random.normal(k3, (C, hidden), jnp.float32)
    b2 = 0.1 * jax.random.normal(k4, (C, 1), jnp.float32)
    # SpatialGate conv: Conv2d(2, 1, k=7, pad=3) followed by BatchNorm2d(1)
    conv_w = 0.1 * jax.random.normal(k5, (1, 2, KSIZE, KSIZE), jnp.float32)
    conv_b = 0.1 * jax.random.normal(k6, (1,), jnp.float32)
    # TODO(synk): BatchNorm2d folded with eval-mode running stats (mean=0, var=1,
    # gamma=1, beta=0); training-mode batch statistics are not reproduced.
    bn_scale = 1.0 / jnp.sqrt(1.0 + BN_EPS)
    wcf = conv_w[0] * bn_scale                    # (2, 7, 7)
    bcf = conv_b * bn_scale                       # (1,)
    wc_flat = jnp.concatenate([wcf.reshape(-1), bcf]).astype(jnp.float32)  # (99,)
    return w1, b1, w2, b2, wc_flat, conv_w, conv_b


def cbam_ref(x, w1, b1, w2, b2, conv_w, conv_b):
    # Pure-JAX reference mirroring the PyTorch forward of this spec.
    avg = x.mean(axis=(2, 3))                     # (B, C)
    mx = x.max(axis=(2, 3))                       # (B, C)

    def mlp(v):
        h = jax.nn.relu(v @ w1.T + b1[:, 0])
        return h @ w2.T + b2[:, 0]

    ch = jax.nn.sigmoid(mlp(avg) + mlp(mx))       # (B, C)

    cmax = x.max(axis=1, keepdims=True)           # (B, 1, H, W)
    cmean = x.mean(axis=1, keepdims=True)         # (B, 1, H, W)
    xc = jnp.concatenate([cmax, cmean], axis=1)   # (B, 2, H, W)
    conv = jax.lax.conv_general_dilated(
        xc, conv_w, window_strides=(1, 1), padding=[(PAD, PAD), (PAD, PAD)],
        dimension_numbers=("NCHW", "OIHW", "NCHW")) + conv_b[0]
    bn = conv / jnp.sqrt(1.0 + BN_EPS)            # eval-mode BN with default buffers
    sp = jax.nn.sigmoid(bn)                       # (B, 1, H, W)
    return ch[:, :, None, None] * sp


if __name__ == "__main__":
    B, C, H, W = 2, 32, 16, 16                    # C >= reduction so hidden >= 1
    reduction = 16
    key = jax.random.PRNGKey(0)
    kx, kp = jax.random.split(key)
    x = jax.random.normal(kx, (B, C, H, W), jnp.float32)

    w1, b1, w2, b2, wc_flat, conv_w, conv_b = init_params(C, reduction, kp)

    out = cbam_pallas(x, w1, b1, w2, b2, wc_flat)
    out = jax.block_until_ready(out)

    ref = cbam_ref(x, w1, b1, w2, b2, conv_w, conv_b)
    assert out.shape == (B, C, H, W)
    assert jnp.allclose(out, ref, atol=1e-4, rtol=1e-4), float(jnp.max(jnp.abs(out - ref)))
    print("KERNEL_OK")
</pallas_src>

<mosaic_0001>
module attributes {stable_mosaic.version = 11 : i64} {
  func.func @cbam_kernel(%arg0: i32, %arg1: memref<1x32x256xf32, #tpu.memory_space<vmem>>, %arg2: memref<2x32xf32, #tpu.memory_space<vmem>>, %arg3: memref<2x1xf32, #tpu.memory_space<vmem>>, %arg4: memref<32x2xf32, #tpu.memory_space<vmem>>, %arg5: memref<32x1xf32, #tpu.memory_space<vmem>>, %arg6: memref<99xf32, #tpu.memory_space<smem>>, %arg7: memref<1x32x256xf32, #tpu.memory_space<vmem>>) attributes {dimension_semantics = [#tpu.dimension_semantics<parallel>], iteration_bounds = array<i64: 2>, scalar_prefetch = 0 : i64, scratch_operands = 0 : i64, tpu.core_type = #tpu.core_type<tc>, window_params = [{transform_indices = @transform_0, window_bounds = array<i64: 1, 32, 256>}, {pipeline_mode = #tpu.pipeline_mode<synchronous>, transform_indices = @transform_1, window_bounds = array<i64: 2, 32>}, {pipeline_mode = #tpu.pipeline_mode<synchronous>, transform_indices = @transform_2, window_bounds = array<i64: 2, 1>}, {pipeline_mode = #tpu.pipeline_mode<synchronous>, transform_indices = @transform_3, window_bounds = array<i64: 32, 2>}, {pipeline_mode = #tpu.pipeline_mode<synchronous>, transform_indices = @transform_4, window_bounds = array<i64: 32, 1>}, {transform_indices = @transform_5, window_bounds = array<i64: 99>}, {transform_indices = @transform_6, window_bounds = array<i64: 1, 32, 256>}]} {
    %c0 = arith.constant 0 : index
    %c0_0 = arith.constant 0 : index
    %c0_1 = arith.constant 0 : index
    %0 = vector.load %arg1[%c0, %c0_0, %c0_1] : memref<1x32x256xf32, #tpu.memory_space<vmem>>, vector<1x32x256xf32>
    %1 = vector.shape_cast %0 : vector<1x32x256xf32> to vector<32x256xf32>
    %cst = arith.constant dense<0.000000e+00> : vector<32xf32>
    %2 = vector.multi_reduction <add>, %1, %cst [1] : vector<32x256xf32> to vector<32xf32>
    %3 = vector.shape_cast %2 : vector<32xf32> to vector<32x1xf32>
    %cst_2 = arith.constant 2.560000e+02 : f32
    %4 = vector.broadcast %cst_2 : f32 to vector<32x1xf32>
    %5 = arith.divf %3, %4 : vector<32x1xf32>
    %cst_3 = arith.constant dense<0xFF800000> : vector<32xf32>
    %6 = vector.multi_reduction <maximumf>, %1, %cst_3 [1] : vector<32x256xf32> to vector<32xf32>
    %7 = vector.shape_cast %6 : vector<32xf32> to vector<32x1xf32>
    %8 = tpu.concatenate %5, %7 in 1 : vector<32x1xf32>, vector<32x1xf32> -> vector<32x2xf32>
    %c0_4 = arith.constant 0 : index
    %c0_5 = arith.constant 0 : index
    %9 = vector.load %arg2[%c0_4, %c0_5] : memref<2x32xf32, #tpu.memory_space<vmem>>, vector<2x32xf32>
    %cst_6 = arith.constant dense<0.000000e+00> : vector<2x2xf32>
    %10 = tpu.matmul %9, %8, %cst_6 {dimension_numbers = #tpu.dot_dimension_numbers<[1], [0], [0], [1], [0, 0, 1, 1], [], []>} : vector<2x32xf32>, vector<32x2xf32>, vector<2x2xf32> -> vector<2x2xf32>
    %c0_7 = arith.constant 0 : index
    %c0_8 = arith.constant 0 : index
    %11 = vector.load %arg3[%c0_7, %c0_8] : memref<2x1xf32, #tpu.memory_space<vmem>>, vector<2x1xf32>
    %12 = vector.broadcast %11 : vector<2x1xf32> to vector<2x2xf32>
    %13 = arith.addf %10, %12 : vector<2x2xf32>
    %cst_9 = arith.constant 0.000000e+00 : f32
    %14 = vector.broadcast %cst_9 : f32 to vector<2x2xf32>
    %15 = arith.maximumf %13, %14 : vector<2x2xf32>
    %c0_10 = arith.constant 0 : index
    %c0_11 = arith.constant 0 : index
    %16 = vector.load %arg4[%c0_10, %c0_11] : memref<32x2xf32, #tpu.memory_space<vmem>>, vector<32x2xf32>
    %cst_12 = arith.constant dense<0.000000e+00> : vector<32x2xf32>
    %17 = tpu.matmul %16, %15, %cst_12 {dimension_numbers = #tpu.dot_dimension_numbers<[1], [0], [0], [1], [0, 0, 1, 1], [], []>} : vector<32x2xf32>, vector<2x2xf32>, vector<32x2xf32> -> vector<32x2xf32>
    %c0_13 = arith.constant 0 : index
    %c0_14 = arith.constant 0 : index
    %18 = vector.load %arg5[%c0_13, %c0_14] : memref<32x1xf32, #tpu.memory_space<vmem>>, vector<32x1xf32>
    %19 = vector.broadcast %18 : vector<32x1xf32> to vector<32x2xf32>
    %20 = arith.addf %17, %19 : vector<32x2xf32>
    %21 = vector.extract_strided_slice %20 {offsets = [0, 0], sizes = [32, 1], strides = [1, 1]} : vector<32x2xf32> to vector<32x1xf32>
    %22 = vector.extract_strided_slice %20 {offsets = [0, 1], sizes = [32, 1], strides = [1, 1]} : vector<32x2xf32> to vector<32x1xf32>
    %23 = arith.addf %21, %22 : vector<32x1xf32>
    %24 = arith.negf %23 : vector<32x1xf32>
    %25 = math.exp %24 : vector<32x1xf32>
    %cst_15 = arith.constant 1.000000e+00 : f32
    %26 = vector.broadcast %cst_15 : f32 to vector<32x1xf32>
    %27 = arith.addf %26, %25 : vector<32x1xf32>
    %28 = arith.divf %26, %27 : vector<32x1xf32>
    %cst_16 = arith.constant dense<0xFF800000> : vector<256xf32>
    %29 = vector.multi_reduction <maximumf>, %1, %cst_16 [0] : vector<32x256xf32> to vector<256xf32>
    %30 = vector.shape_cast %29 : vector<256xf32> to vector<1x256xf32>
    %cst_17 = arith.constant dense<0.000000e+00> : vector<256xf32>
    %31 = vector.multi_reduction <add>, %1, %cst_17 [0] : vector<32x256xf32> to vector<256xf32>
    %32 = vector.shape_cast %31 : vector<256xf32> to vector<1x256xf32>
    %cst_18 = arith.constant 3.200000e+01 : f32
    %33 = vector.broadcast %cst_18 : f32 to vector<1x256xf32>
    %34 = arith.divf %32, %33 : vector<1x256xf32>
    %35 = vector.extract_strided_slice %30 {offsets = [0, 0], sizes = [1, 16], strides = [1, 1]} : vector<1x256xf32> to vector<1x16xf32>
    %36 = vector.extract_strided_slice %30 {offsets = [0, 16], sizes = [1, 16], strides = [1, 1]} : vector<1x256xf32> to vector<1x16xf32>
    %37 = vector.extract_strided_slice %30 {offsets = [0, 32], sizes = [1, 16], strides = [1, 1]} : vector<1x256xf32> to vector<1x16xf32>
    %38 = vector.extract_strided_slice %30 {offsets = [0, 48], sizes = [1, 16], strides = [1, 1]} : vector<1x256xf32> to vector<1x16xf32>
    %39 = vector.extract_strided_slice %30 {offsets = [0, 64], sizes = [1, 16], strides = [1, 1]} : vector<1x256xf32> to vector<1x16xf32>
    %40 = vector.extract_strided_slice %30 {offsets = [0, 80], sizes = [1, 16], strides = [1, 1]} : vector<1x256xf32> to vector<1x16xf32>
    %41 = vector.extract_strided_slice %30 {offsets = [0, 96], sizes = [1, 16], strides = [1, 1]} : vector<1x256xf32> to vector<1x16xf32>
    %42 = vector.extract_strided_slice %30 {offsets = [0, 112], sizes = [1, 16], strides = [1, 1]} : vector<1x256xf32> to vector<1x16xf32>
    %43 = vector.extract_strided_slice %30 {offsets = [0, 128], sizes = [1, 16], strides = [1, 1]} : vector<1x256xf32> to vector<1x16xf32>
    %44 = vector.extract_strided_slice %30 {offsets = [0, 144], sizes = [1, 16], strides = [1, 1]} : vector<1x256xf32> to vector<1x16xf32>
    %45 = vector.extract_strided_slice %30 {offsets = [0, 160], sizes = [1, 16], strides = [1, 1]} : vector<1x256xf32> to vector<1x16xf32>
    %46 = vector.extract_strided_slice %30 {offsets = [0, 176], sizes = [1, 16], strides = [1, 1]} : vector<1x256xf32> to vector<1x16xf32>
    %47 = vector.extract_strided_slice %30 {offsets = [0, 192], sizes = [1, 16], strides = [1, 1]} : vector<1x256xf32> to vector<1x16xf32>
    %48 = vector.extract_strided_slice %30 {offsets = [0, 208], sizes = [1, 16], strides = [1, 1]} : vector<1x256xf32> to vector<1x16xf32>
    %49 = vector.extract_strided_slice %30 {offsets = [0, 224], sizes = [1, 16], strides = [1, 1]} : vector<1x256xf32> to vector<1x16xf32>
    %50 = vector.extract_strided_slice %30 {offsets = [0, 240], sizes = [1, 16], strides = [1, 1]} : vector<1x256xf32> to vector<1x16xf32>
    %51 = tpu.concatenate %35, %36, %37, %38, %39, %40, %41, %42, %43, %44, %45, %46, %47, %48, %49, %50 in 0 : vector<1x16xf32>, vector<1x16xf32>, vector<1x16xf32>, vector<1x16xf32>, vector<1x16xf32>, vector<1x16xf32>, vector<1x16xf32>, vector<1x16xf32>, vector<1x16xf32>, vector<1x16xf32>, vector<1x16xf32>, vector<1x16xf32>, vector<1x16xf32>, vector<1x16xf32>, vector<1x16xf32>, vector<1x16xf32> -> vector<16x16xf32>
    %cst_19 = arith.constant 0.000000e+00 : f32
    %52 = vector.broadcast %cst_19 : f32 to vector<3x16xf32>
    %53 = tpu.concatenate %52, %51, %52 in 0 : vector<3x16xf32>, vector<16x16xf32>, vector<3x16xf32> -> vector<22x16xf32>
    %cst_20 = arith.constant 0.000000e+00 : f32
    %54 = vector.broadcast %cst_20 : f32 to vector<22x3xf32>
    %55 = tpu.concatenate %54, %53, %54 in 1 : vector<22x3xf32>, vector<22x16xf32>, vector<22x3xf32> -> vector<22x22xf32>
    %56 = vector.extract_strided_slice %34 {offsets = [0, 0], sizes = [1, 16], strides = [1, 1]} : vector<1x256xf32> to vector<1x16xf32>
    %57 = vector.extract_strided_slice %34 {offsets = [0, 16], sizes = [1, 16], strides = [1, 1]} : vector<1x256xf32> to vector<1x16xf32>
    %58 = vector.extract_strided_slice %34 {offsets = [0, 32], sizes = [1, 16], strides = [1, 1]} : vector<1x256xf32> to vector<1x16xf32>
    %59 = vector.extract_strided_slice %34 {offsets = [0, 48], sizes = [1, 16], strides = [1, 1]} : vector<1x256xf32> to vector<1x16xf32>
    %60 = vector.extract_strided_slice %34 {offsets = [0, 64], sizes = [1, 16], strides = [1, 1]} : vector<1x256xf32> to vector<1x16xf32>
    %61 = vector.extract_strided_slice %34 {offsets = [0, 80], sizes = [1, 16], strides = [1, 1]} : vector<1x256xf32> to vector<1x16xf32>
    %62 = vector.extract_strided_slice %34 {offsets = [0, 96], sizes = [1, 16], strides = [1, 1]} : vector<1x256xf32> to vector<1x16xf32>
    %63 = vector.extract_strided_slice %34 {offsets = [0, 112], sizes = [1, 16], strides = [1, 1]} : vector<1x256xf32> to vector<1x16xf32>
    %64 = vector.extract_strided_slice %34 {offsets = [0, 128], sizes = [1, 16], strides = [1, 1]} : vector<1x256xf32> to vector<1x16xf32>
    %65 = vector.extract_strided_slice %34 {offsets = [0, 144], sizes = [1, 16], strides = [1, 1]} : vector<1x256xf32> to vector<1x16xf32>
    %66 = vector.extract_strided_slice %34 {offsets = [0, 160], sizes = [1, 16], strides = [1, 1]} : vector<1x256xf32> to vector<1x16xf32>
    %67 = vector.extract_strided_slice %34 {offsets = [0, 176], sizes = [1, 16], strides = [1, 1]} : vector<1x256xf32> to vector<1x16xf32>
    %68 = vector.extract_strided_slice %34 {offsets = [0, 192], sizes = [1, 16], strides = [1, 1]} : vector<1x256xf32> to vector<1x16xf32>
    %69 = vector.extract_strided_slice %34 {offsets = [0, 208], sizes = [1, 16], strides = [1, 1]} : vector<1x256xf32> to vector<1x16xf32>
    %70 = vector.extract_strided_slice %34 {offsets = [0, 224], sizes = [1, 16], strides = [1, 1]} : vector<1x256xf32> to vector<1x16xf32>
    %71 = vector.extract_strided_slice %34 {offsets = [0, 240], sizes = [1, 16], strides = [1, 1]} : vector<1x256xf32> to vector<1x16xf32>
    %72 = tpu.concatenate %56, %57, %58, %59, %60, %61, %62, %63, %64, %65, %66, %67, %68, %69, %70, %71 in 0 : vector<1x16xf32>, vector<1x16xf32>, vector<1x16xf32>, vector<1x16xf32>, vector<1x16xf32>, vector<1x16xf32>, vector<1x16xf32>, vector<1x16xf32>, vector<1x16xf32>, vector<1x16xf32>, vector<1x16xf32>, vector<1x16xf32>, vector<1x16xf32>, vector<1x16xf32>, vector<1x16xf32>, vector<1x16xf32> -> vector<16x16xf32>
    %cst_21 = arith.constant 0.000000e+00 : f32
    %73 = vector.broadcast %cst_21 : f32 to vector<3x16xf32>
    %74 = tpu.concatenate %73, %72, %73 in 0 : vector<3x16xf32>, vector<16x16xf32>, vector<3x16xf32> -> vector<22x16xf32>
    %cst_22 = arith.constant 0.000000e+00 : f32
    %75 = vector.broadcast %cst_22 : f32 to vector<22x3xf32>
    %76 = tpu.concatenate %75, %74, %75 in 1 : vector<22x3xf32>, vector<22x16xf32>, vector<22x3xf32> -> vector<22x22xf32>
    %c98 = arith.constant 98 : index
    %77 = memref.load %arg6[%c98] : memref<99xf32, #tpu.memory_space<smem>>
    %78 = vector.broadcast %77 : f32 to vector<16x16xf32>
    %79 = vector.extract_strided_slice %55 {offsets = [0, 0], sizes = [16, 22], strides = [1, 1]} : vector<22x22xf32> to vector<16x22xf32>
    %c0_23 = arith.constant 0 : index
    %80 = memref.load %arg6[%c0_23] : memref<99xf32, #tpu.memory_space<smem>>
    %81 = vector.extract_strided_slice %79 {offsets = [0, 0], sizes = [16, 16], strides = [1, 1]} : vector<16x22xf32> to vector<16x16xf32>
    %82 = vector.broadcast %80 : f32 to vector<16x16xf32>
    %83 = arith.mulf %82, %81 : vector<16x16xf32>
    %84 = arith.addf %78, %83 : vector<16x16xf32>
    %c1 = arith.constant 1 : index
    %85 = memref.load %arg6[%c1] : memref<99xf32, #tpu.memory_space<smem>>
    %86 = vector.extract_strided_slice %79 {offsets = [0, 1], sizes = [16, 16], strides = [1, 1]} : vector<16x22xf32> to vector<16x16xf32>
    %87 = vector.broadcast %85 : f32 to vector<16x16xf32>
    %88 = arith.mulf %87, %86 : vector<16x16xf32>
    %89 = arith.addf %84, %88 : vector<16x16xf32>
    %c2 = arith.constant 2 : index
    %90 = memref.load %arg6[%c2] : memref<99xf32, #tpu.memory_space<smem>>
    %91 = vector.extract_strided_slice %79 {offsets = [0, 2], sizes = [16, 16], strides = [1, 1]} : vector<16x22xf32> to vector<16x16xf32>
    %92 = vector.broadcast %90 : f32 to vector<16x16xf32>
    %93 = arith.mulf %92, %91 : vector<16x16xf32>
    %94 = arith.addf %89, %93 : vector<16x16xf32>
    %c3 = arith.constant 3 : index
    %95 = memref.load %arg6[%c3] : memref<99xf32, #tpu.memory_space<smem>>
    %96 = vector.extract_strided_slice %79 {offsets = [0, 3], sizes = [16, 16], strides = [1, 1]} : vector<16x22xf32> to vector<16x16xf32>
    %97 = vector.broadcast %95 : f32 to vector<16x16xf32>
    %98 = arith.mulf %97, %96 : vector<16x16xf32>
    %99 = arith.addf %94, %98 : vector<16x16xf32>
    %c4 = arith.constant 4 : index
    %100 = memref.load %arg6[%c4] : memref<99xf32, #tpu.memory_space<smem>>
    %101 = vector.extract_strided_slice %79 {offsets = [0, 4], sizes = [16, 16], strides = [1, 1]} : vector<16x22xf32> to vector<16x16xf32>
    %102 = vector.broadcast %100 : f32 to vector<16x16xf32>
    %103 = arith.mulf %102, %101 : vector<16x16xf32>
    %104 = arith.addf %99, %103 : vector<16x16xf32>
    %c5 = arith.constant 5 : index
    %105 = memref.load %arg6[%c5] : memref<99xf32, #tpu.memory_space<smem>>
    %106 = vector.extract_strided_slice %79 {offsets = [0, 5], sizes = [16, 16], strides = [1, 1]} : vector<16x22xf32> to vector<16x16xf32>
    %107 = vector.broadcast %105 : f32 to vector<16x16xf32>
    %108 = arith.mulf %107, %106 : vector<16x16xf32>
    %109 = arith.addf %104, %108 : vector<16x16xf32>
    %c6 = arith.constant 6 : index
    %110 = memref.load %arg6[%c6] : memref<99xf32, #tpu.memory_space<smem>>
    %111 = vector.extract_strided_slice %79 {offsets = [0, 6], sizes = [16, 16], strides = [1, 1]} : vector<16x22xf32> to vector<16x16xf32>
    %112 = vector.broadcast %110 : f32 to vector<16x16xf32>
    %113 = arith.mulf %112, %111 : vector<16x16xf32>
    %114 = arith.addf %109, %113 : vector<16x16xf32>
    %115 = vector.extract_strided_slice %55 {offsets = [1, 0], sizes = [16, 22], strides = [1, 1]} : vector<22x22xf32> to vector<16x22xf32>
    %c7 = arith.constant 7 : index
    %116 = memref.load %arg6[%c7] : memref<99xf32, #tpu.memory_space<smem>>
    %117 = vector.extract_strided_slice %115 {offsets = [0, 0], sizes = [16, 16], strides = [1, 1]} : vector<16x22xf32> to vector<16x16xf32>
    %118 = vector.broadcast %116 : f32 to vector<16x16xf32>
    %119 = arith.mulf %118, %117 : vector<16x16xf32>
    %120 = arith.addf %114, %119 : vector<16x16xf32>
    %c8 = arith.constant 8 : index
    %121 = memref.load %arg6[%c8] : memref<99xf32, #tpu.memory_space<smem>>
    %122 = vector.extract_strided_slice %115 {offsets = [0, 1], sizes = [16, 16], strides = [1, 1]} : vector<16x22xf32> to vector<16x16xf32>
    %123 = vector.broadcast %121 : f32 to vector<16x16xf32>
    %124 = arith.mulf %123, %122 : vector<16x16xf32>
    %125 = arith.addf %120, %124 : vector<16x16xf32>
    %c9 = arith.constant 9 : index
    %126 = memref.load %arg6[%c9] : memref<99xf32, #tpu.memory_space<smem>>
    %127 = vector.extract_strided_slice %115 {offsets = [0, 2], sizes = [16, 16], strides = [1, 1]} : vector<16x22xf32> to vector<16x16xf32>
    %128 = vector.broadcast %126 : f32 to vector<16x16xf32>
    %129 = arith.mulf %128, %127 : vector<16x16xf32>
    %130 = arith.addf %125, %129 : vector<16x16xf32>
    %c10 = arith.constant 10 : index
    %131 = memref.load %arg6[%c10] : memref<99xf32, #tpu.memory_space<smem>>
    %132 = vector.extract_strided_slice %115 {offsets = [0, 3], sizes = [16, 16], strides = [1, 1]} : vector<16x22xf32> to vector<16x16xf32>
    %133 = vector.broadcast %131 : f32 to vector<16x16xf32>
    %134 = arith.mulf %133, %132 : vector<16x16xf32>
    %135 = arith.addf %130, %134 : vector<16x16xf32>
    %c11 = arith.constant 11 : index
    %136 = memref.load %arg6[%c11] : memref<99xf32, #tpu.memory_space<smem>>
    %137 = vector.extract_strided_slice %115 {offsets = [0, 4], sizes = [16, 16], strides = [1, 1]} : vector<16x22xf32> to vector<16x16xf32>
    %138 = vector.broadcast %136 : f32 to vector<16x16xf32>
    %139 = arith.mulf %138, %137 : vector<16x16xf32>
    %140 = arith.addf %135, %139 : vector<16x16xf32>
    %c12 = arith.constant 12 : index
    %141 = memref.load %arg6[%c12] : memref<99xf32, #tpu.memory_space<smem>>
    %142 = vector.extract_strided_slice %115 {offsets = [0, 5], sizes = [16, 16], strides = [1, 1]} : vector<16x22xf32> to vector<16x16xf32>
    %143 = vector.broadcast %141 : f32 to vector<16x16xf32>
    %144 = arith.mulf %143, %142 : vector<16x16xf32>
    %145 = arith.addf %140, %144 : vector<16x16xf32>
    %c13 = arith.constant 13 : index
    %146 = memref.load %arg6[%c13] : memref<99xf32, #tpu.memory_space<smem>>
    %147 = vector.extract_strided_slice %115 {offsets = [0, 6], sizes = [16, 16], strides = [1, 1]} : vector<16x22xf32> to vector<16x16xf32>
    %148 = vector.broadcast %146 : f32 to vector<16x16xf32>
    %149 = arith.mulf %148, %147 : vector<16x16xf32>
    %150 = arith.addf %145, %149 : vector<16x16xf32>
    %151 = vector.extract_strided_slice %55 {offsets = [2, 0], sizes = [16, 22], strides = [1, 1]} : vector<22x22xf32> to vector<16x22xf32>
    %c14 = arith.constant 14 : index
    %152 = memref.load %arg6[%c14] : memref<99xf32, #tpu.memory_space<smem>>
    %153 = vector.extract_strided_slice %151 {offsets = [0, 0], sizes = [16, 16], strides = [1, 1]} : vector<16x22xf32> to vector<16x16xf32>
    %154 = vector.broadcast %152 : f32 to vector<16x16xf32>
    %155 = arith.mulf %154, %153 : vector<16x16xf32>
    %156 = arith.addf %150, %155 : vector<16x16xf32>
    %c15 = arith.constant 15 : index
    %157 = memref.load %arg6[%c15] : memref<99xf32, #tpu.memory_space<smem>>
    %158 = vector.extract_strided_slice %151 {offsets = [0, 1], sizes = [16, 16], strides = [1, 1]} : vector<16x22xf32> to vector<16x16xf32>
    %159 = vector.broadcast %157 : f32 to vector<16x16xf32>
    %160 = arith.mulf %159, %158 : vector<16x16xf32>
    %161 = arith.addf %156, %160 : vector<16x16xf32>
    %c16 = arith.constant 16 : index
    %162 = memref.load %arg6[%c16] : memref<99xf32, #tpu.memory_space<smem>>
    %163 = vector.extract_strided_slice %151 {offsets = [0, 2], sizes = [16, 16], strides = [1, 1]} : vector<16x22xf32> to vector<16x16xf32>
    %164 = vector.broadcast %162 : f32 to vector<16x16xf32>
    %165 = arith.mulf %164, %163 : vector<16x16xf32>
    %166 = arith.addf %161, %165 : vector<16x16xf32>
    %c17 = arith.constant 17 : index
    %167 = memref.load %arg6[%c17] : memref<99xf32, #tpu.memory_space<smem>>
    %168 = vector.extract_strided_slice %151 {offsets = [0, 3], sizes = [16, 16], strides = [1, 1]} : vector<16x22xf32> to vector<16x16xf32>
    %169 = vector.broadcast %167 : f32 to vector<16x16xf32>
    %170 = arith.mulf %169, %168 : vector<16x16xf32>
    %171 = arith.addf %166, %170 : vector<16x16xf32>
    %c18 = arith.constant 18 : index
    %172 = memref.load %arg6[%c18] : memref<99xf32, #tpu.memory_space<smem>>
    %173 = vector.extract_strided_slice %151 {offsets = [0, 4], sizes = [16, 16], strides = [1, 1]} : vector<16x22xf32> to vector<16x16xf32>
    %174 = vector.broadcast %172 : f32 to vector<16x16xf32>
    %175 = arith.mulf %174, %173 : vector<16x16xf32>
    %176 = arith.addf %171, %175 : vector<16x16xf32>
    %c19 = arith.constant 19 : index
    %177 = memref.load %arg6[%c19] : memref<99xf32, #tpu.memory_space<smem>>
    %178 = vector.extract_strided_slice %151 {offsets = [0, 5], sizes = [16, 16], strides = [1, 1]} : vector<16x22xf32> to vector<16x16xf32>
    %179 = vector.broadcast %177 : f32 to vector<16x16xf32>
    %180 = arith.mulf %179, %178 : vector<16x16xf32>
    %181 = arith.addf %176, %180 : vector<16x16xf32>
    %c20 = arith.constant 20 : index
    %182 = memref.load %arg6[%c20] : memref<99xf32, #tpu.memory_space<smem>>
    %183 = vector.extract_strided_slice %151 {offsets = [0, 6], sizes = [16, 16], strides = [1, 1]} : vector<16x22xf32> to vector<16x16xf32>
    %184 = vector.broadcast %182 : f32 to vector<16x16xf32>
    %185 = arith.mulf %184, %183 : vector<16x16xf32>
    %186 = arith.addf %181, %185 : vector<16x16xf32>
    %187 = vector.extract_strided_slice %55 {offsets = [3, 0], sizes = [16, 22], strides = [1, 1]} : vector<22x22xf32> to vector<16x22xf32>
    %c21 = arith.constant 21 : index
    %188 = memref.load %arg6[%c21] : memref<99xf32, #tpu.memory_space<smem>>
    %189 = vector.extract_strided_slice %187 {offsets = [0, 0], sizes = [16, 16], strides = [1, 1]} : vector<16x22xf32> to vector<16x16xf32>
    %190 = vector.broadcast %188 : f32 to vector<16x16xf32>
    %191 = arith.mulf %190, %189 : vector<16x16xf32>
    %192 = arith.addf %186, %191 : vector<16x16xf32>
    %c22 = arith.constant 22 : index
    %193 = memref.load %arg6[%c22] : memref<99xf32, #tpu.memory_space<smem>>
    %194 = vector.extract_strided_slice %187 {offsets = [0, 1], sizes = [16, 16], strides = [1, 1]} : vector<16x22xf32> to vector<16x16xf32>
    %195 = vector.broadcast %193 : f32 to vector<16x16xf32>
    %196 = arith.mulf %195, %194 : vector<16x16xf32>
    %197 = arith.addf %192, %196 : vector<16x16xf32>
    %c23 = arith.constant 23 : index
    %198 = memref.load %arg6[%c23] : memref<99xf32, #tpu.memory_space<smem>>
    %199 = vector.extract_strided_slice %187 {offsets = [0, 2], sizes = [16, 16], strides = [1, 1]} : vector<16x22xf32> to vector<16x16xf32>
    %200 = vector.broadcast %198 : f32 to vector<16x16xf32>
    %201 = arith.mulf %200, %199 : vector<16x16xf32>
    %202 = arith.addf %197, %201 : vector<16x16xf32>
    %c24 = arith.constant 24 : index
    %203 = memref.load %arg6[%c24] : memref<99xf32, #tpu.memory_space<smem>>
    %204 = vector.extract_strided_slice %187 {offsets = [0, 3], sizes = [16, 16], strides = [1, 1]} : vector<16x22xf32> to vector<16x16xf32>
    %205 = vector.broadcast %203 : f32 to vector<16x16xf32>
    %206 = arith.mulf %205, %204 : vector<16x16xf32>
    %207 = arith.addf %202, %206 : vector<16x16xf32>
    %c25 = arith.constant 25 : index
    %208 = memref.load %arg6[%c25] : memref<99xf32, #tpu.memory_space<smem>>
    %209 = vector.extract_strided_slice %187 {offsets = [0, 4], sizes = [16, 16], strides = [1, 1]} : vector<16x22xf32> to vector<16x16xf32>
    %210 = vector.broadcast %208 : f32 to vector<16x16xf32>
    %211 = arith.mulf %210, %209 : vector<16x16xf32>
    %212 = arith.addf %207, %211 : vector<16x16xf32>
    %c26 = arith.constant 26 : index
    %213 = memref.load %arg6[%c26] : memref<99xf32, #tpu.memory_space<smem>>
    %214 = vector.extract_strided_slice %187 {offsets = [0, 5], sizes = [16, 16], strides = [1, 1]} : vector<16x22xf32> to vector<16x16xf32>
    %215 = vector.broadcast %213 : f32 to vector<16x16xf32>
    %216 = arith.mulf %215, %214 : vector<16x16xf32>
    %217 = arith.addf %212, %216 : vector<16x16xf32>
    %c27 = arith.constant 27 : index
    %218 = memref.load %arg6[%c27] : memref<99xf32, #tpu.memory_space<smem>>
    %219 = vector.extract_strided_slice %187 {offsets = [0, 6], sizes = [16, 16], strides = [1, 1]} : vector<16x22xf32> to vector<16x16xf32>
    %220 = vector.broadcast %218 : f32 to vector<16x16xf32>
    %221 = arith.mulf %220, %219 : vector<16x16xf32>
    %222 = arith.addf %217, %221 : vector<16x16xf32>
    %223 = vector.extract_strided_slice %55 {offsets = [4, 0], sizes = [16, 22], strides = [1, 1]} : vector<22x22xf32> to vector<16x22xf32>
    %c28 = arith.constant 28 : index
    %224 = memref.load %arg6[%c28] : memref<99xf32, #tpu.memory_space<smem>>
    %225 = vector.extract_strided_slice %223 {offsets = [0, 0], sizes = [16, 16], strides = [1, 1]} : vector<16x22xf32> to vector<16x16xf32>
    %226 = vector.broadcast %224 : f32 to vector<16x16xf32>
    %227 = arith.mulf %226, %225 : vector<16x16xf32>
    %228 = arith.addf %222, %227 : vector<16x16xf32>
    %c29 = arith.constant 29 : index
    %229 = memref.load %arg6[%c29] : memref<99xf32, #tpu.memory_space<smem>>
    %230 = vector.extract_strided_slice %223 {offsets = [0, 1], sizes = [16, 16], strides = [1, 1]} : vector<16x22xf32> to vector<16x16xf32>
    %231 = vector.broadcast %229 : f32 to vector<16x16xf32>
    %232 = arith.mulf %231, %230 : vector<16x16xf32>
    %233 = arith.addf %228, %232 : vector<16x16xf32>
    %c30 = arith.constant 30 : index
    %234 = memref.load %arg6[%c30] : memref<99xf32, #tpu.memory_space<smem>>
    %235 = vector.extract_strided_slice %223 {offsets = [0, 2], sizes = [16, 16], strides = [1, 1]} : vector<16x22xf32> to vector<16x16xf32>
    %236 = vector.broadcast %234 : f32 to vector<16x16xf32>
    %237 = arith.mulf %236, %235 : vector<16x16xf32>
    %238 = arith.addf %233, %237 : vector<16x16xf32>
    %c31 = arith.constant 31 : index
    %239 = memref.load %arg6[%c31] : memref<99xf32, #tpu.memory_space<smem>>
    %240 = vector.extract_strided_slice %223 {offsets = [0, 3], sizes = [16, 16], strides = [1, 1]} : vector<16x22xf32> to vector<16x16xf32>
    %241 = vector.broadcast %239 : f32 to vector<16x16xf32>
    %242 = arith.mulf %241, %240 : vector<16x16xf32>
    %243 = arith.addf %238, %242 : vector<16x16xf32>
    %c32 = arith.constant 32 : index
    %244 = memref.load %arg6[%c32] : memref<99xf32, #tpu.memory_space<smem>>
    %245 = vector.extract_strided_slice %223 {offsets = [0, 4], sizes = [16, 16], strides = [1, 1]} : vector<16x22xf32> to vector<16x16xf32>
    %246 = vector.broadcast %244 : f32 to vector<16x16xf32>
    %247 = arith.mulf %246, %245 : vector<16x16xf32>
    %248 = arith.addf %243, %247 : vector<16x16xf32>
    %c33 = arith.constant 33 : index
    %249 = memref.load %arg6[%c33] : memref<99xf32, #tpu.memory_space<smem>>
    %250 = vector.extract_strided_slice %223 {offsets = [0, 5], sizes = [16, 16], strides = [1, 1]} : vector<16x22xf32> to vector<16x16xf32>
    %251 = vector.broadcast %249 : f32 to vector<16x16xf32>
    %252 = arith.mulf %251, %250 : vector<16x16xf32>
    %253 = arith.addf %248, %252 : vector<16x16xf32>
    %c34 = arith.constant 34 : index
    %254 = memref.load %arg6[%c34] : memref<99xf32, #tpu.memory_space<smem>>
    %255 = vector.extract_strided_slice %223 {offsets = [0, 6], sizes = [16, 16], strides = [1, 1]} : vector<16x22xf32> to vector<16x16xf32>
    %256 = vector.broadcast %254 : f32 to vector<16x16xf32>
    %257 = arith.mulf %256, %255 : vector<16x16xf32>
    %258 = arith.addf %253, %257 : vector<16x16xf32>
    %259 = vector.extract_strided_slice %55 {offsets = [5, 0], sizes = [16, 22], strides = [1, 1]} : vector<22x22xf32> to vector<16x22xf32>
    %c35 = arith.constant 35 : index
    %260 = memref.load %arg6[%c35] : memref<99xf32, #tpu.memory_space<smem>>
    %261 = vector.extract_strided_slice %259 {offsets = [0, 0], sizes = [16, 16], strides = [1, 1]} : vector<16x22xf32> to vector<16x16xf32>
    %262 = vector.broadcast %260 : f32 to vector<16x16xf32>
    %263 = arith.mulf %262, %261 : vector<16x16xf32>
    %264 = arith.addf %258, %263 : vector<16x16xf32>
    %c36 = arith.constant 36 : index
    %265 = memref.load %arg6[%c36] : memref<99xf32, #tpu.memory_space<smem>>
    %266 = vector.extract_strided_slice %259 {offsets = [0, 1], sizes = [16, 16], strides = [1, 1]} : vector<16x22xf32> to vector<16x16xf32>
    %267 = vector.broadcast %265 : f32 to vector<16x16xf32>
    %268 = arith.mulf %267, %266 : vector<16x16xf32>
    %269 = arith.addf %264, %268 : vector<16x16xf32>
    %c37 = arith.constant 37 : index
    %270 = memref.load %arg6[%c37] : memref<99xf32, #tpu.memory_space<smem>>
    %271 = vector.extract_strided_slice %259 {offsets = [0, 2], sizes = [16, 16], strides = [1, 1]} : vector<16x22xf32> to vector<16x16xf32>
    %272 = vector.broadcast %270 : f32 to vector<16x16xf32>
    %273 = arith.mulf %272, %271 : vector<16x16xf32>
    %274 = arith.addf %269, %273 : vector<16x16xf32>
    %c38 = arith.constant 38 : index
    %275 = memref.load %arg6[%c38] : memref<99xf32, #tpu.memory_space<smem>>
    %276 = vector.extract_strided_slice %259 {offsets = [0, 3], sizes = [16, 16], strides = [1, 1]} : vector<16x22xf32> to vector<16x16xf32>
    %277 = vector.broadcast %275 : f32 to vector<16x16xf32>
    %278 = arith.mulf %277, %276 : vector<16x16xf32>
    %279 = arith.addf %274, %278 : vector<16x16xf32>
    %c39 = arith.constant 39 : index
    %280 = memref.load %arg6[%c39] : memref<99xf32, #tpu.memory_space<smem>>
    %281 = vector.extract_strided_slice %259 {offsets = [0, 4], sizes = [16, 16], strides = [1, 1]} : vector<16x22xf32> to vector<16x16xf32>
    %282 = vector.broadcast %280 : f32 to vector<16x16xf32>
    %283 = arith.mulf %282, %281 : vector<16x16xf32>
    %284 = arith.addf %279, %283 : vector<16x16xf32>
    %c40 = arith.constant 40 : index
    %285 = memref.load %arg6[%c40] : memref<99xf32, #tpu.memory_space<smem>>
    %286 = vector.extract_strided_slice %259 {offsets = [0, 5], sizes = [16, 16], strides = [1, 1]} : vector<16x22xf32> to vector<16x16xf32>
    %287 = vector.broadcast %285 : f32 to vector<16x16xf32>
    %288 = arith.mulf %287, %286 : vector<16x16xf32>
    %289 = arith.addf %284, %288 : vector<16x16xf32>
    %c41 = arith.constant 41 : index
    %290 = memref.load %arg6[%c41] : memref<99xf32, #tpu.memory_space<smem>>
    %291 = vector.extract_strided_slice %259 {offsets = [0, 6], sizes = [16, 16], strides = [1, 1]} : vector<16x22xf32> to vector<16x16xf32>
    %292 = vector.broadcast %290 : f32 to vector<16x16xf32>
    %293 = arith.mulf %292, %291 : vector<16x16xf32>
    %294 = arith.addf %289, %293 : vector<16x16xf32>
    %295 = vector.extract_strided_slice %55 {offsets = [6, 0], sizes = [16, 22], strides = [1, 1]} : vector<22x22xf32> to vector<16x22xf32>
    %c42 = arith.constant 42 : index
    %296 = memref.load %arg6[%c42] : memref<99xf32, #tpu.memory_space<smem>>
    %297 = vector.extract_strided_slice %295 {offsets = [0, 0], sizes = [16, 16], strides = [1, 1]} : vector<16x22xf32> to vector<16x16xf32>
    %298 = vector.broadcast %296 : f32 to vector<16x16xf32>
    %299 = arith.mulf %298, %297 : vector<16x16xf32>
    %300 = arith.addf %294, %299 : vector<16x16xf32>
    %c43 = arith.constant 43 : index
    %301 = memref.load %arg6[%c43] : memref<99xf32, #tpu.memory_space<smem>>
    %302 = vector.extract_strided_slice %295 {offsets = [0, 1], sizes = [16, 16], strides = [1, 1]} : vector<16x22xf32> to vector<16x16xf32>
    %303 = vector.broadcast %301 : f32 to vector<16x16xf32>
    %304 = arith.mulf %303, %302 : vector<16x16xf32>
    %305 = arith.addf %300, %304 : vector<16x16xf32>
    %c44 = arith.constant 44 : index
    %306 = memref.load %arg6[%c44] : memref<99xf32, #tpu.memory_space<smem>>
    %307 = vector.extract_strided_slice %295 {offsets = [0, 2], sizes = [16, 16], strides = [1, 1]} : vector<16x22xf32> to vector<16x16xf32>
    %308 = vector.broadcast %306 : f32 to vector<16x16xf32>
    %309 = arith.mulf %308, %307 : vector<16x16xf32>
    %310 = arith.addf %305, %309 : vector<16x16xf32>
    %c45 = arith.constant 45 : index
    %311 = memref.load %arg6[%c45] : memref<99xf32, #tpu.memory_space<smem>>
    %312 = vector.extract_strided_slice %295 {offsets = [0, 3], sizes = [16, 16], strides = [1, 1]} : vector<16x22xf32> to vector<16x16xf32>
    %313 = vector.broadcast %311 : f32 to vector<16x16xf32>
    %314 = arith.mulf %313, %312 : vector<16x16xf32>
    %315 = arith.addf %310, %314 : vector<16x16xf32>
    %c46 = arith.constant 46 : index
    %316 = memref.load %arg6[%c46] : memref<99xf32, #tpu.memory_space<smem>>
    %317 = vector.extract_strided_slice %295 {offsets = [0, 4], sizes = [16, 16], strides = [1, 1]} : vector<16x22xf32> to vector<16x16xf32>
    %318 = vector.broadcast %316 : f32 to vector<16x16xf32>
    %319 = arith.mulf %318, %317 : vector<16x16xf32>
    %320 = arith.addf %315, %319 : vector<16x16xf32>
    %c47 = arith.constant 47 : index
    %321 = memref.load %arg6[%c47] : memref<99xf32, #tpu.memory_space<smem>>
    %322 = vector.extract_strided_slice %295 {offsets = [0, 5], sizes = [16, 16], strides = [1, 1]} : vector<16x22xf32> to vector<16x16xf32>
    %323 = vector.broadcast %321 : f32 to vector<16x16xf32>
    %324 = arith.mulf %323, %322 : vector<16x16xf32>
    %325 = arith.addf %320, %324 : vector<16x16xf32>
    %c48 = arith.constant 48 : index
    %326 = memref.load %arg6[%c48] : memref<99xf32, #tpu.memory_space<smem>>
    %327 = vector.extract_strided_slice %295 {offsets = [0, 6], sizes = [16, 16], strides = [1, 1]} : vector<16x22xf32> to vector<16x16xf32>
    %328 = vector.broadcast %326 : f32 to vector<16x16xf32>
    %329 = arith.mulf %328, %327 : vector<16x16xf32>
    %330 = arith.addf %325, %329 : vector<16x16xf32>
    %331 = vector.extract_strided_slice %76 {offsets = [0, 0], sizes = [16, 22], strides = [1, 1]} : vector<22x22xf32> to vector<16x22xf32>
    %c49 = arith.constant 49 : index
    %332 = memref.load %arg6[%c49] : memref<99xf32, #tpu.memory_space<smem>>
    %333 = vector.extract_strided_slice %331 {offsets = [0, 0], sizes = [16, 16], strides = [1, 1]} : vector<16x22xf32> to vector<16x16xf32>
    %334 = vector.broadcast %332 : f32 to vector<16x16xf32>
    %335 = arith.mulf %334, %333 : vector<16x16xf32>
    %336 = arith.addf %330, %335 : vector<16x16xf32>
    %c50 = arith.constant 50 : index
    %337 = memref.load %arg6[%c50] : memref<99xf32, #tpu.memory_space<smem>>
    %338 = vector.extract_strided_slice %331 {offsets = [0, 1], sizes = [16, 16], strides = [1, 1]} : vector<16x22xf32> to vector<16x16xf32>
    %339 = vector.broadcast %337 : f32 to vector<16x16xf32>
    %340 = arith.mulf %339, %338 : vector<16x16xf32>
    %341 = arith.addf %336, %340 : vector<16x16xf32>
    %c51 = arith.constant 51 : index
    %342 = memref.load %arg6[%c51] : memref<99xf32, #tpu.memory_space<smem>>
    %343 = vector.extract_strided_slice %331 {offsets = [0, 2], sizes = [16, 16], strides = [1, 1]} : vector<16x22xf32> to vector<16x16xf32>
    %344 = vector.broadcast %342 : f32 to vector<16x16xf32>
    %345 = arith.mulf %344, %343 : vector<16x16xf32>
    %346 = arith.addf %341, %345 : vector<16x16xf32>
    %c52 = arith.constant 52 : index
    %347 = memref.load %arg6[%c52] : memref<99xf32, #tpu.memory_space<smem>>
    %348 = vector.extract_strided_slice %331 {offsets = [0, 3], sizes = [16, 16], strides = [1, 1]} : vector<16x22xf32> to vector<16x16xf32>
    %349 = vector.broadcast %347 : f32 to vector<16x16xf32>
    %350 = arith.mulf %349, %348 : vector<16x16xf32>
    %351 = arith.addf %346, %350 : vector<16x16xf32>
    %c53 = arith.constant 53 : index
    %352 = memref.load %arg6[%c53] : memref<99xf32, #tpu.memory_space<smem>>
    %353 = vector.extract_strided_slice %331 {offsets = [0, 4], sizes = [16, 16], strides = [1, 1]} : vector<16x22xf32> to vector<16x16xf32>
    %354 = vector.broadcast %352 : f32 to vector<16x16xf32>
    %355 = arith.mulf %354, %353 : vector<16x16xf32>
    %356 = arith.addf %351, %355 : vector<16x16xf32>
    %c54 = arith.constant 54 : index
    %357 = memref.load %arg6[%c54] : memref<99xf32, #tpu.memory_space<smem>>
    %358 = vector.extract_strided_slice %331 {offsets = [0, 5], sizes = [16, 16], strides = [1, 1]} : vector<16x22xf32> to vector<16x16xf32>
    %359 = vector.broadcast %357 : f32 to vector<16x16xf32>
    %360 = arith.mulf %359, %358 : vector<16x16xf32>
    %361 = arith.addf %356, %360 : vector<16x16xf32>
    %c55 = arith.constant 55 : index
    %362 = memref.load %arg6[%c55] : memref<99xf32, #tpu.memory_space<smem>>
    %363 = vector.extract_strided_slice %331 {offsets = [0, 6], sizes = [16, 16], strides = [1, 1]} : vector<16x22xf32> to vector<16x16xf32>
    %364 = vector.broadcast %362 : f32 to vector<16x16xf32>
    %365 = arith.mulf %364, %363 : vector<16x16xf32>
    %366 = arith.addf %361, %365 : vector<16x16xf32>
    %367 = vector.extract_strided_slice %76 {offsets = [1, 0], sizes = [16, 22], strides = [1, 1]} : vector<22x22xf32> to vector<16x22xf32>
    %c56 = arith.constant 56 : index
    %368 = memref.load %arg6[%c56] : memref<99xf32, #tpu.memory_space<smem>>
    %369 = vector.extract_strided_slice %367 {offsets = [0, 0], sizes = [16, 16], strides = [1, 1]} : vector<16x22xf32> to vector<16x16xf32>
    %370 = vector.broadcast %368 : f32 to vector<16x16xf32>
    %371 = arith.mulf %370, %369 : vector<16x16xf32>
    %372 = arith.addf %366, %371 : vector<16x16xf32>
    %c57 = arith.constant 57 : index
    %373 = memref.load %arg6[%c57] : memref<99xf32, #tpu.memory_space<smem>>
    %374 = vector.extract_strided_slice %367 {offsets = [0, 1], sizes = [16, 16], strides = [1, 1]} : vector<16x22xf32> to vector<16x16xf32>
    %375 = vector.broadcast %373 : f32 to vector<16x16xf32>
    %376 = arith.mulf %375, %374 : vector<16x16xf32>
    %377 = arith.addf %372, %376 : vector<16x16xf32>
    %c58 = arith.constant 58 : index
    %378 = memref.load %arg6[%c58] : memref<99xf32, #tpu.memory_space<smem>>
    %379 = vector.extract_strided_slice %367 {offsets = [0, 2], sizes = [16, 16], strides = [1, 1]} : vector<16x22xf32> to vector<16x16xf32>
    %380 = vector.broadcast %378 : f32 to vector<16x16xf32>
    %381 = arith.mulf %380, %379 : vector<16x16xf32>
    %382 = arith.addf %377, %381 : vector<16x16xf32>
    %c59 = arith.constant 59 : index
    %383 = memref.load %arg6[%c59] : memref<99xf32, #tpu.memory_space<smem>>
    %384 = vector.extract_strided_slice %367 {offsets = [0, 3], sizes = [16, 16], strides = [1, 1]} : vector<16x22xf32> to vector<16x16xf32>
    %385 = vector.broadcast %383 : f32 to vector<16x16xf32>
    %386 = arith.mulf %385, %384 : vector<16x16xf32>
    %387 = arith.addf %382, %386 : vector<16x16xf32>
    %c60 = arith.constant 60 : index
    %388 = memref.load %arg6[%c60] : memref<99xf32, #tpu.memory_space<smem>>
    %389 = vector.extract_strided_slice %367 {offsets = [0, 4], sizes = [16, 16], strides = [1, 1]} : vector<16x22xf32> to vector<16x16xf32>
    %390 = vector.broadcast %388 : f32 to vector<16x16xf32>
    %391 = arith.mulf %390, %389 : vector<16x16xf32>
    %392 = arith.addf %387, %391 : vector<16x16xf32>
    %c61 = arith.constant 61 : index
    %393 = memref.load %arg6[%c61] : memref<99xf32, #tpu.memory_space<smem>>
    %394 = vector.extract_strided_slice %367 {offsets = [0, 5], sizes = [16, 16], strides = [1, 1]} : vector<16x22xf32> to vector<16x16xf32>
    %395 = vector.broadcast %393 : f32 to vector<16x16xf32>
    %396 = arith.mulf %395, %394 : vector<16x16xf32>
    %397 = arith.addf %392, %396 : vector<16x16xf32>
    %c62 = arith.constant 62 : index
    %398 = memref.load %arg6[%c62] : memref<99xf32, #tpu.memory_space<smem>>
    %399 = vector.extract_strided_slice %367 {offsets = [0, 6], sizes = [16, 16], strides = [1, 1]} : vector<16x22xf32> to vector<16x16xf32>
    %400 = vector.broadcast %398 : f32 to vector<16x16xf32>
    %401 = arith.mulf %400, %399 : vector<16x16xf32>
    %402 = arith.addf %397, %401 : vector<16x16xf32>
    %403 = vector.extract_strided_slice %76 {offsets = [2, 0], sizes = [16, 22], strides = [1, 1]} : vector<22x22xf32> to vector<16x22xf32>
    %c63 = arith.constant 63 : index
    %404 = memref.load %arg6[%c63] : memref<99xf32, #tpu.memory_space<smem>>
    %405 = vector.extract_strided_slice %403 {offsets = [0, 0], sizes = [16, 16], strides = [1, 1]} : vector<16x22xf32> to vector<16x16xf32>
    %406 = vector.broadcast %404 : f32 to vector<16x16xf32>
    %407 = arith.mulf %406, %405 : vector<16x16xf32>
    %408 = arith.addf %402, %407 : vector<16x16xf32>
    %c64 = arith.constant 64 : index
    %409 = memref.load %arg6[%c64] : memref<99xf32, #tpu.memory_space<smem>>
    %410 = vector.extract_strided_slice %403 {offsets = [0, 1], sizes = [16, 16], strides = [1, 1]} : vector<16x22xf32> to vector<16x16xf32>
    %411 = vector.broadcast %409 : f32 to vector<16x16xf32>
    %412 = arith.mulf %411, %410 : vector<16x16xf32>
    %413 = arith.addf %408, %412 : vector<16x16xf32>
    %c65 = arith.constant 65 : index
    %414 = memref.load %arg6[%c65] : memref<99xf32, #tpu.memory_space<smem>>
    %415 = vector.extract_strided_slice %403 {offsets = [0, 2], sizes = [16, 16], strides = [1, 1]} : vector<16x22xf32> to vector<16x16xf32>
    %416 = vector.broadcast %414 : f32 to vector<16x16xf32>
    %417 = arith.mulf %416, %415 : vector<16x16xf32>
    %418 = arith.addf %413, %417 : vector<16x16xf32>
    %c66 = arith.constant 66 : index
    %419 = memref.load %arg6[%c66] : memref<99xf32, #tpu.memory_space<smem>>
    %420 = vector.extract_strided_slice %403 {offsets = [0, 3], sizes = [16, 16], strides = [1, 1]} : vector<16x22xf32> to vector<16x16xf32>
    %421 = vector.broadcast %419 : f32 to vector<16x16xf32>
    %422 = arith.mulf %421, %420 : vector<16x16xf32>
    %423 = arith.addf %418, %422 : vector<16x16xf32>
    %c67 = arith.constant 67 : index
    %424 = memref.load %arg6[%c67] : memref<99xf32, #tpu.memory_space<smem>>
    %425 = vector.extract_strided_slice %403 {offsets = [0, 4], sizes = [16, 16], strides = [1, 1]} : vector<16x22xf32> to vector<16x16xf32>
    %426 = vector.broadcast %424 : f32 to vector<16x16xf32>
    %427 = arith.mulf %426, %425 : vector<16x16xf32>
    %428 = arith.addf %423, %427 : vector<16x16xf32>
    %c68 = arith.constant 68 : index
    %429 = memref.load %arg6[%c68] : memref<99xf32, #tpu.memory_space<smem>>
    %430 = vector.extract_strided_slice %403 {offsets = [0, 5], sizes = [16, 16], strides = [1, 1]} : vector<16x22xf32> to vector<16x16xf32>
    %431 = vector.broadcast %429 : f32 to vector<16x16xf32>
    %432 = arith.mulf %431, %430 : vector<16x16xf32>
    %433 = arith.addf %428, %432 : vector<16x16xf32>
    %c69 = arith.constant 69 : index
    %434 = memref.load %arg6[%c69] : memref<99xf32, #tpu.memory_space<smem>>
    %435 = vector.extract_strided_slice %403 {offsets = [0, 6], sizes = [16, 16], strides = [1, 1]} : vector<16x22xf32> to vector<16x16xf32>
    %436 = vector.broadcast %434 : f32 to vector<16x16xf32>
    %437 = arith.mulf %436, %435 : vector<16x16xf32>
    %438 = arith.addf %433, %437 : vector<16x16xf32>
    %439 = vector.extract_strided_slice %76 {offsets = [3, 0], sizes = [16, 22], strides = [1, 1]} : vector<22x22xf32> to vector<16x22xf32>
    %c70 = arith.constant 70 : index
    %440 = memref.load %arg6[%c70] : memref<99xf32, #tpu.memory_space<smem>>
    %441 = vector.extract_strided_slice %439 {offsets = [0, 0], sizes = [16, 16], strides = [1, 1]} : vector<16x22xf32> to vector<16x16xf32>
    %442 = vector.broadcast %440 : f32 to vector<16x16xf32>
    %443 = arith.mulf %442, %441 : vector<16x16xf32>
    %444 = arith.addf %438, %443 : vector<16x16xf32>
    %c71 = arith.constant 71 : index
    %445 = memref.load %arg6[%c71] : memref<99xf32, #tpu.memory_space<smem>>
    %446 = vector.extract_strided_slice %439 {offsets = [0, 1], sizes = [16, 16], strides = [1, 1]} : vector<16x22xf32> to vector<16x16xf32>
    %447 = vector.broadcast %445 : f32 to vector<16x16xf32>
    %448 = arith.mulf %447, %446 : vector<16x16xf32>
    %449 = arith.addf %444, %448 : vector<16x16xf32>
    %c72 = arith.constant 72 : index
    %450 = memref.load %arg6[%c72] : memref<99xf32, #tpu.memory_space<smem>>
    %451 = vector.extract_strided_slice %439 {offsets = [0, 2], sizes = [16, 16], strides = [1, 1]} : vector<16x22xf32> to vector<16x16xf32>
    %452 = vector.broadcast %450 : f32 to vector<16x16xf32>
    %453 = arith.mulf %452, %451 : vector<16x16xf32>
    %454 = arith.addf %449, %453 : vector<16x16xf32>
    %c73 = arith.constant 73 : index
    %455 = memref.load %arg6[%c73] : memref<99xf32, #tpu.memory_space<smem>>
    %456 = vector.extract_strided_slice %439 {offsets = [0, 3], sizes = [16, 16], strides = [1, 1]} : vector<16x22xf32> to vector<16x16xf32>
    %457 = vector.broadcast %455 : f32 to vector<16x16xf32>
    %458 = arith.mulf %457, %456 : vector<16x16xf32>
    %459 = arith.addf %454, %458 : vector<16x16xf32>
    %c74 = arith.constant 74 : index
    %460 = memref.load %arg6[%c74] : memref<99xf32, #tpu.memory_space<smem>>
    %461 = vector.extract_strided_slice %439 {offsets = [0, 4], sizes = [16, 16], strides = [1, 1]} : vector<16x22xf32> to vector<16x16xf32>
    %462 = vector.broadcast %460 : f32 to vector<16x16xf32>
    %463 = arith.mulf %462, %461 : vector<16x16xf32>
    %464 = arith.addf %459, %463 : vector<16x16xf32>
    %c75 = arith.constant 75 : index
    %465 = memref.load %arg6[%c75] : memref<99xf32, #tpu.memory_space<smem>>
    %466 = vector.extract_strided_slice %439 {offsets = [0, 5], sizes = [16, 16], strides = [1, 1]} : vector<16x22xf32> to vector<16x16xf32>
    %467 = vector.broadcast %465 : f32 to vector<16x16xf32>
    %468 = arith.mulf %467, %466 : vector<16x16xf32>
    %469 = arith.addf %464, %468 : vector<16x16xf32>
    %c76 = arith.constant 76 : index
    %470 = memref.load %arg6[%c76] : memref<99xf32, #tpu.memory_space<smem>>
    %471 = vector.extract_strided_slice %439 {offsets = [0, 6], sizes = [16, 16], strides = [1, 1]} : vector<16x22xf32> to vector<16x16xf32>
    %472 = vector.broadcast %470 : f32 to vector<16x16xf32>
    %473 = arith.mulf %472, %471 : vector<16x16xf32>
    %474 = arith.addf %469, %473 : vector<16x16xf32>
    %475 = vector.extract_strided_slice %76 {offsets = [4, 0], sizes = [16, 22], strides = [1, 1]} : vector<22x22xf32> to vector<16x22xf32>
    %c77 = arith.constant 77 : index
    %476 = memref.load %arg6[%c77] : memref<99xf32, #tpu.memory_space<smem>>
    %477 = vector.extract_strided_slice %475 {offsets = [0, 0], sizes = [16, 16], strides = [1, 1]} : vector<16x22xf32> to vector<16x16xf32>
    %478 = vector.broadcast %476 : f32 to vector<16x16xf32>
    %479 = arith.mulf %478, %477 : vector<16x16xf32>
    %480 = arith.addf %474, %479 : vector<16x16xf32>
    %c78 = arith.constant 78 : index
    %481 = memref.load %arg6[%c78] : memref<99xf32, #tpu.memory_space<smem>>
    %482 = vector.extract_strided_slice %475 {offsets = [0, 1], sizes = [16, 16], strides = [1, 1]} : vector<16x22xf32> to vector<16x16xf32>
    %483 = vector.broadcast %481 : f32 to vector<16x16xf32>
    %484 = arith.mulf %483, %482 : vector<16x16xf32>
    %485 = arith.addf %480, %484 : vector<16x16xf32>
    %c79 = arith.constant 79 : index
    %486 = memref.load %arg6[%c79] : memref<99xf32, #tpu.memory_space<smem>>
    %487 = vector.extract_strided_slice %475 {offsets = [0, 2], sizes = [16, 16], strides = [1, 1]} : vector<16x22xf32> to vector<16x16xf32>
    %488 = vector.broadcast %486 : f32 to vector<16x16xf32>
    %489 = arith.mulf %488, %487 : vector<16x16xf32>
    %490 = arith.addf %485, %489 : vector<16x16xf32>
    %c80 = arith.constant 80 : index
    %491 = memref.load %arg6[%c80] : memref<99xf32, #tpu.memory_space<smem>>
    %492 = vector.extract_strided_slice %475 {offsets = [0, 3], sizes = [16, 16], strides = [1, 1]} : vector<16x22xf32> to vector<16x16xf32>
    %493 = vector.broadcast %491 : f32 to vector<16x16xf32>
    %494 = arith.mulf %493, %492 : vector<16x16xf32>
    %495 = arith.addf %490, %494 : vector<16x16xf32>
    %c81 = arith.constant 81 : index
    %496 = memref.load %arg6[%c81] : memref<99xf32, #tpu.memory_space<smem>>
    %497 = vector.extract_strided_slice %475 {offsets = [0, 4], sizes = [16, 16], strides = [1, 1]} : vector<16x22xf32> to vector<16x16xf32>
    %498 = vector.broadcast %496 : f32 to vector<16x16xf32>
    %499 = arith.mulf %498, %497 : vector<16x16xf32>
    %500 = arith.addf %495, %499 : vector<16x16xf32>
    %c82 = arith.constant 82 : index
    %501 = memref.load %arg6[%c82] : memref<99xf32, #tpu.memory_space<smem>>
    %502 = vector.extract_strided_slice %475 {offsets = [0, 5], sizes = [16, 16], strides = [1, 1]} : vector<16x22xf32> to vector<16x16xf32>
    %503 = vector.broadcast %501 : f32 to vector<16x16xf32>
    %504 = arith.mulf %503, %502 : vector<16x16xf32>
    %505 = arith.addf %500, %504 : vector<16x16xf32>
    %c83 = arith.constant 83 : index
    %506 = memref.load %arg6[%c83] : memref<99xf32, #tpu.memory_space<smem>>
    %507 = vector.extract_strided_slice %475 {offsets = [0, 6], sizes = [16, 16], strides = [1, 1]} : vector<16x22xf32> to vector<16x16xf32>
    %508 = vector.broadcast %506 : f32 to vector<16x16xf32>
    %509 = arith.mulf %508, %507 : vector<16x16xf32>
    %510 = arith.addf %505, %509 : vector<16x16xf32>
    %511 = vector.extract_strided_slice %76 {offsets = [5, 0], sizes = [16, 22], strides = [1, 1]} : vector<22x22xf32> to vector<16x22xf32>
    %c84 = arith.constant 84 : index
    %512 = memref.load %arg6[%c84] : memref<99xf32, #tpu.memory_space<smem>>
    %513 = vector.extract_strided_slice %511 {offsets = [0, 0], sizes = [16, 16], strides = [1, 1]} : vector<16x22xf32> to vector<16x16xf32>
    %514 = vector.broadcast %512 : f32 to vector<16x16xf32>
    %515 = arith.mulf %514, %513 : vector<16x16xf32>
    %516 = arith.addf %510, %515 : vector<16x16xf32>
    %c85 = arith.constant 85 : index
    %517 = memref.load %arg6[%c85] : memref<99xf32, #tpu.memory_space<smem>>
    %518 = vector.extract_strided_slice %511 {offsets = [0, 1], sizes = [16, 16], strides = [1, 1]} : vector<16x22xf32> to vector<16x16xf32>
    %519 = vector.broadcast %517 : f32 to vector<16x16xf32>
    %520 = arith.mulf %519, %518 : vector<16x16xf32>
    %521 = arith.addf %516, %520 : vector<16x16xf32>
    %c86 = arith.constant 86 : index
    %522 = memref.load %arg6[%c86] : memref<99xf32, #tpu.memory_space<smem>>
    %523 = vector.extract_strided_slice %511 {offsets = [0, 2], sizes = [16, 16], strides = [1, 1]} : vector<16x22xf32> to vector<16x16xf32>
    %524 = vector.broadcast %522 : f32 to vector<16x16xf32>
    %525 = arith.mulf %524, %523 : vector<16x16xf32>
    %526 = arith.addf %521, %525 : vector<16x16xf32>
    %c87 = arith.constant 87 : index
    %527 = memref.load %arg6[%c87] : memref<99xf32, #tpu.memory_space<smem>>
    %528 = vector.extract_strided_slice %511 {offsets = [0, 3], sizes = [16, 16], strides = [1, 1]} : vector<16x22xf32> to vector<16x16xf32>
    %529 = vector.broadcast %527 : f32 to vector<16x16xf32>
    %530 = arith.mulf %529, %528 : vector<16x16xf32>
    %531 = arith.addf %526, %530 : vector<16x16xf32>
    %c88 = arith.constant 88 : index
    %532 = memref.load %arg6[%c88] : memref<99xf32, #tpu.memory_space<smem>>
    %533 = vector.extract_strided_slice %511 {offsets = [0, 4], sizes = [16, 16], strides = [1, 1]} : vector<16x22xf32> to vector<16x16xf32>
    %534 = vector.broadcast %532 : f32 to vector<16x16xf32>
    %535 = arith.mulf %534, %533 : vector<16x16xf32>
    %536 = arith.addf %531, %535 : vector<16x16xf32>
    %c89 = arith.constant 89 : index
    %537 = memref.load %arg6[%c89] : memref<99xf32, #tpu.memory_space<smem>>
    %538 = vector.extract_strided_slice %511 {offsets = [0, 5], sizes = [16, 16], strides = [1, 1]} : vector<16x22xf32> to vector<16x16xf32>
    %539 = vector.broadcast %537 : f32 to vector<16x16xf32>
    %540 = arith.mulf %539, %538 : vector<16x16xf32>
    %541 = arith.addf %536, %540 : vector<16x16xf32>
    %c90 = arith.constant 90 : index
    %542 = memref.load %arg6[%c90] : memref<99xf32, #tpu.memory_space<smem>>
    %543 = vector.extract_strided_slice %511 {offsets = [0, 6], sizes = [16, 16], strides = [1, 1]} : vector<16x22xf32> to vector<16x16xf32>
    %544 = vector.broadcast %542 : f32 to vector<16x16xf32>
    %545 = arith.mulf %544, %543 : vector<16x16xf32>
    %546 = arith.addf %541, %545 : vector<16x16xf32>
    %547 = vector.extract_strided_slice %76 {offsets = [6, 0], sizes = [16, 22], strides = [1, 1]} : vector<22x22xf32> to vector<16x22xf32>
    %c91 = arith.constant 91 : index
    %548 = memref.load %arg6[%c91] : memref<99xf32, #tpu.memory_space<smem>>
    %549 = vector.extract_strided_slice %547 {offsets = [0, 0], sizes = [16, 16], strides = [1, 1]} : vector<16x22xf32> to vector<16x16xf32>
    %550 = vector.broadcast %548 : f32 to vector<16x16xf32>
    %551 = arith.mulf %550, %549 : vector<16x16xf32>
    %552 = arith.addf %546, %551 : vector<16x16xf32>
    %c92 = arith.constant 92 : index
    %553 = memref.load %arg6[%c92] : memref<99xf32, #tpu.memory_space<smem>>
    %554 = vector.extract_strided_slice %547 {offsets = [0, 1], sizes = [16, 16], strides = [1, 1]} : vector<16x22xf32> to vector<16x16xf32>
    %555 = vector.broadcast %553 : f32 to vector<16x16xf32>
    %556 = arith.mulf %555, %554 : vector<16x16xf32>
    %557 = arith.addf %552, %556 : vector<16x16xf32>
    %c93 = arith.constant 93 : index
    %558 = memref.load %arg6[%c93] : memref<99xf32, #tpu.memory_space<smem>>
    %559 = vector.extract_strided_slice %547 {offsets = [0, 2], sizes = [16, 16], strides = [1, 1]} : vector<16x22xf32> to vector<16x16xf32>
    %560 = vector.broadcast %558 : f32 to vector<16x16xf32>
    %561 = arith.mulf %560, %559 : vector<16x16xf32>
    %562 = arith.addf %557, %561 : vector<16x16xf32>
    %c94 = arith.constant 94 : index
    %563 = memref.load %arg6[%c94] : memref<99xf32, #tpu.memory_space<smem>>
    %564 = vector.extract_strided_slice %547 {offsets = [0, 3], sizes = [16, 16], strides = [1, 1]} : vector<16x22xf32> to vector<16x16xf32>
    %565 = vector.broadcast %563 : f32 to vector<16x16xf32>
    %566 = arith.mulf %565, %564 : vector<16x16xf32>
    %567 = arith.addf %562, %566 : vector<16x16xf32>
    %c95 = arith.constant 95 : index
    %568 = memref.load %arg6[%c95] : memref<99xf32, #tpu.memory_space<smem>>
    %569 = vector.extract_strided_slice %547 {offsets = [0, 4], sizes = [16, 16], strides = [1, 1]} : vector<16x22xf32> to vector<16x16xf32>
    %570 = vector.broadcast %568 : f32 to vector<16x16xf32>
    %571 = arith.mulf %570, %569 : vector<16x16xf32>
    %572 = arith.addf %567, %571 : vector<16x16xf32>
    %c96 = arith.constant 96 : index
    %573 = memref.load %arg6[%c96] : memref<99xf32, #tpu.memory_space<smem>>
    %574 = vector.extract_strided_slice %547 {offsets = [0, 5], sizes = [16, 16], strides = [1, 1]} : vector<16x22xf32> to vector<16x16xf32>
    %575 = vector.broadcast %573 : f32 to vector<16x16xf32>
    %576 = arith.mulf %575, %574 : vector<16x16xf32>
    %577 = arith.addf %572, %576 : vector<16x16xf32>
    %c97 = arith.constant 97 : index
    %578 = memref.load %arg6[%c97] : memref<99xf32, #tpu.memory_space<smem>>
    %579 = vector.extract_strided_slice %547 {offsets = [0, 6], sizes = [16, 16], strides = [1, 1]} : vector<16x22xf32> to vector<16x16xf32>
    %580 = vector.broadcast %578 : f32 to vector<16x16xf32>
    %581 = arith.mulf %580, %579 : vector<16x16xf32>
    %582 = arith.addf %577, %581 : vector<16x16xf32>
    %583 = arith.negf %582 : vector<16x16xf32>
    %584 = math.exp %583 : vector<16x16xf32>
    %cst_24 = arith.constant 1.000000e+00 : f32
    %585 = vector.broadcast %cst_24 : f32 to vector<16x16xf32>
    %586 = arith.addf %585, %584 : vector<16x16xf32>
    %587 = arith.divf %585, %586 : vector<16x16xf32>
    %588 = vector.extract_strided_slice %587 {offsets = [0, 0], sizes = [1, 16], strides = [1, 1]} : vector<16x16xf32> to vector<1x16xf32>
    %589 = vector.extract_strided_slice %587 {offsets = [1, 0], sizes = [1, 16], strides = [1, 1]} : vector<16x16xf32> to vector<1x16xf32>
    %590 = vector.extract_strided_slice %587 {offsets = [2, 0], sizes = [1, 16], strides = [1, 1]} : vector<16x16xf32> to vector<1x16xf32>
    %591 = vector.extract_strided_slice %587 {offsets = [3, 0], sizes = [1, 16], strides = [1, 1]} : vector<16x16xf32> to vector<1x16xf32>
    %592 = vector.extract_strided_slice %587 {offsets = [4, 0], sizes = [1, 16], strides = [1, 1]} : vector<16x16xf32> to vector<1x16xf32>
    %593 = vector.extract_strided_slice %587 {offsets = [5, 0], sizes = [1, 16], strides = [1, 1]} : vector<16x16xf32> to vector<1x16xf32>
    %594 = vector.extract_strided_slice %587 {offsets = [6, 0], sizes = [1, 16], strides = [1, 1]} : vector<16x16xf32> to vector<1x16xf32>
    %595 = vector.extract_strided_slice %587 {offsets = [7, 0], sizes = [1, 16], strides = [1, 1]} : vector<16x16xf32> to vector<1x16xf32>
    %596 = vector.extract_strided_slice %587 {offsets = [8, 0], sizes = [1, 16], strides = [1, 1]} : vector<16x16xf32> to vector<1x16xf32>
    %597 = vector.extract_strided_slice %587 {offsets = [9, 0], sizes = [1, 16], strides = [1, 1]} : vector<16x16xf32> to vector<1x16xf32>
    %598 = vector.extract_strided_slice %587 {offsets = [10, 0], sizes = [1, 16], strides = [1, 1]} : vector<16x16xf32> to vector<1x16xf32>
    %599 = vector.extract_strided_slice %587 {offsets = [11, 0], sizes = [1, 16], strides = [1, 1]} : vector<16x16xf32> to vector<1x16xf32>
    %600 = vector.extract_strided_slice %587 {offsets = [12, 0], sizes = [1, 16], strides = [1, 1]} : vector<16x16xf32> to vector<1x16xf32>
    %601 = vector.extract_strided_slice %587 {offsets = [13, 0], sizes = [1, 16], strides = [1, 1]} : vector<16x16xf32> to vector<1x16xf32>
    %602 = vector.extract_strided_slice %587 {offsets = [14, 0], sizes = [1, 16], strides = [1, 1]} : vector<16x16xf32> to vector<1x16xf32>
    %603 = vector.extract_strided_slice %587 {offsets = [15, 0], sizes = [1, 16], strides = [1, 1]} : vector<16x16xf32> to vector<1x16xf32>
    %604 = tpu.concatenate %588, %589, %590, %591, %592, %593, %594, %595, %596, %597, %598, %599, %600, %601, %602, %603 in 1 : vector<1x16xf32>, vector<1x16xf32>, vector<1x16xf32>, vector<1x16xf32>, vector<1x16xf32>, vector<1x16xf32>, vector<1x16xf32>, vector<1x16xf32>, vector<1x16xf32>, vector<1x16xf32>, vector<1x16xf32>, vector<1x16xf32>, vector<1x16xf32>, vector<1x16xf32>, vector<1x16xf32>, vector<1x16xf32> -> vector<1x256xf32>
    %605 = vector.broadcast %28 : vector<32x1xf32> to vector<32x256xf32>
    %606 = vector.broadcast %604 : vector<1x256xf32> to vector<32x256xf32>
    %607 = arith.mulf %605, %606 : vector<32x256xf32>
    %c0_25 = arith.constant 0 : index
    %c0_26 = arith.constant 0 : index
    %c0_27 = arith.constant 0 : index
    %608 = vector.load %arg7[%c0_25, %c0_26, %c0_27] : memref<1x32x256xf32, #tpu.memory_space<vmem>>, vector<1x32x256xf32>
    %609 = vector.shape_cast %608 : vector<1x32x256xf32> to vector<32x256xf32>
    %610 = vector.shape_cast %607 : vector<32x256xf32> to vector<1x32x256xf32>
    tpu.vector_store %arg7[%c0_25, %c0_26, %c0_27], %610 {strides = array<i32>} : memref<1x32x256xf32, #tpu.memory_space<vmem>>, vector<1x32x256xf32>,
    return
  }
  func.func @transform_0(%arg0: i32) -> (i32, i32, i32) {
    %c0_i32 = arith.constant 0 : i32
    %c0_i32_0 = arith.constant 0 : i32
    %c0_i32_1 = arith.constant 0 : i32
    return %arg0, %c0_i32, %c0_i32_0 : i32, i32, i32
  }
  func.func @transform_1(%arg0: i32) -> (i32, i32) {
    %c0_i32 = arith.constant 0 : i32
    %c0_i32_0 = arith.constant 0 : i32
    %c0_i32_1 = arith.constant 0 : i32
    return %c0_i32, %c0_i32_0 : i32, i32
  }
  func.func @transform_2(%arg0: i32) -> (i32, i32) {
    %c0_i32 = arith.constant 0 : i32
    %c0_i32_0 = arith.constant 0 : i32
    %c0_i32_1 = arith.constant 0 : i32
    return %c0_i32, %c0_i32_0 : i32, i32
  }
  func.func @transform_3(%arg0: i32) -> (i32, i32) {
    %c0_i32 = arith.constant 0 : i32
    %c0_i32_0 = arith.constant 0 : i32
    %c0_i32_1 = arith.constant 0 : i32
    return %c0_i32, %c0_i32_0 : i32, i32
  }
  func.func @transform_4(%arg0: i32) -> (i32, i32) {
    %c0_i32 = arith.constant 0 : i32
    %c0_i32_0 = arith.constant 0 : i32
    %c0_i32_1 = arith.constant 0 : i32
    return %c0_i32, %c0_i32_0 : i32, i32
  }
  func.func @transform_5(%arg0: i32) -> i32 {
    %c0_i32 = arith.constant 0 : i32
    %c0_i32_0 = arith.constant 0 : i32
    return %c0_i32 : i32
  }
  func.func @transform_6(%arg0: i32) -> (i32, i32, i32) {
    %c0_i32 = arith.constant 0 : i32
    %c0_i32_0 = arith.constant 0 : i32
    %c0_i32_1 = arith.constant 0 : i32
    return %arg0, %c0_i32, %c0_i32_0 : i32, i32, i32
  }
}

</mosaic_0001>

<llo_original>
// kernel: tpu_custom_call.1
$region0: #{tpu_custom_call.1}
  #allocation0 [shape = 'u32[]', space=smem, size = 0x4, offset = 0x4, fixed_abs, tag = 'smem constant byte address 0x4 - core index']
  #allocation1 [shape = 'u32[144,128]{1,0:T(1,128)}', space=vmem, size = 0x12000, scoped, tag = 'internal scratch']
  %s0 = inlined_call_operand.hbm [shape: f32[2,32,256], index: 0, kind: input, shape index: {}]
  %s1 = inlined_call_operand.vmem [shape: f32[2,32], index: 1, kind: input, shape index: {}]
  %s2 = inlined_call_operand.vmem [shape: f32[2,1], index: 2, kind: input, shape index: {}]
  %s3 = inlined_call_operand.vmem [shape: f32[32,2], index: 3, kind: input, shape index: {}]
  %s4 = inlined_call_operand.vmem [shape: f32[32,1], index: 4, kind: input, shape index: {}]
  %s5 = inlined_call_operand.vmem [shape: f32[99], index: 5, kind: input, shape index: {}]
  %s6 = inlined_call_operand.hbm [shape: f32[2,32,256], index: 6, kind: output, shape index: {}]
  %s7 = sld [smem:[#allocation0]]
  $region65: #{tpu_custom_call.1} parent=0
    _
  %s9 = ssub.s32 1, %s7
  %s10 = scalar_select 0, %s9, %s7
  $region1: #{tpu_custom_call.1} parent=0
    #allocation2 [shape = 'u8[65536]{0}', space=vmem, size = 0x10000, scoped, tag = 'input window, operand 0']
    #allocation3 [shape = 's32[2]{0}', space=sflag, size = 0x8, scoped, tag = 'scoped memory for tpu_custom_call.1']
    #allocation4 [shape = 's32[2]{0}', space=sflag, size = 0x8, scoped, tag = 'scoped memory for tpu_custom_call.1']
    #allocation5 [shape = 's32[2]{0}', space=sflag, size = 0x8, scoped, tag = 'scoped memory for tpu_custom_call.1']
    #allocation6 [shape = 'u8[512]{0}', space=smem, size = 0x200, scoped, tag = 'input window, operand 5, single buffered']
    #allocation7 [shape = 'u8[65536]{0}', space=vmem, size = 0x10000, scoped, tag = 'output window, operand 0']
    %11 = vsyncpa [#allocation3], 0
    %s12 = scalar_lea.sflag [#allocation3], 1
    %13 = vsyncpa %s12, 0
    %14 = vsyncpa [#allocation5], 0
    %15 = vsyncpa [#allocation4], 0
    %s16 = scalar_lea.sflag [#allocation4], 1
    %17 = vsyncpa %s16, 0
    loop: start=0, step=1, limit=4
    $region2: #{tpu_custom_call.1} parent=1 // loop_pre_header
      _
    $region3: #{tpu_custom_call.1} parent=1 // loop_header
      %s19 = sphi 0, %s23
      %p20 = scmp.ge.s32.totalorder %s19, 4
      %s29 = sphi 0, %s31
      %s32 = sphi 0, %s29
      %s33 = sphi 0, %s32
      %s49 = sphi 0, %s33
      %s53 = sphi 0, %s53
      %s55 = sphi 0, %s53
      %s56 = sphi 0, %s55
      %s70 = sphi 0, %s56
      %s74 = sphi 0, %s74
      %s76 = sphi 0, %s74
      %s77 = sphi 0, %s76
      %s91 = sphi 0, %s77
      %s95 = sphi 0, %s95
      %s97 = sphi 0, %s95
      %s98 = sphi 0, %s97
      %s112 = sphi 0, %s98
      %s116 = sphi 0, %s116
      %s118 = sphi 0, %s116
      %s119 = sphi 0, %s118
      %s133 = sphi 0, %s119
      %s137 = sphi 0, %s137
      %s139 = sphi 0, %s137
      %s140 = sphi 0, %s139
      %s154 = sphi 0, %s140
      %s160 = sphi 0, %s162
      %s163 = sphi 0, %s160
      %s164 = sphi 0, %s163
      %s180 = sphi 0, %s164
    $region4: #{tpu_custom_call.1} parent=1 // loop_header_branch
      %22 = sbr.rel (%p20) target = $region8
    $region5: #{tpu_custom_call.1} parent=1 // loop_body
      %s24 = ssub.s32 %s19, 1
      %s25 = ssub.s32 %s19, 2
      %s26 = sadd.s32 %s19, 1
      %s27 = ssub.s32 %s19, %s26
      %p28 = scmp.eq.s32.totalorder %s27, 0
      %s30 = sadd.s32 %s29, 1
      %s31 = scalar_select %p28, %s29, %s30
      %p34 = pneg %p28
      %p35 = scmp.eq.s32.totalorder %s19, 1
      %p36 = por %p34, %p35
      %p37 = scmp.ne.s32.totalorder %s29, %s32
      %p38 = scmp.eq.s32.totalorder %s19, 0
      %p39 = por %p37, %p38
      %p40 = scmp.ne.s32.totalorder %s29, %s32
      %p41 = scmp.eq.s32.totalorder %s24, 1
      %p42 = por %p40, %p41
      %p43 = scmp.ne.s32.totalorder %s32, %s33
      %p44 = scmp.eq.s32.totalorder %s24, 0
      %p45 = por %p43, %p44
      %p46 = scmp.ne.s32.totalorder %s32, %s33
      %p47 = scmp.eq.s32.totalorder %s25, 1
      %p48 = por %p46, %p47
      %p50 = scmp.ne.s32.totalorder %s33, %s49
      %p51 = scmp.eq.s32.totalorder %s25, 0
      %p52 = por %p50, %p51
      %s54 = sadd.s32 %s53, 1
      %p57 = scmp.eq.s32.totalorder %s19, 1
      %p58 = scmp.ne.s32.totalorder %s53, %s55
      %p59 = scmp.eq.s32.totalorder %s19, 0
      %p60 = por %p58, %p59
      %p61 = scmp.ne.s32.totalorder %s53, %s55
      %p62 = scmp.eq.s32.totalorder %s24, 1
      %p63 = por %p61, %p62
      %p64 = scmp.ne.s32.totalorder %s55, %s56
      %p65 = scmp.eq.s32.totalorder %s24, 0
      %p66 = por %p64, %p65
      %p67 = scmp.ne.s32.totalorder %s55, %s56
      %p68 = scmp.eq.s32.totalorder %s25, 1
      %p69 = por %p67, %p68
      %p71 = scmp.ne.s32.totalorder %s56, %s70
      %p72 = scmp.eq.s32.totalorder %s25, 0
      %p73 = por %p71, %p72
      %s75 = sadd.s32 %s74, 1
      %p78 = scmp.eq.s32.totalorder %s19, 1
      %p79 = scmp.ne.s32.totalorder %s74, %s76
      %p80 = scmp.eq.s32.totalorder %s19, 0
      %p81 = por %p79, %p80
      %p82 = scmp.ne.s32.totalorder %s74, %s76
      %p83 = scmp.eq.s32.totalorder %s24, 1
      %p84 = por %p82, %p83
      %p85 = scmp.ne.s32.totalorder %s76, %s77
      %p86 = scmp.eq.s32.totalorder %s24, 0
      %p87 = por %p85, %p86
      %p88 = scmp.ne.s32.totalorder %s76, %s77
      %p89 = scmp.eq.s32.totalorder %s25, 1
      %p90 = por %p88, %p89
      %p92 = scmp.ne.s32.totalorder %s77, %s91
      %p93 = scmp.eq.s32.totalorder %s25, 0
      %p94 = por %p92, %p93
      %s96 = sadd.s32 %s95, 1
      %p99 = scmp.eq.s32.totalorder %s19, 1
      %p100 = scmp.ne.s32.totalorder %s95, %s97
      %p101 = scmp.eq.s32.totalorder %s19, 0
      %p102 = por %p100, %p101
      %p103 = scmp.ne.s32.totalorder %s95, %s97
      %p104 = scmp.eq.s32.totalorder %s24, 1
      %p105 = por %p103, %p104
      %p106 = scmp.ne.s32.totalorder %s97, %s98
      %p107 = scmp.eq.s32.totalorder %s24, 0
      %p108 = por %p106, %p107
      %p109 = scmp.ne.s32.totalorder %s97, %s98
      %p110 = scmp.eq.s32.totalorder %s25, 1
      %p111 = por %p109, %p110
      %p113 = scmp.ne.s32.totalorder %s98, %s112
      %p114 = scmp.eq.s32.totalorder %s25, 0
      %p115 = por %p113, %p114
      %s117 = sadd.s32 %s116, 1
      %p120 = scmp.eq.s32.totalorder %s19, 1
      %p121 = scmp.ne.s32.totalorder %s116, %s118
      %p122 = scmp.eq.s32.totalorder %s19, 0
      %p123 = por %p121, %p122
      %p124 = scmp.ne.s32.totalorder %s116, %s118
      %p125 = scmp.eq.s32.totalorder %s24, 1
      %p126 = por %p124, %p125
      %p127 = scmp.ne.s32.totalorder %s118, %s119
      %p128 = scmp.eq.s32.totalorder %s24, 0
      %p129 = por %p127, %p128
      %p130 = scmp.ne.s32.totalorder %s118, %s119
      %p131 = scmp.eq.s32.totalorder %s25, 1
      %p132 = por %p130, %p131
      %p134 = scmp.ne.s32.totalorder %s119, %s133
      %p135 = scmp.eq.s32.totalorder %s25, 0
      %p136 = por %p134, %p135
      %s138 = sadd.s32 %s137, 1
      %p141 = scmp.eq.s32.totalorder %s19, 1
      %p142 = scmp.ne.s32.totalorder %s137, %s139
      %p143 = scmp.eq.s32.totalorder %s19, 0
      %p144 = por %p142, %p143
      %p145 = scmp.ne.s32.totalorder %s137, %s139
      %p146 = scmp.eq.s32.totalorder %s24, 1
      %p147 = por %p145, %p146
      %p148 = scmp.ne.s32.totalorder %s139, %s140
      %p149 = scmp.eq.s32.totalorder %s24, 0
      %p150 = por %p148, %p149
      %p151 = scmp.ne.s32.totalorder %s139, %s140
      %p152 = scmp.eq.s32.totalorder %s25, 1
      %p153 = por %p151, %p152
      %p155 = scmp.ne.s32.totalorder %s140, %s154
      %p156 = scmp.eq.s32.totalorder %s25, 0
      %p157 = por %p155, %p156
      %s158 = ssub.s32 %s19, %s26
      %p159 = scmp.eq.s32.totalorder %s158, 0
      %s161 = sadd.s32 %s160, 1
      %s162 = scalar_select %p159, %s160, %s161
      %p165 = pneg %p159
      %p166 = scmp.eq.s32.totalorder %s19, 1
      %p167 = por %p165, %p166
      %p168 = scmp.ne.s32.totalorder %s160, %s163
      %p169 = scmp.eq.s32.totalorder %s19, 0
      %p170 = por %p168, %p169
      %p171 = scmp.ne.s32.totalorder %s160, %s163
      %p172 = scmp.eq.s32.totalorder %s24, 1
      %p173 = por %p171, %p172
      %p174 = scmp.ne.s32.totalorder %s163, %s164
      %p175 = scmp.eq.s32.totalorder %s24, 0
      %p176 = por %p174, %p175
      %p177 = scmp.ne.s32.totalorder %s163, %s164
      %p178 = scmp.eq.s32.totalorder %s25, 1
      %p179 = por %p177, %p178
      %p181 = scmp.ne.s32.totalorder %s164, %s180
      %p182 = scmp.eq.s32.totalorder %s25, 0
      %p183 = por %p181, %p182
      %p184 = scmp.le.s32.totalorder 1, %s19
      %p185 = scmp.lt.s32.totalorder %s19, 3
      %p186 = pnand %p184, %p185
      %p187 = pneg %p186
      // Predicated region
      $region9: #{tpu_custom_call.1} parent=5 // pred_check
        _
      $region10: #{tpu_custom_call.1} parent=5 // pred_check_branch
        %189 = sbr.rel (%p186) target = $region12
      $region11: #{tpu_custom_call.1} parent=5 // pred_region
        %s190 = ssub.s32 %s19, 1
        // Predicated region
        $region13: #{tpu_custom_call.1} parent=11 // pred_check
          %p191 = pneg %p66
        $region14: #{tpu_custom_call.1} parent=11 // pred_check_branch
          %193 = sbr.rel (%p191) target = $region16
        $region15: #{tpu_custom_call.1} parent=11 // pred_region
          _
        $region16: #{tpu_custom_call.1} parent=11 // pred_fallthru
          _
        // Predicated region
        $region17: #{tpu_custom_call.1} parent=11 // pred_check
          %p194 = pneg %p87
        $region18: #{tpu_custom_call.1} parent=11 // pred_check_branch
          %196 = sbr.rel (%p194) target = $region20
        $region19: #{tpu_custom_call.1} parent=11 // pred_region
          _
        $region20: #{tpu_custom_call.1} parent=11 // pred_fallthru
          _
        // Predicated region
        $region21: #{tpu_custom_call.1} parent=11 // pred_check
          %p197 = pneg %p108
        $region22: #{tpu_custom_call.1} parent=11 // pred_check_branch
          %199 = sbr.rel (%p197) target = $region24
        $region23: #{tpu_custom_call.1} parent=11 // pred_region
          _
        $region24: #{tpu_custom_call.1} parent=11 // pred_fallthru
          _
        // Predicated region
        $region25: #{tpu_custom_call.1} parent=11 // pred_check
          %p200 = pneg %p129
        $region26: #{tpu_custom_call.1} parent=11 // pred_check_branch
          %202 = sbr.rel (%p200) target = $region28
        $region27: #{tpu_custom_call.1} parent=11 // pred_region
          _
        $region28: #{tpu_custom_call.1} parent=11 // pred_fallthru
          _
        // Predicated region
        $region29: #{tpu_custom_call.1} parent=11 // pred_check
          %p203 = pneg %p150
        $region30: #{tpu_custom_call.1} parent=11 // pred_check_branch
          %205 = sbr.rel (%p203) target = $region32
        $region31: #{tpu_custom_call.1} parent=11 // pred_region
          %s207 = ssub.s32 16, 16
          %208 = vsyncadd [#allocation5], %s207
          %s210 = sshll.u32 %s5, 4
          %s211 = int_to_ptr.vmem [resolvable:$true] %s210
          %213 = dma.vmem_to_smem %s211, 16, [#allocation6], [#allocation5]
        $region32: #{tpu_custom_call.1} parent=11 // pred_fallthru
          _
      $region12: #{tpu_custom_call.1} parent=5 // pred_fallthru
        _
      %p214 = scmp.lt.s32.totalorder %s19, 2
      // Predicated region
      $region33: #{tpu_custom_call.1} parent=5 // pred_check
        %p215 = pneg %p214
      $region34: #{tpu_custom_call.1} parent=5 // pred_check_branch
        %217 = sbr.rel (%p215) target = $region36
      $region35: #{tpu_custom_call.1} parent=5 // pred_region
        // Predicated region
        $region37: #{tpu_custom_call.1} parent=35 // pred_check
          %p218 = pneg %p39
        $region38: #{tpu_custom_call.1} parent=35 // pred_check_branch
          %220 = sbr.rel (%p218) target = $region40
        $region39: #{tpu_custom_call.1} parent=35 // pred_region
          %s221 = sand.u32 %s29, 1
          %s222 = scalar_lea.sflag [#allocation3], %s221
          %s223 = sand.u32 %s29, 1
          %s224 = smul.addr %s223, 64
          %s225 = scalar_lea.vmem [#allocation2], %s224
          %s227 = ssub.s32 1024, 1024
          %228 = vsyncadd %s222, %s227
          %s229 = smul.addr %s19, 8
          %s230 = smul.addr %s229, 128
          %s231 = scalar_lea.hbm %s0, %s230
          %s232 = sshll.u32 %s225, 4
          %s233 = int_to_ptr.vmem [resolvable:$true] %s232
          %238 = dma.hbm_to_vmem [thread:$0]  %s231, 1024, %s233, %s222, 256, 256, 16
        $region40: #{tpu_custom_call.1} parent=35 // pred_fallthru
          _
      $region36: #{tpu_custom_call.1} parent=5 // pred_fallthru
        _
      %p239 = scmp.le.s32.totalorder 1, %s19
      %p240 = scmp.lt.s32.totalorder %s19, 3
      %p241 = pnand %p239, %p240
      %p242 = pneg %p241
      // Predicated region
      $region41: #{tpu_custom_call.1} parent=5 // pred_check
        _
      $region42: #{tpu_custom_call.1} parent=5 // pred_check_branch
        %244 = sbr.rel (%p241) target = $region44
      $region43: #{tpu_custom_call.1} parent=5 // pred_region
        %s245 = ssub.s32 %s19, 1
        %s246 = sand.u32 %s32, 1
        %s247 = scalar_lea.sflag [#allocation3], %s246
        %s248 = sand.u32 %s32, 1
        %s249 = smul.addr %s248, 64
        %s250 = scalar_lea.vmem [#allocation2], %s249
        // Predicated region
        $region45: #{tpu_custom_call.1} parent=43 // pred_check
          %p251 = pneg %p45
        $region46: #{tpu_custom_call.1} parent=43 // pred_check_branch
          %253 = sbr.rel (%p251) target = $region48
        $region47: #{tpu_custom_call.1} parent=43 // pred_region
          %254 = dma.done %s247, 1024
        $region48: #{tpu_custom_call.1} parent=43 // pred_fallthru
          _
        // Predicated region
        $region49: #{tpu_custom_call.1} parent=43 // pred_check
          %p255 = pneg %p150
        $region50: #{tpu_custom_call.1} parent=43 // pred_check_branch
          %257 = sbr.rel (%p255) target = $region52
        $region51: #{tpu_custom_call.1} parent=43 // pred_region
          %258 = dma.done [#allocation5], 16
        $region52: #{tpu_custom_call.1} parent=43 // pred_fallthru
          _
        %259 = sfence
        %s260 = sand.u32 %s32, 1
        %s261 = scalar_lea.sflag [#allocation3], %s260
        %s262 = sand.u32 %s32, 1
        %s263 = smul.addr %s262, 64
        %s264 = scalar_lea.vmem [#allocation2], %s263
        %p265 = pneg %p45
        %p266 = pneg %p42
        %p267 = pneg %p66
        %p268 = pneg %p63
        %p269 = pneg %p87
        %p270 = pneg %p84
        %p271 = pneg %p108
        %p272 = pneg %p105
        %p273 = pneg %p129
        %p274 = pneg %p126
        %p275 = pneg %p150
        %p276 = pneg %p147
        %p277 = pneg %p176
        %p278 = pneg %p173
        %s279 = sand.u32 %s163, 1
        %s280 = scalar_lea.sflag [#allocation4], %s279
        %s281 = sand.u32 %s163, 1
        %s282 = smul.addr %s281, 64
        %s283 = scalar_lea.vmem [#allocation7], %s282
        %v284 = vld [vmem:[%s250] sm:$0xff]
        %v285 = vld [vmem:[%s250 + $0x8] sm:$0xff]
        %v286 = vld [vmem:[%s250 + $0x10] sm:$0xff]
        %v287 = vld [vmem:[%s250 + $0x18] sm:$0xff]
        %v288 = vld [vmem:[%s250 + $0x20] sm:$0xff]
        %v289 = vld [vmem:[%s250 + $0x28] sm:$0xff]
        %v290 = vld [vmem:[%s250 + $0x30] sm:$0xff]
        %v291 = vld [vmem:[%s250 + $0x38] sm:$0xff]
        %v292 = vadd.f32 %v284, %v285
        %293 = vadd.xlane.f32.xlu0 %v292
        %v294 = vpop.xlane.xlu0 %293
        %v295 = vadd.f32 %v286, %v287
        %296 = vadd.xlane.f32.xlu0 %v295
        %v297 = vpop.xlane.xlu0 %296
        %v298 = vadd.f32 %v288, %v289
        %299 = vadd.xlane.f32.xlu0 %v298
        %v300 = vpop.xlane.xlu0 %299
        %v301 = vadd.f32 %v290, %v291
        %302 = vadd.xlane.f32.xlu0 %v301
        %v303 = vpop.xlane.xlu0 %302
        %v304 = vrcp.pop 256.0
        %v305 = vmul.f32 %v294, %v304
        %v306 = vmul.f32 %v297, %v304
        %v307 = vmul.f32 %v300, %v304
        %v308 = vmul.f32 %v303, %v304
        %v309 = vmax.f32 %v284, %v285
        %310 = vmax.xlane.f32.xlu0 %v309
        %v311 = vpop.xlane.xlu0 %310
        %v312 = vmax.f32 %v286, %v287
        %313 = vmax.xlane.f32.xlu0 %v312
        %v314 = vpop.xlane.xlu0 %313
        %v315 = vmax.f32 %v288, %v289
        %316 = vmax.xlane.f32.xlu0 %v315
        %v317 = vpop.xlane.xlu0 %316
        %v318 = vmax.f32 %v290, %v291
        %319 = vmax.xlane.f32.xlu0 %v318
        %v320 = vpop.xlane.xlu0 %319
        %vm321 = vcmask 7168
        %v322 = vsel %vm321, %v305, %v311
        %v323 = vsel %vm321, %v306, %v314
        %v324 = vsel %vm321, %v307, %v317
        %v325 = vsel %vm321, %v308, %v320
        %v326 = vld [vmem:[%s1] sm:$0x3]
        %v327 = vld [vmem:[%s2] sm:$0x3]
        %329 = vset.pattern.permute.xlu0 0
        %330 = vperm.xlu0 %329, %v327
        %v331 = vpop.permute.xlu0 %330
        %vm333 = vcmask 261120
        %v335 = vsel %vm333, %v326, 0
        %337 = vmatprep.subr.mxu0 0.0
        %338 = vmatpush1.msra.mxu0 %v322
        %339 = vmatprep.subr.mxu0 0.0
        %340 = vmatpush1.msra.mxu0 %v323
        %341 = vmatprep.subr.mxu0 0.0
        %342 = vmatpush1.msra.mxu0 %v324
        %343 = vmatprep.subr.mxu0 0.0
        %344 = vmatpush1.msra.mxu0 %v325
        %345 = vmatprep.subr.mxu0 0.0
        %346 = vmatpush1.msra.mxu0 0.0
        %347 = vmatprep.subr.mxu0 0.0
        %348 = vmatpush1.msra.mxu0 0.0
        %349 = vmatprep.subr.mxu0 0.0
        %350 = vmatpush1.msra.mxu0 0.0
        %351 = vmatprep.subr.mxu0 0.0
        %352 = vmatpush1.msra.mxu0 0.0
        %353 = vmatprep.subr.mxu0 0.0
        %354 = vmatpush1.msra.mxu0 0.0
        %355 = vmatprep.subr.mxu0 0.0
        %356 = vmatpush1.msra.mxu0 0.0
        %357 = vmatprep.subr.mxu0 0.0
        %358 = vmatpush1.msra.mxu0 0.0
        %359 = vmatprep.subr.mxu0 0.0
        %360 = vmatpush1.msra.mxu0 0.0
        %361 = vmatprep.subr.mxu0 0.0
        %362 = vmatpush1.msra.mxu0 0.0
        %363 = vmatprep.subr.mxu0 0.0
        %364 = vmatpush1.msra.mxu0 0.0
        %365 = vmatprep.subr.mxu0 0.0
        %366 = vmatpush1.msra.mxu0 0.0
        %367 = vmatprep.subr.mxu0 0.0
        %368 = vmatpush1.msra.mxu0 0.0
        %369 = vmatprep.subr.mxu0 0.0
        %370 = vmatpush1.msra.mxu0 0.0
        %371 = vmatprep.subr.mxu0 0.0
        %372 = vmatpush1.msra.mxu0 0.0
        %373 = vmatprep.subr.mxu0 0.0
        %374 = vmatpush1.msra.mxu0 0.0
        %375 = vmatprep.subr.mxu0 0.0
        %376 = vmatpush1.msra.mxu0 0.0
        %377 = vmatprep.subr.mxu0 0.0
        %378 = vmatpush1.msra.mxu0 0.0
        %379 = vmatprep.subr.mxu0 0.0
        %380 = vmatpush1.msra.mxu0 0.0
        %381 = vmatprep.subr.mxu0 0.0
        %382 = vmatpush1.msra.mxu0 0.0
        %383 = vmatprep.subr.mxu0 0.0
        %384 = vmatpush1.msra.mxu0 0.0
        %385 = vmatprep.subr.mxu0 0.0
        %386 = vmatpush1.msra.mxu0 0.0
        %387 = vmatprep.subr.mxu0 0.0
        %388 = vmatpush1.msra.mxu0 0.0
        %389 = vmatprep.subr.mxu0 0.0
        %390 = vmatpush1.msra.mxu0 0.0
        %391 = vmatprep.subr.mxu0 0.0
        %392 = vmatpush1.msra.mxu0 0.0
        %393 = vmatprep.subr.mxu0 0.0
        %394 = vmatpush1.msra.mxu0 0.0
        %395 = vmatprep.subr.mxu0 0.0
        %396 = vmatpush1.msra.mxu0 0.0
        %397 = vmatprep.subr.mxu0 0.0
        %398 = vmatpush1.msra.mxu0 0.0
        %399 = vmatprep.subr.mxu0 0.0
        %400 = vmatpush1.msra.mxu0 0.0
        %401 = vmatprep.mubr.f32.mxu0 0.0
        %402 = vmatmul.mubr.f32.gmra.mrb[0].mxu0 %v335
        %v403 = vpop.f32.mrb[0].mxu0
        %v404 = vadd.f32 %v331, %v403
        %v405 = vpop.f32.mrb[0].mxu0
        %406 = vdwg.mxu0
        %v407 = vmax.f32 %v404, 0.0
        %v408 = vld [vmem:[%s3] sm:$0xff]
        %v409 = vld [vmem:[%s3 + $0x8] sm:$0xff]
        %v410 = vld [vmem:[%s3 + $0x10] sm:$0xff]
        %v411 = vld [vmem:[%s3 + $0x18] sm:$0xff]
        %v412 = vld [vmem:[%s4] sm:$0xff]
        %v413 = vld [vmem:[%s4 + $0x8] sm:$0xff]
        %v414 = vld [vmem:[%s4 + $0x10] sm:$0xff]
        %v415 = vld [vmem:[%s4 + $0x18] sm:$0xff]
        %417 = vset.pattern.permute.xlu0 0
        %418 = vperm.xlu0 %417, %v412
        %v419 = vpop.permute.xlu0 %418
        %422 = vset.pattern.permute.xlu0 0
        %423 = vperm.xlu0 %422, %v413
        %v424 = vpop.permute.xlu0 %423
        %427 = vset.pattern.permute.xlu0 0
        %428 = vperm.xlu0 %427, %v414
        %v429 = vpop.permute.xlu0 %428
        %432 = vset.pattern.permute.xlu0 0
        %433 = vperm.xlu0 %432, %v415
        %v434 = vpop.permute.xlu0 %433
        %vm436 = vcmask 15360
        %v438 = vsel %vm436, %v408, 0
        %v441 = vsel %vm436, %v409, 0
        %v444 = vsel %vm436, %v410, 0
        %v447 = vsel %vm436, %v411, 0
        %vm449 = vcmask 1041408
        %v451 = vsel %vm449, %v407, 0
        %453 = vmatprep.subr.mxu0 0.0
        %454 = vmatpush1.msra.mxu0 %v451
        %455 = vmatprep.subr.mxu0 0.0
        %456 = vmatpush1.msra.mxu0 0.0
        %457 = vmatprep.subr.mxu0 0.0
        %458 = vmatpush1.msra.mxu0 0.0
        %459 = vmatprep.subr.mxu0 0.0
        %460 = vmatpush1.msra.mxu0 0.0
        %461 = vmatprep.subr.mxu0 0.0
        %462 = vmatpush1.msra.mxu0 0.0
        %463 = vmatprep.subr.mxu0 0.0
        %464 = vmatpush1.msra.mxu0 0.0
        %465 = vmatprep.subr.mxu0 0.0
        %466 = vmatpush1.msra.mxu0 0.0
        %467 = vmatprep.subr.mxu0 0.0
        %468 = vmatpush1.msra.mxu0 0.0
        %469 = vmatprep.subr.mxu0 0.0
        %470 = vmatpush1.msra.mxu0 0.0
        %471 = vmatprep.subr.mxu0 0.0
        %472 = vmatpush1.msra.mxu0 0.0
        %473 = vmatprep.subr.mxu0 0.0
        %474 = vmatpush1.msra.mxu0 0.0
        %475 = vmatprep.subr.mxu0 0.0
        %476 = vmatpush1.msra.mxu0 0.0
        %477 = vmatprep.subr.mxu0 0.0
        %478 = vmatpush1.msra.mxu0 0.0
        %479 = vmatprep.subr.mxu0 0.0
        %480 = vmatpush1.msra.mxu0 0.0
        %481 = vmatprep.subr.mxu0 0.0
        %482 = vmatpush1.msra.mxu0 0.0
        %483 = vmatprep.subr.mxu0 0.0
        %484 = vmatpush1.msra.mxu0 0.0
        %485 = vmatprep.subr.mxu0 0.0
        %486 = vmatpush1.msra.mxu0 0.0
        %487 = vmatprep.subr.mxu0 0.0
        %488 = vmatpush1.msra.mxu0 0.0
        %489 = vmatprep.subr.mxu0 0.0
        %490 = vmatpush1.msra.mxu0 0.0
        %491 = vmatprep.subr.mxu0 0.0
        %492 = vmatpush1.msra.mxu0 0.0
        %493 = vmatprep.subr.mxu0 0.0
        %494 = vmatpush1.msra.mxu0 0.0
        %495 = vmatprep.subr.mxu0 0.0
        %496 = vmatpush1.msra.mxu0 0.0
        %497 = vmatprep.subr.mxu0 0.0
        %498 = vmatpush1.msra.mxu0 0.0
        %499 = vmatprep.subr.mxu0 0.0
        %500 = vmatpush1.msra.mxu0 0.0
        %501 = vmatprep.subr.mxu0 0.0
        %502 = vmatpush1.msra.mxu0 0.0
        %503 = vmatprep.subr.mxu0 0.0
        %504 = vmatpush1.msra.mxu0 0.0
        %505 = vmatprep.subr.mxu0 0.0
        %506 = vmatpush1.msra.mxu0 0.0
        %507 = vmatprep.subr.mxu0 0.0
        %508 = vmatpush1.msra.mxu0 0.0
        %509 = vmatprep.subr.mxu0 0.0
        %510 = vmatpush1.msra.mxu0 0.0
        %511 = vmatprep.subr.mxu0 0.0
        %512 = vmatpush1.msra.mxu0 0.0
        %513 = vmatprep.subr.mxu0 0.0
        %514 = vmatpush1.msra.mxu0 0.0
        %515 = vmatprep.subr.mxu0 0.0
        %516 = vmatpush1.msra.mxu0 0.0
        %517 = vmatprep.mubr.f32.mxu0 0.0
        %518 = vmatmul.mubr.f32.gmra.mrb[0].mxu0 %v438
        %v519 = vpop.f32.mrb[0].mxu0
        %v520 = vadd.f32 %v419, %v519
        %v521 = vpop.f32.mrb[0].mxu0
        %522 = vmatprep.mubr.f32.mxu0 0.0
        %523 = vmatmul.mubr.f32.gmra.mrb[0].mxu0 %v441
        %v524 = vpop.f32.mrb[0].mxu0
        %v525 = vadd.f32 %v424, %v524
        %v526 = vpop.f32.mrb[0].mxu0
        %527 = vmatprep.mubr.f32.mxu0 0.0
        %528 = vmatmul.mubr.f32.gmra.mrb[0].mxu0 %v444
        %v529 = vpop.f32.mrb[0].mxu0
        %v530 = vadd.f32 %v429, %v529
        %v531 = vpop.f32.mrb[0].mxu0
        %532 = vmatprep.mubr.f32.mxu0 0.0
        %533 = vmatmul.mubr.f32.gmra.mrb[0].mxu0 %v447
        %v534 = vpop.f32.mrb[0].mxu0
        %v535 = vadd.f32 %v434, %v534
        %v536 = vpop.f32.mrb[0].mxu0
        %537 = vdwg.mxu0
        %542 = vrot.lane.b32.xlu0 %v520, 127
        %v543 = vpop.permute.xlu0 %542
        %544 = vrot.lane.b32.xlu0 %v525, 127
        %v545 = vpop.permute.xlu0 %544
        %546 = vrot.lane.b32.xlu0 %v530, 127
        %v547 = vpop.permute.xlu0 %546
        %548 = vrot.lane.b32.xlu0 %v535, 127
        %v549 = vpop.permute.xlu0 %548
        %v554 = vadd.f32 %v520, %v543
        %v555 = vadd.f32 %v525, %v545
        %v556 = vadd.f32 %v530, %v547
        %v557 = vadd.f32 %v535, %v549
        %v558 = vxor.u32 %v554, 2147483648
        %v559 = vxor.u32 %v555, 2147483648
        %v560 = vxor.u32 %v556, 2147483648
        %v561 = vxor.u32 %v557, 2147483648
        %v562 = vmul.f32 %v558, 1.442695
        %v563 = vpow.pop %v562
        %v564 = vmul.f32 %v559, 1.442695
        %v565 = vpow.pop %v564
        %v566 = vmul.f32 %v560, 1.442695
        %v567 = vpow.pop %v566
        %v568 = vmul.f32 %v561, 1.442695
        %v569 = vpow.pop %v568
        %v570 = vadd.f32 %v563, 1.0
        %v571 = vadd.f32 %v565, 1.0
        %v572 = vadd.f32 %v567, 1.0
        %v573 = vadd.f32 %v569, 1.0
        %v574 = vrcp.pop %v570
        %v575 = vmul.f32 1.0, %v574
        %v576 = vrcp.pop %v571
        %v577 = vmul.f32 1.0, %v576
        %v578 = vrcp.pop %v572
        %v579 = vmul.f32 1.0, %v578
        %v580 = vrcp.pop %v573
        %v581 = vmul.f32 1.0, %v580
        %v582 = vmax.f32 %v284, %v288
        %v583 = vmax.f32 %v286, %v290
        %v584 = vmax.f32 %v582, %v583
        %v585 = vrot.slane %v584, 4
        %v586 = vmax.f32 %v584, %v585
        %v587 = vrot.slane %v586, 2
        %v588 = vmax.f32 %v586, %v587
        %v589 = vrot.slane %v588, 1
        %v590 = vmax.f32 %v588, %v589
        %v591 = vmax.f32 %v285, %v289
        %v592 = vmax.f32 %v287, %v291
        %v593 = vmax.f32 %v591, %v592
        %v594 = vrot.slane %v593, 4
        %v595 = vmax.f32 %v593, %v594
        %v596 = vrot.slane %v595, 2
        %v597 = vmax.f32 %v595, %v596
        %v598 = vrot.slane %v597, 1
        %v599 = vmax.f32 %v597, %v598
        %v600 = vadd.f32 %v284, %v286
        %v601 = vadd.f32 %v600, %v288
        %v602 = vadd.f32 %v601, %v290
        %v603 = vrot.slane %v602, 4
        %v604 = vadd.f32 %v602, %v603
        %v605 = vrot.slane %v604, 2
        %v606 = vadd.f32 %v604, %v605
        %v607 = vrot.slane %v606, 1
        %v608 = vadd.f32 %v606, %v607
        %v609 = vadd.f32 %v285, %v287
        %v610 = vadd.f32 %v609, %v289
        %v611 = vadd.f32 %v610, %v291
        %v612 = vrot.slane %v611, 4
        %v613 = vadd.f32 %v611, %v612
        %v614 = vrot.slane %v613, 2
        %v615 = vadd.f32 %v613, %v614
        %v616 = vrot.slane %v615, 1
        %v617 = vadd.f32 %v615, %v616
        %v618 = vrcp.pop 32.0
        %v619 = vmul.f32 %v608, %v618
        %v620 = vmul.f32 %v617, %v618
        %622 = vrot.lane.b32.xlu0 %v590, 112
        %v623 = vpop.permute.xlu0 %622
        %625 = vrot.lane.b32.xlu0 %v590, 96
        %v626 = vpop.permute.xlu0 %625
        %628 = vrot.lane.b32.xlu0 %v590, 80
        %v629 = vpop.permute.xlu0 %628
        %631 = vrot.lane.b32.xlu0 %v590, 64
        %v632 = vpop.permute.xlu0 %631
        %634 = vrot.lane.b32.xlu0 %v590, 48
        %v635 = vpop.permute.xlu0 %634
        %637 = vrot.lane.b32.xlu0 %v590, 32
        %v638 = vpop.permute.xlu0 %637
        %640 = vrot.lane.b32.xlu0 %v590, 16
        %v641 = vpop.permute.xlu0 %640
        %644 = vrot.lane.b32.xlu0 %v599, 112
        %v645 = vpop.permute.xlu0 %644
        %647 = vrot.lane.b32.xlu0 %v599, 96
        %v648 = vpop.permute.xlu0 %647
        %650 = vrot.lane.b32.xlu0 %v599, 80
        %v651 = vpop.permute.xlu0 %650
        %653 = vrot.lane.b32.xlu0 %v599, 64
        %v654 = vpop.permute.xlu0 %653
        %656 = vrot.lane.b32.xlu0 %v599, 48
        %v657 = vpop.permute.xlu0 %656
        %659 = vrot.lane.b32.xlu0 %v599, 32
        %v660 = vpop.permute.xlu0 %659
        %662 = vrot.lane.b32.xlu0 %v599, 16
        %v663 = vpop.permute.xlu0 %662
        %vm665 = vcmask 1040384
        %v666 = vsel %vm665, %v590, %v623
        %v667 = vsel %vm449, %v666, %v626
        %vm668 = vcmask 1042432
        %v669 = vsel %vm668, %v667, %v629
        %vm670 = vcmask 1043456
        %v671 = vsel %vm670, %v669, %v632
        %vm672 = vcmask 1044480
        %v673 = vsel %vm672, %v671, %v635
        %vm674 = vcmask 1045504
        %v675 = vsel %vm674, %v673, %v638
        %vm676 = vcmask 1046528
        %v677 = vsel %vm676, %v675, %v641
        %v678 = vsel %vm665, %v599, %v645
        %v679 = vsel %vm449, %v678, %v648
        %v680 = vsel %vm668, %v679, %v651
        %v681 = vsel %vm670, %v680, %v654
        %v682 = vsel %vm672, %v681, %v657
        %v683 = vsel %vm674, %v682, %v660
        %v684 = vsel %vm676, %v683, %v663
        %v687 = vrot.slane %v677, 5
        %v688 = vrot.slane %v684, 5
        %v689 = vsel %vm668, %v687, %v688
        %v692 = vsel %vm668, 0.0, %v687
        %v693 = vsel %vm668, %v688, 0.0
        %696 = vrot.lane.b32.xlu0 %v692, 3
        %v697 = vpop.permute.xlu0 %696
        %698 = vrot.lane.b32.xlu0 %v689, 3
        %v699 = vpop.permute.xlu0 %698
        %700 = vrot.lane.b32.xlu0 %v693, 3
        %v701 = vpop.permute.xlu0 %700
        %vm705 = vcmask 23552
        %v706 = vsel %vm705, 0.0, %v697
        %v707 = vsel %vm705, 0.0, %v699
        %v708 = vsel %vm705, 0.0, %v701
        %vm709 = vcmask 154624
        %v710 = vsel %vm709, %v706, 0.0
        %v711 = vsel %vm709, %v707, 0.0
        %v712 = vsel %vm709, %v708, 0.0
        %714 = vrot.lane.b32.xlu0 %v619, 112
        %v715 = vpop.permute.xlu0 %714
        %717 = vrot.lane.b32.xlu0 %v619, 96
        %v718 = vpop.permute.xlu0 %717
        %720 = vrot.lane.b32.xlu0 %v619, 80
        %v721 = vpop.permute.xlu0 %720
        %723 = vrot.lane.b32.xlu0 %v619, 64
        %v724 = vpop.permute.xlu0 %723
        %726 = vrot.lane.b32.xlu0 %v619, 48
        %v727 = vpop.permute.xlu0 %726
        %729 = vrot.lane.b32.xlu0 %v619, 32
        %v730 = vpop.permute.xlu0 %729
        %732 = vrot.lane.b32.xlu0 %v619, 16
        %v733 = vpop.permute.xlu0 %732
        %736 = vrot.lane.b32.xlu0 %v620, 112
        %v737 = vpop.permute.xlu0 %736
        %739 = vrot.lane.b32.xlu0 %v620, 96
        %v740 = vpop.permute.xlu0 %739
        %742 = vrot.lane.b32.xlu0 %v620, 80
        %v743 = vpop.permute.xlu0 %742
        %745 = vrot.lane.b32.xlu0 %v620, 64
        %v746 = vpop.permute.xlu0 %745
        %748 = vrot.lane.b32.xlu0 %v620, 48
        %v749 = vpop.permute.xlu0 %748
        %751 = vrot.lane.b32.xlu0 %v620, 32
        %v752 = vpop.permute.xlu0 %751
        %754 = vrot.lane.b32.xlu0 %v620, 16
        %v755 = vpop.permute.xlu0 %754
        %v757 = vsel %vm665, %v619, %v715
        %v758 = vsel %vm449, %v757, %v718
        %v759 = vsel %vm668, %v758, %v721
        %v760 = vsel %vm670, %v759, %v724
        %v761 = vsel %vm672, %v760, %v727
        %v762 = vsel %vm674, %v761, %v730
        %v763 = vsel %vm676, %v762, %v733
        %v764 = vsel %vm665, %v620, %v737
        %v765 = vsel %vm449, %v764, %v740
        %v766 = vsel %vm668, %v765, %v743
        %v767 = vsel %vm670, %v766, %v746
        %v768 = vsel %vm672, %v767, %v749
        %v769 = vsel %vm674, %v768, %v752
        %v770 = vsel %vm676, %v769, %v755
        %v773 = vrot.slane %v763, 5
        %v774 = vrot.slane %v770, 5
        %v775 = vsel %vm668, %v773, %v774
        %v778 = vsel %vm668, 0.0, %v773
        %v779 = vsel %vm668, %v774, 0.0
        %782 = vrot.lane.b32.xlu0 %v778, 3
        %v783 = vpop.permute.xlu0 %782
        %784 = vrot.lane.b32.xlu0 %v775, 3
        %v785 = vpop.permute.xlu0 %784
        %786 = vrot.lane.b32.xlu0 %v779, 3
        %v787 = vpop.permute.xlu0 %786
        %v791 = vsel %vm705, 0.0, %v783
        %v792 = vsel %vm705, 0.0, %v785
        %v793 = vsel %vm705, 0.0, %v787
        %v794 = vsel %vm709, %v791, 0.0
        %v795 = vsel %vm709, %v792, 0.0
        %v796 = vsel %vm709, %v793, 0.0
        %s797 = sld [smem:[#allocation6 + $0x62]]
        %v798 = vstv %s797
        %s799 = sld [smem:[#allocation6]]
        %v800 = vstv %s799
        %v801 = vmul.f32 %v800, %v710
        %v802 = vmul.f32 %v800, %v711
        %v803 = vadd.f32 %v798, %v801
        %v804 = vadd.f32 %v798, %v802
        %s805 = sld [smem:[#allocation6 + $0x1]]
        %v806 = vstv %s805
        %v807 = vmul.f32 %v806, %v710
        %v808 = vmul.f32 %v806, %v711
        %811 = vrot.lane.b32.xlu0 %v807, 127
        %v812 = vpop.permute.xlu0 %811
        %813 = vrot.lane.b32.xlu0 %v808, 127
        %v814 = vpop.permute.xlu0 %813
        %v817 = vadd.f32 %v803, %v812
        %v818 = vadd.f32 %v804, %v814
        %s819 = sld [smem:[#allocation6 + $0x2]]
        %v820 = vstv %s819
        %v821 = vmul.f32 %v820, %v710
        %v822 = vmul.f32 %v820, %v711
        %825 = vrot.lane.b32.xlu0 %v821, 126
        %v826 = vpop.permute.xlu0 %825
        %827 = vrot.lane.b32.xlu0 %v822, 126
        %v828 = vpop.permute.xlu0 %827
        %v831 = vadd.f32 %v817, %v826
        %v832 = vadd.f32 %v818, %v828
        %s833 = sld [smem:[#allocation6 + $0x3]]
        %v834 = vstv %s833
        %v835 = vmul.f32 %v834, %v710
        %v836 = vmul.f32 %v834, %v711
        %839 = vrot.lane.b32.xlu0 %v835, 125
        %v840 = vpop.permute.xlu0 %839
        %841 = vrot.lane.b32.xlu0 %v836, 125
        %v842 = vpop.permute.xlu0 %841
        %v845 = vadd.f32 %v831, %v840
        %v846 = vadd.f32 %v832, %v842
        %s847 = sld [smem:[#allocation6 + $0x4]]
        %v848 = vstv %s847
        %v849 = vmul.f32 %v848, %v710
        %v850 = vmul.f32 %v848, %v711
        %853 = vrot.lane.b32.xlu0 %v849, 124
        %v854 = vpop.permute.xlu0 %853
        %855 = vrot.lane.b32.xlu0 %v850, 124
        %v856 = vpop.permute.xlu0 %855
        %v859 = vadd.f32 %v845, %v854
        %v860 = vadd.f32 %v846, %v856
        %s861 = sld [smem:[#allocation6 + $0x5]]
        %v862 = vstv %s861
        %v863 = vmul.f32 %v862, %v710
        %v864 = vmul.f32 %v862, %v711
        %867 = vrot.lane.b32.xlu0 %v863, 123
        %v868 = vpop.permute.xlu0 %867
        %869 = vrot.lane.b32.xlu0 %v864, 123
        %v870 = vpop.permute.xlu0 %869
        %v873 = vadd.f32 %v859, %v868
        %v874 = vadd.f32 %v860, %v870
        %s875 = sld [smem:[#allocation6 + $0x6]]
        %v876 = vstv %s875
        %v877 = vmul.f32 %v876, %v710
        %v878 = vmul.f32 %v876, %v711
        %881 = vrot.lane.b32.xlu0 %v877, 122
        %v882 = vpop.permute.xlu0 %881
        %883 = vrot.lane.b32.xlu0 %v878, 122
        %v884 = vpop.permute.xlu0 %883
        %v887 = vadd.f32 %v873, %v882
        %v888 = vadd.f32 %v874, %v884
        %s889 = sld [smem:[#allocation6 + $0x7]]
        %v890 = vstv %s889
        %v891 = vmul.f32 %v890, %v710
        %v892 = vmul.f32 %v890, %v711
        %v893 = vmul.f32 %v890, %v712
        %v897 = vrot.slane %v891, 1
        %v898 = vrot.slane %v892, 1
        %v899 = vsel %vm676, %v897, %v898
        %v900 = vrot.slane %v893, 1
        %v901 = vsel %vm676, %v898, %v900
        %v904 = vadd.f32 %v887, %v899
        %v905 = vadd.f32 %v888, %v901
        %s906 = sld [smem:[#allocation6 + $0x8]]
        %v907 = vstv %s906
        %v908 = vmul.f32 %v907, %v710
        %v909 = vmul.f32 %v907, %v711
        %v910 = vmul.f32 %v907, %v712
        %v914 = vrot.slane %v908, 1
        %v915 = vrot.slane %v909, 1
        %v916 = vsel %vm676, %v914, %v915
        %v917 = vrot.slane %v910, 1
        %v918 = vsel %vm676, %v915, %v917
        %919 = vrot.lane.b32.xlu0 %v916, 127
        %v920 = vpop.permute.xlu0 %919
        %921 = vrot.lane.b32.xlu0 %v918, 127
        %v922 = vpop.permute.xlu0 %921
        %v925 = vadd.f32 %v904, %v920
        %v926 = vadd.f32 %v905, %v922
        %s927 = sld [smem:[#allocation6 + $0x9]]
        %v928 = vstv %s927
        %v929 = vmul.f32 %v928, %v710
        %v930 = vmul.f32 %v928, %v711
        %v931 = vmul.f32 %v928, %v712
        %v935 = vrot.slane %v929, 1
        %v936 = vrot.slane %v930, 1
        %v937 = vsel %vm676, %v935, %v936
        %v938 = vrot.slane %v931, 1
        %v939 = vsel %vm676, %v936, %v938
        %940 = vrot.lane.b32.xlu0 %v937, 126
        %v941 = vpop.permute.xlu0 %940
        %942 = vrot.lane.b32.xlu0 %v939, 126
        %v943 = vpop.permute.xlu0 %942
        %v946 = vadd.f32 %v925, %v941
        %v947 = vadd.f32 %v926, %v943
        %s948 = sld [smem:[#allocation6 + $0xa]]
        %v949 = vstv %s948
        %v950 = vmul.f32 %v949, %v710
        %v951 = vmul.f32 %v949, %v711
        %v952 = vmul.f32 %v949, %v712
        %v956 = vrot.slane %v950, 1
        %v957 = vrot.slane %v951, 1
        %v958 = vsel %vm676, %v956, %v957
        %v959 = vrot.slane %v952, 1
        %v960 = vsel %vm676, %v957, %v959
        %961 = vrot.lane.b32.xlu0 %v958, 125
        %v962 = vpop.permute.xlu0 %961
        %963 = vrot.lane.b32.xlu0 %v960, 125
        %v964 = vpop.permute.xlu0 %963
        %v967 = vadd.f32 %v946, %v962
        %v968 = vadd.f32 %v947, %v964
        %s969 = sld [smem:[#allocation6 + $0xb]]
        %v970 = vstv %s969
        %v971 = vmul.f32 %v970, %v710
        %v972 = vmul.f32 %v970, %v711
        %v973 = vmul.f32 %v970, %v712
        %v977 = vrot.slane %v971, 1
        %v978 = vrot.slane %v972, 1
        %v979 = vsel %vm676, %v977, %v978
        %v980 = vrot.slane %v973, 1
        %v981 = vsel %vm676, %v978, %v980
        %982 = vrot.lane.b32.xlu0 %v979, 124
        %v983 = vpop.permute.xlu0 %982
        %984 = vrot.lane.b32.xlu0 %v981, 124
        %v985 = vpop.permute.xlu0 %984
        %v988 = vadd.f32 %v967, %v983
        %v989 = vadd.f32 %v968, %v985
        %s990 = sld [smem:[#allocation6 + $0xc]]
        %v991 = vstv %s990
        %v992 = vmul.f32 %v991, %v710
        %v993 = vmul.f32 %v991, %v711
        %v994 = vmul.f32 %v991, %v712
        %v998 = vrot.slane %v992, 1
        %v999 = vrot.slane %v993, 1
        %v1000 = vsel %vm676, %v998, %v999
        %v1001 = vrot.slane %v994, 1
        %v1002 = vsel %vm676, %v999, %v1001
        %1003 = vrot.lane.b32.xlu0 %v1000, 123
        %v1004 = vpop.permute.xlu0 %1003
        %1005 = vrot.lane.b32.xlu0 %v1002, 123
        %v1006 = vpop.permute.xlu0 %1005
        %v1009 = vadd.f32 %v988, %v1004
        %v1010 = vadd.f32 %v989, %v1006
        %s1011 = sld [smem:[#allocation6 + $0xd]]
        %v1012 = vstv %s1011
        %v1013 = vmul.f32 %v1012, %v710
        %v1014 = vmul.f32 %v1012, %v711
        %v1015 = vmul.f32 %v1012, %v712
        %v1019 = vrot.slane %v1013, 1
        %v1020 = vrot.slane %v1014, 1
        %v1021 = vsel %vm676, %v1019, %v1020
        %v1022 = vrot.slane %v1015, 1
        %v1023 = vsel %vm676, %v1020, %v1022
        %1024 = vrot.lane.b32.xlu0 %v1021, 122
        %v1025 = vpop.permute.xlu0 %1024
        %1026 = vrot.lane.b32.xlu0 %v1023, 122
        %v1027 = vpop.permute.xlu0 %1026
        %v1030 = vadd.f32 %v1009, %v1025
        %v1031 = vadd.f32 %v1010, %v1027
        %s1032 = sld [smem:[#allocation6 + $0xe]]
        %v1033 = vstv %s1032
        %v1034 = vmul.f32 %v1033, %v710
        %v1035 = vmul.f32 %v1033, %v711
        %v1036 = vmul.f32 %v1033, %v712
        %v1040 = vrot.slane %v1034, 2
        %v1041 = vrot.slane %v1035, 2
        %v1042 = vsel %vm674, %v1040, %v1041
        %v1043 = vrot.slane %v1036, 2
        %v1044 = vsel %vm674, %v1041, %v1043
        %v1047 = vadd.f32 %v1030, %v1042
        %v1048 = vadd.f32 %v1031, %v1044
        %s1049 = sld [smem:[#allocation6 + $0xf]]
        %v1050 = vstv %s1049
        %v1051 = vmul.f32 %v1050, %v710
        %v1052 = vmul.f32 %v1050, %v711
        %v1053 = vmul.f32 %v1050, %v712
        %v1057 = vrot.slane %v1051, 2
        %v1058 = vrot.slane %v1052, 2
        %v1059 = vsel %vm674, %v1057, %v1058
        %v1060 = vrot.slane %v1053, 2
        %v1061 = vsel %vm674, %v1058, %v1060
        %1062 = vrot.lane.b32.xlu0 %v1059, 127
        %v1063 = vpop.permute.xlu0 %1062
        %1064 = vrot.lane.b32.xlu0 %v1061, 127
        %v1065 = vpop.permute.xlu0 %1064
        %v1068 = vadd.f32 %v1047, %v1063
        %v1069 = vadd.f32 %v1048, %v1065
        %s1070 = sld [smem:[#allocation6 + $0x10]]
        %v1071 = vstv %s1070
        %v1072 = vmul.f32 %v1071, %v710
        %v1073 = vmul.f32 %v1071, %v711
        %v1074 = vmul.f32 %v1071, %v712
        %v1078 = vrot.slane %v1072, 2
        %v1079 = vrot.slane %v1073, 2
        %v1080 = vsel %vm674, %v1078, %v1079
        %v1081 = vrot.slane %v1074, 2
        %v1082 = vsel %vm674, %v1079, %v1081
        %1083 = vrot.lane.b32.xlu0 %v1080, 126
        %v1084 = vpop.permute.xlu0 %1083
        %1085 = vrot.lane.b32.xlu0 %v1082, 126
        %v1086 = vpop.permute.xlu0 %1085
        %v1089 = vadd.f32 %v1068, %v1084
        %v1090 = vadd.f32 %v1069, %v1086
        %s1091 = sld [smem:[#allocation6 + $0x11]]
        %v1092 = vstv %s1091
        %v1093 = vmul.f32 %v1092, %v710
        %v1094 = vmul.f32 %v1092, %v711
        %v1095 = vmul.f32 %v1092, %v712
        %v1099 = vrot.slane %v1093, 2
        %v1100 = vrot.slane %v1094, 2
        %v1101 = vsel %vm674, %v1099, %v1100
        %v1102 = vrot.slane %v1095, 2
        %v1103 = vsel %vm674, %v1100, %v1102
        %1104 = vrot.lane.b32.xlu0 %v1101, 125
        %v1105 = vpop.permute.xlu0 %1104
        %1106 = vrot.lane.b32.xlu0 %v1103, 125
        %v1107 = vpop.permute.xlu0 %1106
        %v1110 = vadd.f32 %v1089, %v1105
        %v1111 = vadd.f32 %v1090, %v1107
        %s1112 = sld [smem:[#allocation6 + $0x12]]
        %v1113 = vstv %s1112
        %v1114 = vmul.f32 %v1113, %v710
        %v1115 = vmul.f32 %v1113, %v711
        %v1116 = vmul.f32 %v1113, %v712
        %v1120 = vrot.slane %v1114, 2
        %v1121 = vrot.slane %v1115, 2
        %v1122 = vsel %vm674, %v1120, %v1121
        %v1123 = vrot.slane %v1116, 2
        %v1124 = vsel %vm674, %v1121, %v1123
        %1125 = vrot.lane.b32.xlu0 %v1122, 124
        %v1126 = vpop.permute.xlu0 %1125
        %1127 = vrot.lane.b32.xlu0 %v1124, 124
        %v1128 = vpop.permute.xlu0 %1127
        %v1131 = vadd.f32 %v1110, %v1126
        %v1132 = vadd.f32 %v1111, %v1128
        %s1133 = sld [smem:[#allocation6 + $0x13]]
        %v1134 = vstv %s1133
        %v1135 = vmul.f32 %v1134, %v710
        %v1136 = vmul.f32 %v1134, %v711
        %v1137 = vmul.f32 %v1134, %v712
        %v1141 = vrot.slane %v1135, 2
        %v1142 = vrot.slane %v1136, 2
        %v1143 = vsel %vm674, %v1141, %v1142
        %v1144 = vrot.slane %v1137, 2
        %v1145 = vsel %vm674, %v1142, %v1144
        %1146 = vrot.lane.b32.xlu0 %v1143, 123
        %v1147 = vpop.permute.xlu0 %1146
        %1148 = vrot.lane.b32.xlu0 %v1145, 123
        %v1149 = vpop.permute.xlu0 %1148
        %v1152 = vadd.f32 %v1131, %v1147
        %v1153 = vadd.f32 %v1132, %v1149
        %s1154 = sld [smem:[#allocation6 + $0x14]]
        %v1155 = vstv %s1154
        %v1156 = vmul.f32 %v1155, %v710
        %v1157 = vmul.f32 %v1155, %v711
        %v1158 = vmul.f32 %v1155, %v712
        %v1162 = vrot.slane %v1156, 2
        %v1163 = vrot.slane %v1157, 2
        %v1164 = vsel %vm674, %v1162, %v1163
        %v1165 = vrot.slane %v1158, 2
        %v1166 = vsel %vm674, %v1163, %v1165
        %1167 = vrot.lane.b32.xlu0 %v1164, 122
        %v1168 = vpop.permute.xlu0 %1167
        %1169 = vrot.lane.b32.xlu0 %v1166, 122
        %v1170 = vpop.permute.xlu0 %1169
        %v1173 = vadd.f32 %v1152, %v1168
        %v1174 = vadd.f32 %v1153, %v1170
        %s1175 = sld [smem:[#allocation6 + $0x15]]
        %v1176 = vstv %s1175
        %v1177 = vmul.f32 %v1176, %v710
        %v1178 = vmul.f32 %v1176, %v711
        %v1179 = vmul.f32 %v1176, %v712
        %v1183 = vrot.slane %v1177, 3
        %v1184 = vrot.slane %v1178, 3
        %v1185 = vsel %vm672, %v1183, %v1184
        %v1186 = vrot.slane %v1179, 3
        %v1187 = vsel %vm672, %v1184, %v1186
        %v1190 = vadd.f32 %v1173, %v1185
        %v1191 = vadd.f32 %v1174, %v1187
        %s1192 = sld [smem:[#allocation6 + $0x16]]
        %v1193 = vstv %s1192
        %v1194 = vmul.f32 %v1193, %v710
        %v1195 = vmul.f32 %v1193, %v711
        %v1196 = vmul.f32 %v1193, %v712
        %v1200 = vrot.slane %v1194, 3
        %v1201 = vrot.slane %v1195, 3
        %v1202 = vsel %vm672, %v1200, %v1201
        %v1203 = vrot.slane %v1196, 3
        %v1204 = vsel %vm672, %v1201, %v1203
        %1205 = vrot.lane.b32.xlu0 %v1202, 127
        %v1206 = vpop.permute.xlu0 %1205
        %1207 = vrot.lane.b32.xlu0 %v1204, 127
        %v1208 = vpop.permute.xlu0 %1207
        %v1211 = vadd.f32 %v1190, %v1206
        %v1212 = vadd.f32 %v1191, %v1208
        %s1213 = sld [smem:[#allocation6 + $0x17]]
        %v1214 = vstv %s1213
        %v1215 = vmul.f32 %v1214, %v710
        %v1216 = vmul.f32 %v1214, %v711
        %v1217 = vmul.f32 %v1214, %v712
        %v1221 = vrot.slane %v1215, 3
        %v1222 = vrot.slane %v1216, 3
        %v1223 = vsel %vm672, %v1221, %v1222
        %v1224 = vrot.slane %v1217, 3
        %v1225 = vsel %vm672, %v1222, %v1224
        %1226 = vrot.lane.b32.xlu0 %v1223, 126
        %v1227 = vpop.permute.xlu0 %1226
        %1228 = vrot.lane.b32.xlu0 %v1225, 126
        %v1229 = vpop.permute.xlu0 %1228
        %v1232 = vadd.f32 %v1211, %v1227
        %v1233 = vadd.f32 %v1212, %v1229
        %s1234 = sld [smem:[#allocation6 + $0x18]]
        %v1235 = vstv %s1234
        %v1236 = vmul.f32 %v1235, %v710
        %v1237 = vmul.f32 %v1235, %v711
        %v1238 = vmul.f32 %v1235, %v712
        %v1242 = vrot.slane %v1236, 3
        %v1243 = vrot.slane %v1237, 3
        %v1244 = vsel %vm672, %v1242, %v1243
        %v1245 = vrot.slane %v1238, 3
        %v1246 = vsel %vm672, %v1243, %v1245
        %1247 = vrot.lane.b32.xlu0 %v1244, 125
        %v1248 = vpop.permute.xlu0 %1247
        %1249 = vrot.lane.b32.xlu0 %v1246, 125
        %v1250 = vpop.permute.xlu0 %1249
        %v1253 = vadd.f32 %v1232, %v1248
        %v1254 = vadd.f32 %v1233, %v1250
        %s1255 = sld [smem:[#allocation6 + $0x19]]
        %v1256 = vstv %s1255
        %v1257 = vmul.f32 %v1256, %v710
        %v1258 = vmul.f32 %v1256, %v711
        %v1259 = vmul.f32 %v1256, %v712
        %v1263 = vrot.slane %v1257, 3
        %v1264 = vrot.slane %v1258, 3
        %v1265 = vsel %vm672, %v1263, %v1264
        %v1266 = vrot.slane %v1259, 3
        %v1267 = vsel %vm672, %v1264, %v1266
        %1268 = vrot.lane.b32.xlu0 %v1265, 124
        %v1269 = vpop.permute.xlu0 %1268
        %1270 = vrot.lane.b32.xlu0 %v1267, 124
        %v1271 = vpop.permute.xlu0 %1270
        %v1274 = vadd.f32 %v1253, %v1269
        %v1275 = vadd.f32 %v1254, %v1271
        %s1276 = sld [smem:[#allocation6 + $0x1a]]
        %v1277 = vstv %s1276
        %v1278 = vmul.f32 %v1277, %v710
        %v1279 = vmul.f32 %v1277, %v711
        %v1280 = vmul.f32 %v1277, %v712
        %v1284 = vrot.slane %v1278, 3
        %v1285 = vrot.slane %v1279, 3
        %v1286 = vsel %vm672, %v1284, %v1285
        %v1287 = vrot.slane %v1280, 3
        %v1288 = vsel %vm672, %v1285, %v1287
        %1289 = vrot.lane.b32.xlu0 %v1286, 123
        %v1290 = vpop.permute.xlu0 %1289
        %1291 = vrot.lane.b32.xlu0 %v1288, 123
        %v1292 = vpop.permute.xlu0 %1291
        %v1295 = vadd.f32 %v1274, %v1290
        %v1296 = vadd.f32 %v1275, %v1292
        %s1297 = sld [smem:[#allocation6 + $0x1b]]
        %v1298 = vstv %s1297
        %v1299 = vmul.f32 %v1298, %v710
        %v1300 = vmul.f32 %v1298, %v711
        %v1301 = vmul.f32 %v1298, %v712
        %v1305 = vrot.slane %v1299, 3
        %v1306 = vrot.slane %v1300, 3
        %v1307 = vsel %vm672, %v1305, %v1306
        %v1308 = vrot.slane %v1301, 3
        %v1309 = vsel %vm672, %v1306, %v1308
        %1310 = vrot.lane.b32.xlu0 %v1307, 122
        %v1311 = vpop.permute.xlu0 %1310
        %1312 = vrot.lane.b32.xlu0 %v1309, 122
        %v1313 = vpop.permute.xlu0 %1312
        %v1316 = vadd.f32 %v1295, %v1311
        %v1317 = vadd.f32 %v1296, %v1313
        %s1318 = sld [smem:[#allocation6 + $0x1c]]
        %v1319 = vstv %s1318
        %v1320 = vmul.f32 %v1319, %v710
        %v1321 = vmul.f32 %v1319, %v711
        %v1322 = vmul.f32 %v1319, %v712
        %v1326 = vrot.slane %v1320, 4
        %v1327 = vrot.slane %v1321, 4
        %v1328 = vsel %vm670, %v1326, %v1327
        %v1329 = vrot.slane %v1322, 4
        %v1330 = vsel %vm670, %v1327, %v1329
        %v1333 = vadd.f32 %v1316, %v1328
        %v1334 = vadd.f32 %v1317, %v1330
        %s1335 = sld [smem:[#allocation6 + $0x1d]]
        %v1336 = vstv %s1335
        %v1337 = vmul.f32 %v1336, %v710
        %v1338 = vmul.f32 %v1336, %v711
        %v1339 = vmul.f32 %v1336, %v712
        %v1343 = vrot.slane %v1337, 4
        %v1344 = vrot.slane %v1338, 4
        %v1345 = vsel %vm670, %v1343, %v1344
        %v1346 = vrot.slane %v1339, 4
        %v1347 = vsel %vm670, %v1344, %v1346
        %1348 = vrot.lane.b32.xlu0 %v1345, 127
        %v1349 = vpop.permute.xlu0 %1348
        %1350 = vrot.lane.b32.xlu0 %v1347, 127
        %v1351 = vpop.permute.xlu0 %1350
        %v1354 = vadd.f32 %v1333, %v1349
        %v1355 = vadd.f32 %v1334, %v1351
        %s1356 = sld [smem:[#allocation6 + $0x1e]]
        %v1357 = vstv %s1356
        %v1358 = vmul.f32 %v1357, %v710
        %v1359 = vmul.f32 %v1357, %v711
        %v1360 = vmul.f32 %v1357, %v712
        %v1364 = vrot.slane %v1358, 4
        %v1365 = vrot.slane %v1359, 4
        %v1366 = vsel %vm670, %v1364, %v1365
        %v1367 = vrot.slane %v1360, 4
        %v1368 = vsel %vm670, %v1365, %v1367
        %1369 = vrot.lane.b32.xlu0 %v1366, 126
        %v1370 = vpop.permute.xlu0 %1369
        %1371 = vrot.lane.b32.xlu0 %v1368, 126
        %v1372 = vpop.permute.xlu0 %1371
        %v1375 = vadd.f32 %v1354, %v1370
        %v1376 = vadd.f32 %v1355, %v1372
        %s1377 = sld [smem:[#allocation6 + $0x1f]]
        %v1378 = vstv %s1377
        %v1379 = vmul.f32 %v1378, %v710
        %v1380 = vmul.f32 %v1378, %v711
        %v1381 = vmul.f32 %v1378, %v712
        %v1385 = vrot.slane %v1379, 4
        %v1386 = vrot.slane %v1380, 4
        %v1387 = vsel %vm670, %v1385, %v1386
        %v1388 = vrot.slane %v1381, 4
        %v1389 = vsel %vm670, %v1386, %v1388
        %1390 = vrot.lane.b32.xlu0 %v1387, 125
        %v1391 = vpop.permute.xlu0 %1390
        %1392 = vrot.lane.b32.xlu0 %v1389, 125
        %v1393 = vpop.permute.xlu0 %1392
        %v1396 = vadd.f32 %v1375, %v1391
        %v1397 = vadd.f32 %v1376, %v1393
        %s1398 = sld [smem:[#allocation6 + $0x20]]
        %v1399 = vstv %s1398
        %v1400 = vmul.f32 %v1399, %v710
        %v1401 = vmul.f32 %v1399, %v711
        %v1402 = vmul.f32 %v1399, %v712
        %v1406 = vrot.slane %v1400, 4
        %v1407 = vrot.slane %v1401, 4
        %v1408 = vsel %vm670, %v1406, %v1407
        %v1409 = vrot.slane %v1402, 4
        %v1410 = vsel %vm670, %v1407, %v1409
        %1411 = vrot.lane.b32.xlu0 %v1408, 124
        %v1412 = vpop.permute.xlu0 %1411
        %1413 = vrot.lane.b32.xlu0 %v1410, 124
        %v1414 = vpop.permute.xlu0 %1413
        %v1417 = vadd.f32 %v1396, %v1412
        %v1418 = vadd.f32 %v1397, %v1414
        %s1419 = sld [smem:[#allocation6 + $0x21]]
        %v1420 = vstv %s1419
        %v1421 = vmul.f32 %v1420, %v710
        %v1422 = vmul.f32 %v1420, %v711
        %v1423 = vmul.f32 %v1420, %v712
        %v1427 = vrot.slane %v1421, 4
        %v1428 = vrot.slane %v1422, 4
        %v1429 = vsel %vm670, %v1427, %v1428
        %v1430 = vrot.slane %v1423, 4
        %v1431 = vsel %vm670, %v1428, %v1430
        %1432 = vrot.lane.b32.xlu0 %v1429, 123
        %v1433 = vpop.permute.xlu0 %1432
        %1434 = vrot.lane.b32.xlu0 %v1431, 123
        %v1435 = vpop.permute.xlu0 %1434
        %v1438 = vadd.f32 %v1417, %v1433
        %v1439 = vadd.f32 %v1418, %v1435
        %s1440 = sld [smem:[#allocation6 + $0x22]]
        %v1441 = vstv %s1440
        %v1442 = vmul.f32 %v1441, %v710
        %v1443 = vmul.f32 %v1441, %v711
        %v1444 = vmul.f32 %v1441, %v712
        %v1448 = vrot.slane %v1442, 4
        %v1449 = vrot.slane %v1443, 4
        %v1450 = vsel %vm670, %v1448, %v1449
        %v1451 = vrot.slane %v1444, 4
        %v1452 = vsel %vm670, %v1449, %v1451
        %1453 = vrot.lane.b32.xlu0 %v1450, 122
        %v1454 = vpop.permute.xlu0 %1453
        %1455 = vrot.lane.b32.xlu0 %v1452, 122
        %v1456 = vpop.permute.xlu0 %1455
        %v1459 = vadd.f32 %v1438, %v1454
        %v1460 = vadd.f32 %v1439, %v1456
        %s1461 = sld [smem:[#allocation6 + $0x23]]
        %v1462 = vstv %s1461
        %v1463 = vmul.f32 %v1462, %v710
        %v1464 = vmul.f32 %v1462, %v711
        %v1465 = vmul.f32 %v1462, %v712
        %v1469 = vrot.slane %v1463, 5
        %v1470 = vrot.slane %v1464, 5
        %v1471 = vsel %vm668, %v1469, %v1470
        %v1472 = vrot.slane %v1465, 5
        %v1473 = vsel %vm668, %v1470, %v1472
        %v1476 = vadd.f32 %v1459, %v1471
        %v1477 = vadd.f32 %v1460, %v1473
        %s1478 = sld [smem:[#allocation6 + $0x24]]
        %v1479 = vstv %s1478
        %v1480 = vmul.f32 %v1479, %v710
        %v1481 = vmul.f32 %v1479, %v711
        %v1482 = vmul.f32 %v1479, %v712
        %v1486 = vrot.slane %v1480, 5
        %v1487 = vrot.slane %v1481, 5
        %v1488 = vsel %vm668, %v1486, %v1487
        %v1489 = vrot.slane %v1482, 5
        %v1490 = vsel %vm668, %v1487, %v1489
        %1491 = vrot.lane.b32.xlu0 %v1488, 127
        %v1492 = vpop.permute.xlu0 %1491
        %1493 = vrot.lane.b32.xlu0 %v1490, 127
        %v1494 = vpop.permute.xlu0 %1493
        %v1497 = vadd.f32 %v1476, %v1492
        %v1498 = vadd.f32 %v1477, %v1494
        %s1499 = sld [smem:[#allocation6 + $0x25]]
        %v1500 = vstv %s1499
        %v1501 = vmul.f32 %v1500, %v710
        %v1502 = vmul.f32 %v1500, %v711
        %v1503 = vmul.f32 %v1500, %v712
        %v1507 = vrot.slane %v1501, 5
        %v1508 = vrot.slane %v1502, 5
        %v1509 = vsel %vm668, %v1507, %v1508
        %v1510 = vrot.slane %v1503, 5
        %v1511 = vsel %vm668, %v1508, %v1510
        %1512 = vrot.lane.b32.xlu0 %v1509, 126
        %v1513 = vpop.permute.xlu0 %1512
        %1514 = vrot.lane.b32.xlu0 %v1511, 126
        %v1515 = vpop.permute.xlu0 %1514
        %v1518 = vadd.f32 %v1497, %v1513
        %v1519 = vadd.f32 %v1498, %v1515
        %s1520 = sld [smem:[#allocation6 + $0x26]]
        %v1521 = vstv %s1520
        %v1522 = vmul.f32 %v1521, %v710
        %v1523 = vmul.f32 %v1521, %v711
        %v1524 = vmul.f32 %v1521, %v712
        %v1528 = vrot.slane %v1522, 5
        %v1529 = vrot.slane %v1523, 5
        %v1530 = vsel %vm668, %v1528, %v1529
        %v1531 = vrot.slane %v1524, 5
        %v1532 = vsel %vm668, %v1529, %v1531
        %1533 = vrot.lane.b32.xlu0 %v1530, 125
        %v1534 = vpop.permute.xlu0 %1533
        %1535 = vrot.lane.b32.xlu0 %v1532, 125
        %v1536 = vpop.permute.xlu0 %1535
        %v1539 = vadd.f32 %v1518, %v1534
        %v1540 = vadd.f32 %v1519, %v1536
        %s1541 = sld [smem:[#allocation6 + $0x27]]
        %v1542 = vstv %s1541
        %v1543 = vmul.f32 %v1542, %v710
        %v1544 = vmul.f32 %v1542, %v711
        %v1545 = vmul.f32 %v1542, %v712
        %v1549 = vrot.slane %v1543, 5
        %v1550 = vrot.slane %v1544, 5
        %v1551 = vsel %vm668, %v1549, %v1550
        %v1552 = vrot.slane %v1545, 5
        %v1553 = vsel %vm668, %v1550, %v1552
        %1554 = vrot.lane.b32.xlu0 %v1551, 124
        %v1555 = vpop.permute.xlu0 %1554
        %1556 = vrot.lane.b32.xlu0 %v1553, 124
        %v1557 = vpop.permute.xlu0 %1556
        %v1560 = vadd.f32 %v1539, %v1555
        %v1561 = vadd.f32 %v1540, %v1557
        %s1562 = sld [smem:[#allocation6 + $0x28]]
        %v1563 = vstv %s1562
        %v1564 = vmul.f32 %v1563, %v710
        %v1565 = vmul.f32 %v1563, %v711
        %v1566 = vmul.f32 %v1563, %v712
        %v1570 = vrot.slane %v1564, 5
        %v1571 = vrot.slane %v1565, 5
        %v1572 = vsel %vm668, %v1570, %v1571
        %v1573 = vrot.slane %v1566, 5
        %v1574 = vsel %vm668, %v1571, %v1573
        %1575 = vrot.lane.b32.xlu0 %v1572, 123
        %v1576 = vpop.permute.xlu0 %1575
        %1577 = vrot.lane.b32.xlu0 %v1574, 123
        %v1578 = vpop.permute.xlu0 %1577
        %v1581 = vadd.f32 %v1560, %v1576
        %v1582 = vadd.f32 %v1561, %v1578
        %s1583 = sld [smem:[#allocation6 + $0x29]]
        %v1584 = vstv %s1583
        %v1585 = vmul.f32 %v1584, %v710
        %v1586 = vmul.f32 %v1584, %v711
        %v1587 = vmul.f32 %v1584, %v712
        %v1591 = vrot.slane %v1585, 5
        %v1592 = vrot.slane %v1586, 5
        %v1593 = vsel %vm668, %v1591, %v1592
        %v1594 = vrot.slane %v1587, 5
        %v1595 = vsel %vm668, %v1592, %v1594
        %1596 = vrot.lane.b32.xlu0 %v1593, 122
        %v1597 = vpop.permute.xlu0 %1596
        %1598 = vrot.lane.b32.xlu0 %v1595, 122
        %v1599 = vpop.permute.xlu0 %1598
        %v1602 = vadd.f32 %v1581, %v1597
        %v1603 = vadd.f32 %v1582, %v1599
        %s1604 = sld [smem:[#allocation6 + $0x2a]]
        %v1605 = vstv %s1604
        %v1606 = vmul.f32 %v1605, %v710
        %v1607 = vmul.f32 %v1605, %v711
        %v1608 = vmul.f32 %v1605, %v712
        %v1612 = vrot.slane %v1606, 6
        %v1613 = vrot.slane %v1607, 6
        %v1614 = vsel %vm449, %v1612, %v1613
        %v1615 = vrot.slane %v1608, 6
        %v1616 = vsel %vm449, %v1613, %v1615
        %v1619 = vadd.f32 %v1602, %v1614
        %v1620 = vadd.f32 %v1603, %v1616
        %s1621 = sld [smem:[#allocation6 + $0x2b]]
        %v1622 = vstv %s1621
        %v1623 = vmul.f32 %v1622, %v710
        %v1624 = vmul.f32 %v1622, %v711
        %v1625 = vmul.f32 %v1622, %v712
        %v1629 = vrot.slane %v1623, 6
        %v1630 = vrot.slane %v1624, 6
        %v1631 = vsel %vm449, %v1629, %v1630
        %v1632 = vrot.slane %v1625, 6
        %v1633 = vsel %vm449, %v1630, %v1632
        %1634 = vrot.lane.b32.xlu0 %v1631, 127
        %v1635 = vpop.permute.xlu0 %1634
        %1636 = vrot.lane.b32.xlu0 %v1633, 127
        %v1637 = vpop.permute.xlu0 %1636
        %v1640 = vadd.f32 %v1619, %v1635
        %v1641 = vadd.f32 %v1620, %v1637
        %s1642 = sld [smem:[#allocation6 + $0x2c]]
        %v1643 = vstv %s1642
        %v1644 = vmul.f32 %v1643, %v710
        %v1645 = vmul.f32 %v1643, %v711
        %v1646 = vmul.f32 %v1643, %v712
        %v1650 = vrot.slane %v1644, 6
        %v1651 = vrot.slane %v1645, 6
        %v1652 = vsel %vm449, %v1650, %v1651
        %v1653 = vrot.slane %v1646, 6
        %v1654 = vsel %vm449, %v1651, %v1653
        %1655 = vrot.lane.b32.xlu0 %v1652, 126
        %v1656 = vpop.permute.xlu0 %1655
        %1657 = vrot.lane.b32.xlu0 %v1654, 126
        %v1658 = vpop.permute.xlu0 %1657
        %v1661 = vadd.f32 %v1640, %v1656
        %v1662 = vadd.f32 %v1641, %v1658
        %s1663 = sld [smem:[#allocation6 + $0x2d]]
        %v1664 = vstv %s1663
        %v1665 = vmul.f32 %v1664, %v710
        %v1666 = vmul.f32 %v1664, %v711
        %v1667 = vmul.f32 %v1664, %v712
        %v1671 = vrot.slane %v1665, 6
        %v1672 = vrot.slane %v1666, 6
        %v1673 = vsel %vm449, %v1671, %v1672
        %v1674 = vrot.slane %v1667, 6
        %v1675 = vsel %vm449, %v1672, %v1674
        %1676 = vrot.lane.b32.xlu0 %v1673, 125
        %v1677 = vpop.permute.xlu0 %1676
        %1678 = vrot.lane.b32.xlu0 %v1675, 125
        %v1679 = vpop.permute.xlu0 %1678
        %v1682 = vadd.f32 %v1661, %v1677
        %v1683 = vadd.f32 %v1662, %v1679
        %s1684 = sld [smem:[#allocation6 + $0x2e]]
        %v1685 = vstv %s1684
        %v1686 = vmul.f32 %v1685, %v710
        %v1687 = vmul.f32 %v1685, %v711
        %v1688 = vmul.f32 %v1685, %v712
        %v1692 = vrot.slane %v1686, 6
        %v1693 = vrot.slane %v1687, 6
        %v1694 = vsel %vm449, %v1692, %v1693
        %v1695 = vrot.slane %v1688, 6
        %v1696 = vsel %vm449, %v1693, %v1695
        %1697 = vrot.lane.b32.xlu0 %v1694, 124
        %v1698 = vpop.permute.xlu0 %1697
        %1699 = vrot.lane.b32.xlu0 %v1696, 124
        %v1700 = vpop.permute.xlu0 %1699
        %v1703 = vadd.f32 %v1682, %v1698
        %v1704 = vadd.f32 %v1683, %v1700
        %s1705 = sld [smem:[#allocation6 + $0x2f]]
        %v1706 = vstv %s1705
        %v1707 = vmul.f32 %v1706, %v710
        %v1708 = vmul.f32 %v1706, %v711
        %v1709 = vmul.f32 %v1706, %v712
        %v1713 = vrot.slane %v1707, 6
        %v1714 = vrot.slane %v1708, 6
        %v1715 = vsel %vm449, %v1713, %v1714
        %v1716 = vrot.slane %v1709, 6
        %v1717 = vsel %vm449, %v1714, %v1716
        %1718 = vrot.lane.b32.xlu0 %v1715, 123
        %v1719 = vpop.permute.xlu0 %1718
        %1720 = vrot.lane.b32.xlu0 %v1717, 123
        %v1721 = vpop.permute.xlu0 %1720
        %v1724 = vadd.f32 %v1703, %v1719
        %v1725 = vadd.f32 %v1704, %v1721
        %s1726 = sld [smem:[#allocation6 + $0x30]]
        %v1727 = vstv %s1726
        %v1728 = vmul.f32 %v1727, %v710
        %v1729 = vmul.f32 %v1727, %v711
        %v1730 = vmul.f32 %v1727, %v712
        %v1734 = vrot.slane %v1728, 6
        %v1735 = vrot.slane %v1729, 6
        %v1736 = vsel %vm449, %v1734, %v1735
        %v1737 = vrot.slane %v1730, 6
        %v1738 = vsel %vm449, %v1735, %v1737
        %1739 = vrot.lane.b32.xlu0 %v1736, 122
        %v1740 = vpop.permute.xlu0 %1739
        %1741 = vrot.lane.b32.xlu0 %v1738, 122
        %v1742 = vpop.permute.xlu0 %1741
        %v1745 = vadd.f32 %v1724, %v1740
        %v1746 = vadd.f32 %v1725, %v1742
        %s1747 = sld [smem:[#allocation6 + $0x31]]
        %v1748 = vstv %s1747
        %v1749 = vmul.f32 %v1748, %v794
        %v1750 = vmul.f32 %v1748, %v795
        %v1751 = vadd.f32 %v1745, %v1749
        %v1752 = vadd.f32 %v1746, %v1750
        %s1753 = sld [smem:[#allocation6 + $0x32]]
        %v1754 = vstv %s1753
        %v1755 = vmul.f32 %v1754, %v794
        %v1756 = vmul.f32 %v1754, %v795
        %1759 = vrot.lane.b32.xlu0 %v1755, 127
        %v1760 = vpop.permute.xlu0 %1759
        %1761 = vrot.lane.b32.xlu0 %v1756, 127
        %v1762 = vpop.permute.xlu0 %1761
        %v1765 = vadd.f32 %v1751, %v1760
        %v1766 = vadd.f32 %v1752, %v1762
        %s1767 = sld [smem:[#allocation6 + $0x33]]
        %v1768 = vstv %s1767
        %v1769 = vmul.f32 %v1768, %v794
        %v1770 = vmul.f32 %v1768, %v795
        %1773 = vrot.lane.b32.xlu0 %v1769, 126
        %v1774 = vpop.permute.xlu0 %1773
        %1775 = vrot.lane.b32.xlu0 %v1770, 126
        %v1776 = vpop.permute.xlu0 %1775
        %v1779 = vadd.f32 %v1765, %v1774
        %v1780 = vadd.f32 %v1766, %v1776
        %s1781 = sld [smem:[#allocation6 + $0x34]]
        %v1782 = vstv %s1781
        %v1783 = vmul.f32 %v1782, %v794
        %v1784 = vmul.f32 %v1782, %v795
        %1787 = vrot.lane.b32.xlu0 %v1783, 125
        %v1788 = vpop.permute.xlu0 %1787
        %1789 = vrot.lane.b32.xlu0 %v1784, 125
        %v1790 = vpop.permute.xlu0 %1789
        %v1793 = vadd.f32 %v1779, %v1788
        %v1794 = vadd.f32 %v1780, %v1790
        %s1795 = sld [smem:[#allocation6 + $0x35]]
        %v1796 = vstv %s1795
        %v1797 = vmul.f32 %v1796, %v794
        %v1798 = vmul.f32 %v1796, %v795
        %1801 = vrot.lane.b32.xlu0 %v1797, 124
        %v1802 = vpop.permute.xlu0 %1801
        %1803 = vrot.lane.b32.xlu0 %v1798, 124
        %v1804 = vpop.permute.xlu0 %1803
        %v1807 = vadd.f32 %v1793, %v1802
        %v1808 = vadd.f32 %v1794, %v1804
        %s1809 = sld [smem:[#allocation6 + $0x36]]
        %v1810 = vstv %s1809
        %v1811 = vmul.f32 %v1810, %v794
        %v1812 = vmul.f32 %v1810, %v795
        %1815 = vrot.lane.b32.xlu0 %v1811, 123
        %v1816 = vpop.permute.xlu0 %1815
        %1817 = vrot.lane.b32.xlu0 %v1812, 123
        %v1818 = vpop.permute.xlu0 %1817
        %v1821 = vadd.f32 %v1807, %v1816
        %v1822 = vadd.f32 %v1808, %v1818
        %s1823 = sld [smem:[#allocation6 + $0x37]]
        %v1824 = vstv %s1823
        %v1825 = vmul.f32 %v1824, %v794
        %v1826 = vmul.f32 %v1824, %v795
        %1829 = vrot.lane.b32.xlu0 %v1825, 122
        %v1830 = vpop.permute.xlu0 %1829
        %1831 = vrot.lane.b32.xlu0 %v1826, 122
        %v1832 = vpop.permute.xlu0 %1831
        %v1835 = vadd.f32 %v1821, %v1830
        %v1836 = vadd.f32 %v1822, %v1832
        %s1837 = sld [smem:[#allocation6 + $0x38]]
        %v1838 = vstv %s1837
        %v1839 = vmul.f32 %v1838, %v794
        %v1840 = vmul.f32 %v1838, %v795
        %v1841 = vmul.f32 %v1838, %v796
        %v1845 = vrot.slane %v1839, 1
        %v1846 = vrot.slane %v1840, 1
        %v1847 = vsel %vm676, %v1845, %v1846
        %v1848 = vrot.slane %v1841, 1
        %v1849 = vsel %vm676, %v1846, %v1848
        %v1852 = vadd.f32 %v1835, %v1847
        %v1853 = vadd.f32 %v1836, %v1849
        %s1854 = sld [smem:[#allocation6 + $0x39]]
        %v1855 = vstv %s1854
        %v1856 = vmul.f32 %v1855, %v794
        %v1857 = vmul.f32 %v1855, %v795
        %v1858 = vmul.f32 %v1855, %v796
        %v1862 = vrot.slane %v1856, 1
        %v1863 = vrot.slane %v1857, 1
        %v1864 = vsel %vm676, %v1862, %v1863
        %v1865 = vrot.slane %v1858, 1
        %v1866 = vsel %vm676, %v1863, %v1865
        %1867 = vrot.lane.b32.xlu0 %v1864, 127
        %v1868 = vpop.permute.xlu0 %1867
        %1869 = vrot.lane.b32.xlu0 %v1866, 127
        %v1870 = vpop.permute.xlu0 %1869
        %v1873 = vadd.f32 %v1852, %v1868
        %v1874 = vadd.f32 %v1853, %v1870
        %s1875 = sld [smem:[#allocation6 + $0x3a]]
        %v1876 = vstv %s1875
        %v1877 = vmul.f32 %v1876, %v794
        %v1878 = vmul.f32 %v1876, %v795
        %v1879 = vmul.f32 %v1876, %v796
        %v1883 = vrot.slane %v1877, 1
        %v1884 = vrot.slane %v1878, 1
        %v1885 = vsel %vm676, %v1883, %v1884
        %v1886 = vrot.slane %v1879, 1
        %v1887 = vsel %vm676, %v1884, %v1886
        %1888 = vrot.lane.b32.xlu0 %v1885, 126
        %v1889 = vpop.permute.xlu0 %1888
        %1890 = vrot.lane.b32.xlu0 %v1887, 126
        %v1891 = vpop.permute.xlu0 %1890
        %v1894 = vadd.f32 %v1873, %v1889
        %v1895 = vadd.f32 %v1874, %v1891
        %s1896 = sld [smem:[#allocation6 + $0x3b]]
        %v1897 = vstv %s1896
        %v1898 = vmul.f32 %v1897, %v794
        %v1899 = vmul.f32 %v1897, %v795
        %v1900 = vmul.f32 %v1897, %v796
        %v1904 = vrot.slane %v1898, 1
        %v1905 = vrot.slane %v1899, 1
        %v1906 = vsel %vm676, %v1904, %v1905
        %v1907 = vrot.slane %v1900, 1
        %v1908 = vsel %vm676, %v1905, %v1907
        %1909 = vrot.lane.b32.xlu0 %v1906, 125
        %v1910 = vpop.permute.xlu0 %1909
        %1911 = vrot.lane.b32.xlu0 %v1908, 125
        %v1912 = vpop.permute.xlu0 %1911
        %v1915 = vadd.f32 %v1894, %v1910
        %v1916 = vadd.f32 %v1895, %v1912
        %s1917 = sld [smem:[#allocation6 + $0x3c]]
        %v1918 = vstv %s1917
        %v1919 = vmul.f32 %v1918, %v794
        %v1920 = vmul.f32 %v1918, %v795
        %v1921 = vmul.f32 %v1918, %v796
        %v1925 = vrot.slane %v1919, 1
        %v1926 = vrot.slane %v1920, 1
        %v1927 = vsel %vm676, %v1925, %v1926
        %v1928 = vrot.slane %v1921, 1
        %v1929 = vsel %vm676, %v1926, %v1928
        %1930 = vrot.lane.b32.xlu0 %v1927, 124
        %v1931 = vpop.permute.xlu0 %1930
        %1932 = vrot.lane.b32.xlu0 %v1929, 124
        %v1933 = vpop.permute.xlu0 %1932
        %v1936 = vadd.f32 %v1915, %v1931
        %v1937 = vadd.f32 %v1916, %v1933
        %s1938 = sld [smem:[#allocation6 + $0x3d]]
        %v1939 = vstv %s1938
        %v1940 = vmul.f32 %v1939, %v794
        %v1941 = vmul.f32 %v1939, %v795
        %v1942 = vmul.f32 %v1939, %v796
        %v1946 = vrot.slane %v1940, 1
        %v1947 = vrot.slane %v1941, 1
        %v1948 = vsel %vm676, %v1946, %v1947
        %v1949 = vrot.slane %v1942, 1
        %v1950 = vsel %vm676, %v1947, %v1949
        %1951 = vrot.lane.b32.xlu0 %v1948, 123
        %v1952 = vpop.permute.xlu0 %1951
        %1953 = vrot.lane.b32.xlu0 %v1950, 123
        %v1954 = vpop.permute.xlu0 %1953
        %v1957 = vadd.f32 %v1936, %v1952
        %v1958 = vadd.f32 %v1937, %v1954
        %s1959 = sld [smem:[#allocation6 + $0x3e]]
        %v1960 = vstv %s1959
        %v1961 = vmul.f32 %v1960, %v794
        %v1962 = vmul.f32 %v1960, %v795
        %v1963 = vmul.f32 %v1960, %v796
        %v1967 = vrot.slane %v1961, 1
        %v1968 = vrot.slane %v1962, 1
        %v1969 = vsel %vm676, %v1967, %v1968
        %v1970 = vrot.slane %v1963, 1
        %v1971 = vsel %vm676, %v1968, %v1970
        %1972 = vrot.lane.b32.xlu0 %v1969, 122
        %v1973 = vpop.permute.xlu0 %1972
        %1974 = vrot.lane.b32.xlu0 %v1971, 122
        %v1975 = vpop.permute.xlu0 %1974
        %v1978 = vadd.f32 %v1957, %v1973
        %v1979 = vadd.f32 %v1958, %v1975
        %s1980 = sld [smem:[#allocation6 + $0x3f]]
        %v1981 = vstv %s1980
        %v1982 = vmul.f32 %v1981, %v794
        %v1983 = vmul.f32 %v1981, %v795
        %v1984 = vmul.f32 %v1981, %v796
        %v1988 = vrot.slane %v1982, 2
        %v1989 = vrot.slane %v1983, 2
        %v1990 = vsel %vm674, %v1988, %v1989
        %v1991 = vrot.slane %v1984, 2
        %v1992 = vsel %vm674, %v1989, %v1991
        %v1995 = vadd.f32 %v1978, %v1990
        %v1996 = vadd.f32 %v1979, %v1992
        %s1997 = sld [smem:[#allocation6 + $0x40]]
        %v1998 = vstv %s1997
        %v1999 = vmul.f32 %v1998, %v794
        %v2000 = vmul.f32 %v1998, %v795
        %v2001 = vmul.f32 %v1998, %v796
        %v2005 = vrot.slane %v1999, 2
        %v2006 = vrot.slane %v2000, 2
        %v2007 = vsel %vm674, %v2005, %v2006
        %v2008 = vrot.slane %v2001, 2
        %v2009 = vsel %vm674, %v2006, %v2008
        %2010 = vrot.lane.b32.xlu0 %v2007, 127
        %v2011 = vpop.permute.xlu0 %2010
        %2012 = vrot.lane.b32.xlu0 %v2009, 127
        %v2013 = vpop.permute.xlu0 %2012
        %v2016 = vadd.f32 %v1995, %v2011
        %v2017 = vadd.f32 %v1996, %v2013
        %s2018 = sld [smem:[#allocation6 + $0x41]]
        %v2019 = vstv %s2018
        %v2020 = vmul.f32 %v2019, %v794
        %v2021 = vmul.f32 %v2019, %v795
        %v2022 = vmul.f32 %v2019, %v796
        %v2026 = vrot.slane %v2020, 2
        %v2027 = vrot.slane %v2021, 2
        %v2028 = vsel %vm674, %v2026, %v2027
        %v2029 = vrot.slane %v2022, 2
        %v2030 = vsel %vm674, %v2027, %v2029
        %2031 = vrot.lane.b32.xlu0 %v2028, 126
        %v2032 = vpop.permute.xlu0 %2031
        %2033 = vrot.lane.b32.xlu0 %v2030, 126
        %v2034 = vpop.permute.xlu0 %2033
        %v2037 = vadd.f32 %v2016, %v2032
        %v2038 = vadd.f32 %v2017, %v2034
        %s2039 = sld [smem:[#allocation6 + $0x42]]
        %v2040 = vstv %s2039
        %v2041 = vmul.f32 %v2040, %v794
        %v2042 = vmul.f32 %v2040, %v795
        %v2043 = vmul.f32 %v2040, %v796
        %v2047 = vrot.slane %v2041, 2
        %v2048 = vrot.slane %v2042, 2
        %v2049 = vsel %vm674, %v2047, %v2048
        %v2050 = vrot.slane %v2043, 2
        %v2051 = vsel %vm674, %v2048, %v2050
        %2052 = vrot.lane.b32.xlu0 %v2049, 125
        %v2053 = vpop.permute.xlu0 %2052
        %2054 = vrot.lane.b32.xlu0 %v2051, 125
        %v2055 = vpop.permute.xlu0 %2054
        %v2058 = vadd.f32 %v2037, %v2053
        %v2059 = vadd.f32 %v2038, %v2055
        %s2060 = sld [smem:[#allocation6 + $0x43]]
        %v2061 = vstv %s2060
        %v2062 = vmul.f32 %v2061, %v794
        %v2063 = vmul.f32 %v2061, %v795
        %v2064 = vmul.f32 %v2061, %v796
        %v2068 = vrot.slane %v2062, 2
        %v2069 = vrot.slane %v2063, 2
        %v2070 = vsel %vm674, %v2068, %v2069
        %v2071 = vrot.slane %v2064, 2
        %v2072 = vsel %vm674, %v2069, %v2071
        %2073 = vrot.lane.b32.xlu0 %v2070, 124
        %v2074 = vpop.permute.xlu0 %2073
        %2075 = vrot.lane.b32.xlu0 %v2072, 124
        %v2076 = vpop.permute.xlu0 %2075
        %v2079 = vadd.f32 %v2058, %v2074
        %v2080 = vadd.f32 %v2059, %v2076
        %s2081 = sld [smem:[#allocation6 + $0x44]]
        %v2082 = vstv %s2081
        %v2083 = vmul.f32 %v2082, %v794
        %v2084 = vmul.f32 %v2082, %v795
        %v2085 = vmul.f32 %v2082, %v796
        %v2089 = vrot.slane %v2083, 2
        %v2090 = vrot.slane %v2084, 2
        %v2091 = vsel %vm674, %v2089, %v2090
        %v2092 = vrot.slane %v2085, 2
        %v2093 = vsel %vm674, %v2090, %v2092
        %2094 = vrot.lane.b32.xlu0 %v2091, 123
        %v2095 = vpop.permute.xlu0 %2094
        %2096 = vrot.lane.b32.xlu0 %v2093, 123
        %v2097 = vpop.permute.xlu0 %2096
        %v2100 = vadd.f32 %v2079, %v2095
        %v2101 = vadd.f32 %v2080, %v2097
        %s2102 = sld [smem:[#allocation6 + $0x45]]
        %v2103 = vstv %s2102
        %v2104 = vmul.f32 %v2103, %v794
        %v2105 = vmul.f32 %v2103, %v795
        %v2106 = vmul.f32 %v2103, %v796
        %v2110 = vrot.slane %v2104, 2
        %v2111 = vrot.slane %v2105, 2
        %v2112 = vsel %vm674, %v2110, %v2111
        %v2113 = vrot.slane %v2106, 2
        %v2114 = vsel %vm674, %v2111, %v2113
        %2115 = vrot.lane.b32.xlu0 %v2112, 122
        %v2116 = vpop.permute.xlu0 %2115
        %2117 = vrot.lane.b32.xlu0 %v2114, 122
        %v2118 = vpop.permute.xlu0 %2117
        %v2121 = vadd.f32 %v2100, %v2116
        %v2122 = vadd.f32 %v2101, %v2118
        %s2123 = sld [smem:[#allocation6 + $0x46]]
        %v2124 = vstv %s2123
        %v2125 = vmul.f32 %v2124, %v794
        %v2126 = vmul.f32 %v2124, %v795
        %v2127 = vmul.f32 %v2124, %v796
        %v2131 = vrot.slane %v2125, 3
        %v2132 = vrot.slane %v2126, 3
        %v2133 = vsel %vm672, %v2131, %v2132
        %v2134 = vrot.slane %v2127, 3
        %v2135 = vsel %vm672, %v2132, %v2134
        %v2138 = vadd.f32 %v2121, %v2133
        %v2139 = vadd.f32 %v2122, %v2135
        %s2140 = sld [smem:[#allocation6 + $0x47]]
        %v2141 = vstv %s2140
        %v2142 = vmul.f32 %v2141, %v794
        %v2143 = vmul.f32 %v2141, %v795
        %v2144 = vmul.f32 %v2141, %v796
        %v2148 = vrot.slane %v2142, 3
        %v2149 = vrot.slane %v2143, 3
        %v2150 = vsel %vm672, %v2148, %v2149
        %v2151 = vrot.slane %v2144, 3
        %v2152 = vsel %vm672, %v2149, %v2151
        %2153 = vrot.lane.b32.xlu0 %v2150, 127
        %v2154 = vpop.permute.xlu0 %2153
        %2155 = vrot.lane.b32.xlu0 %v2152, 127
        %v2156 = vpop.permute.xlu0 %2155
        %v2159 = vadd.f32 %v2138, %v2154
        %v2160 = vadd.f32 %v2139, %v2156
        %s2161 = sld [smem:[#allocation6 + $0x48]]
        %v2162 = vstv %s2161
        %v2163 = vmul.f32 %v2162, %v794
        %v2164 = vmul.f32 %v2162, %v795
        %v2165 = vmul.f32 %v2162, %v796
        %v2169 = vrot.slane %v2163, 3
        %v2170 = vrot.slane %v2164, 3
        %v2171 = vsel %vm672, %v2169, %v2170
        %v2172 = vrot.slane %v2165, 3
        %v2173 = vsel %vm672, %v2170, %v2172
        %2174 = vrot.lane.b32.xlu0 %v2171, 126
        %v2175 = vpop.permute.xlu0 %2174
        %2176 = vrot.lane.b32.xlu0 %v2173, 126
        %v2177 = vpop.permute.xlu0 %2176
        %v2180 = vadd.f32 %v2159, %v2175
        %v2181 = vadd.f32 %v2160, %v2177
        %s2182 = sld [smem:[#allocation6 + $0x49]]
        %v2183 = vstv %s2182
        %v2184 = vmul.f32 %v2183, %v794
        %v2185 = vmul.f32 %v2183, %v795
        %v2186 = vmul.f32 %v2183, %v796
        %v2190 = vrot.slane %v2184, 3
        %v2191 = vrot.slane %v2185, 3
        %v2192 = vsel %vm672, %v2190, %v2191
        %v2193 = vrot.slane %v2186, 3
        %v2194 = vsel %vm672, %v2191, %v2193
        %2195 = vrot.lane.b32.xlu0 %v2192, 125
        %v2196 = vpop.permute.xlu0 %2195
        %2197 = vrot.lane.b32.xlu0 %v2194, 125
        %v2198 = vpop.permute.xlu0 %2197
        %v2201 = vadd.f32 %v2180, %v2196
        %v2202 = vadd.f32 %v2181, %v2198
        %s2203 = sld [smem:[#allocation6 + $0x4a]]
        %v2204 = vstv %s2203
        %v2205 = vmul.f32 %v2204, %v794
        %v2206 = vmul.f32 %v2204, %v795
        %v2207 = vmul.f32 %v2204, %v796
        %v2211 = vrot.slane %v2205, 3
        %v2212 = vrot.slane %v2206, 3
        %v2213 = vsel %vm672, %v2211, %v2212
        %v2214 = vrot.slane %v2207, 3
        %v2215 = vsel %vm672, %v2212, %v2214
        %2216 = vrot.lane.b32.xlu0 %v2213, 124
        %v2217 = vpop.permute.xlu0 %2216
        %2218 = vrot.lane.b32.xlu0 %v2215, 124
        %v2219 = vpop.permute.xlu0 %2218
        %v2222 = vadd.f32 %v2201, %v2217
        %v2223 = vadd.f32 %v2202, %v2219
        %s2224 = sld [smem:[#allocation6 + $0x4b]]
        %v2225 = vstv %s2224
        %v2226 = vmul.f32 %v2225, %v794
        %v2227 = vmul.f32 %v2225, %v795
        %v2228 = vmul.f32 %v2225, %v796
        %v2232 = vrot.slane %v2226, 3
        %v2233 = vrot.slane %v2227, 3
        %v2234 = vsel %vm672, %v2232, %v2233
        %v2235 = vrot.slane %v2228, 3
        %v2236 = vsel %vm672, %v2233, %v2235
        %2237 = vrot.lane.b32.xlu0 %v2234, 123
        %v2238 = vpop.permute.xlu0 %2237
        %2239 = vrot.lane.b32.xlu0 %v2236, 123
        %v2240 = vpop.permute.xlu0 %2239
        %v2243 = vadd.f32 %v2222, %v2238
        %v2244 = vadd.f32 %v2223, %v2240
        %s2245 = sld [smem:[#allocation6 + $0x4c]]
        %v2246 = vstv %s2245
        %v2247 = vmul.f32 %v2246, %v794
        %v2248 = vmul.f32 %v2246, %v795
        %v2249 = vmul.f32 %v2246, %v796
        %v2253 = vrot.slane %v2247, 3
        %v2254 = vrot.slane %v2248, 3
        %v2255 = vsel %vm672, %v2253, %v2254
        %v2256 = vrot.slane %v2249, 3
        %v2257 = vsel %vm672, %v2254, %v2256
        %2258 = vrot.lane.b32.xlu0 %v2255, 122
        %v2259 = vpop.permute.xlu0 %2258
        %2260 = vrot.lane.b32.xlu0 %v2257, 122
        %v2261 = vpop.permute.xlu0 %2260
        %v2264 = vadd.f32 %v2243, %v2259
        %v2265 = vadd.f32 %v2244, %v2261
        %s2266 = sld [smem:[#allocation6 + $0x4d]]
        %v2267 = vstv %s2266
        %v2268 = vmul.f32 %v2267, %v794
        %v2269 = vmul.f32 %v2267, %v795
        %v2270 = vmul.f32 %v2267, %v796
        %v2274 = vrot.slane %v2268, 4
        %v2275 = vrot.slane %v2269, 4
        %v2276 = vsel %vm670, %v2274, %v2275
        %v2277 = vrot.slane %v2270, 4
        %v2278 = vsel %vm670, %v2275, %v2277
        %v2281 = vadd.f32 %v2264, %v2276
        %v2282 = vadd.f32 %v2265, %v2278
        %s2283 = sld [smem:[#allocation6 + $0x4e]]
        %v2284 = vstv %s2283
        %v2285 = vmul.f32 %v2284, %v794
        %v2286 = vmul.f32 %v2284, %v795
        %v2287 = vmul.f32 %v2284, %v796
        %v2291 = vrot.slane %v2285, 4
        %v2292 = vrot.slane %v2286, 4
        %v2293 = vsel %vm670, %v2291, %v2292
        %v2294 = vrot.slane %v2287, 4
        %v2295 = vsel %vm670, %v2292, %v2294
        %2296 = vrot.lane.b32.xlu0 %v2293, 127
        %v2297 = vpop.permute.xlu0 %2296
        %2298 = vrot.lane.b32.xlu0 %v2295, 127
        %v2299 = vpop.permute.xlu0 %2298
        %v2302 = vadd.f32 %v2281, %v2297
        %v2303 = vadd.f32 %v2282, %v2299
        %s2304 = sld [smem:[#allocation6 + $0x4f]]
        %v2305 = vstv %s2304
        %v2306 = vmul.f32 %v2305, %v794
        %v2307 = vmul.f32 %v2305, %v795
        %v2308 = vmul.f32 %v2305, %v796
        %v2312 = vrot.slane %v2306, 4
        %v2313 = vrot.slane %v2307, 4
        %v2314 = vsel %vm670, %v2312, %v2313
        %v2315 = vrot.slane %v2308, 4
        %v2316 = vsel %vm670, %v2313, %v2315
        %2317 = vrot.lane.b32.xlu0 %v2314, 126
        %v2318 = vpop.permute.xlu0 %2317
        %2319 = vrot.lane.b32.xlu0 %v2316, 126
        %v2320 = vpop.permute.xlu0 %2319
        %v2323 = vadd.f32 %v2302, %v2318
        %v2324 = vadd.f32 %v2303, %v2320
        %s2325 = sld [smem:[#allocation6 + $0x50]]
        %v2326 = vstv %s2325
        %v2327 = vmul.f32 %v2326, %v794
        %v2328 = vmul.f32 %v2326, %v795
        %v2329 = vmul.f32 %v2326, %v796
        %v2333 = vrot.slane %v2327, 4
        %v2334 = vrot.slane %v2328, 4
        %v2335 = vsel %vm670, %v2333, %v2334
        %v2336 = vrot.slane %v2329, 4
        %v2337 = vsel %vm670, %v2334, %v2336
        %2338 = vrot.lane.b32.xlu0 %v2335, 125
        %v2339 = vpop.permute.xlu0 %2338
        %2340 = vrot.lane.b32.xlu0 %v2337, 125
        %v2341 = vpop.permute.xlu0 %2340
        %v2344 = vadd.f32 %v2323, %v2339
        %v2345 = vadd.f32 %v2324, %v2341
        %s2346 = sld [smem:[#allocation6 + $0x51]]
        %v2347 = vstv %s2346
        %v2348 = vmul.f32 %v2347, %v794
        %v2349 = vmul.f32 %v2347, %v795
        %v2350 = vmul.f32 %v2347, %v796
        %v2354 = vrot.slane %v2348, 4
        %v2355 = vrot.slane %v2349, 4
        %v2356 = vsel %vm670, %v2354, %v2355
        %v2357 = vrot.slane %v2350, 4
        %v2358 = vsel %vm670, %v2355, %v2357
        %2359 = vrot.lane.b32.xlu0 %v2356, 124
        %v2360 = vpop.permute.xlu0 %2359
        %2361 = vrot.lane.b32.xlu0 %v2358, 124
        %v2362 = vpop.permute.xlu0 %2361
        %v2365 = vadd.f32 %v2344, %v2360
        %v2366 = vadd.f32 %v2345, %v2362
        %s2367 = sld [smem:[#allocation6 + $0x52]]
        %v2368 = vstv %s2367
        %v2369 = vmul.f32 %v2368, %v794
        %v2370 = vmul.f32 %v2368, %v795
        %v2371 = vmul.f32 %v2368, %v796
        %v2375 = vrot.slane %v2369, 4
        %v2376 = vrot.slane %v2370, 4
        %v2377 = vsel %vm670, %v2375, %v2376
        %v2378 = vrot.slane %v2371, 4
        %v2379 = vsel %vm670, %v2376, %v2378
        %2380 = vrot.lane.b32.xlu0 %v2377, 123
        %v2381 = vpop.permute.xlu0 %2380
        %2382 = vrot.lane.b32.xlu0 %v2379, 123
        %v2383 = vpop.permute.xlu0 %2382
        %v2386 = vadd.f32 %v2365, %v2381
        %v2387 = vadd.f32 %v2366, %v2383
        %s2388 = sld [smem:[#allocation6 + $0x53]]
        %v2389 = vstv %s2388
        %v2390 = vmul.f32 %v2389, %v794
        %v2391 = vmul.f32 %v2389, %v795
        %v2392 = vmul.f32 %v2389, %v796
        %v2396 = vrot.slane %v2390, 4
        %v2397 = vrot.slane %v2391, 4
        %v2398 = vsel %vm670, %v2396, %v2397
        %v2399 = vrot.slane %v2392, 4
        %v2400 = vsel %vm670, %v2397, %v2399
        %2401 = vrot.lane.b32.xlu0 %v2398, 122
        %v2402 = vpop.permute.xlu0 %2401
        %2403 = vrot.lane.b32.xlu0 %v2400, 122
        %v2404 = vpop.permute.xlu0 %2403
        %v2407 = vadd.f32 %v2386, %v2402
        %v2408 = vadd.f32 %v2387, %v2404
        %s2409 = sld [smem:[#allocation6 + $0x54]]
        %v2410 = vstv %s2409
        %v2411 = vmul.f32 %v2410, %v794
        %v2412 = vmul.f32 %v2410, %v795
        %v2413 = vmul.f32 %v2410, %v796
        %v2417 = vrot.slane %v2411, 5
        %v2418 = vrot.slane %v2412, 5
        %v2419 = vsel %vm668, %v2417, %v2418
        %v2420 = vrot.slane %v2413, 5
        %v2421 = vsel %vm668, %v2418, %v2420
        %v2424 = vadd.f32 %v2407, %v2419
        %v2425 = vadd.f32 %v2408, %v2421
        %s2426 = sld [smem:[#allocation6 + $0x55]]
        %v2427 = vstv %s2426
        %v2428 = vmul.f32 %v2427, %v794
        %v2429 = vmul.f32 %v2427, %v795
        %v2430 = vmul.f32 %v2427, %v796
        %v2434 = vrot.slane %v2428, 5
        %v2435 = vrot.slane %v2429, 5
        %v2436 = vsel %vm668, %v2434, %v2435
        %v2437 = vrot.slane %v2430, 5
        %v2438 = vsel %vm668, %v2435, %v2437
        %2439 = vrot.lane.b32.xlu0 %v2436, 127
        %v2440 = vpop.permute.xlu0 %2439
        %2441 = vrot.lane.b32.xlu0 %v2438, 127
        %v2442 = vpop.permute.xlu0 %2441
        %v2445 = vadd.f32 %v2424, %v2440
        %v2446 = vadd.f32 %v2425, %v2442
        %s2447 = sld [smem:[#allocation6 + $0x56]]
        %v2448 = vstv %s2447
        %v2449 = vmul.f32 %v2448, %v794
        %v2450 = vmul.f32 %v2448, %v795
        %v2451 = vmul.f32 %v2448, %v796
        %v2455 = vrot.slane %v2449, 5
        %v2456 = vrot.slane %v2450, 5
        %v2457 = vsel %vm668, %v2455, %v2456
        %v2458 = vrot.slane %v2451, 5
        %v2459 = vsel %vm668, %v2456, %v2458
        %2460 = vrot.lane.b32.xlu0 %v2457, 126
        %v2461 = vpop.permute.xlu0 %2460
        %2462 = vrot.lane.b32.xlu0 %v2459, 126
        %v2463 = vpop.permute.xlu0 %2462
        %v2466 = vadd.f32 %v2445, %v2461
        %v2467 = vadd.f32 %v2446, %v2463
        %s2468 = sld [smem:[#allocation6 + $0x57]]
        %v2469 = vstv %s2468
        %v2470 = vmul.f32 %v2469, %v794
        %v2471 = vmul.f32 %v2469, %v795
        %v2472 = vmul.f32 %v2469, %v796
        %v2476 = vrot.slane %v2470, 5
        %v2477 = vrot.slane %v2471, 5
        %v2478 = vsel %vm668, %v2476, %v2477
        %v2479 = vrot.slane %v2472, 5
        %v2480 = vsel %vm668, %v2477, %v2479
        %2481 = vrot.lane.b32.xlu0 %v2478, 125
        %v2482 = vpop.permute.xlu0 %2481
        %2483 = vrot.lane.b32.xlu0 %v2480, 125
        %v2484 = vpop.permute.xlu0 %2483
        %v2487 = vadd.f32 %v2466, %v2482
        %v2488 = vadd.f32 %v2467, %v2484
        %s2489 = sld [smem:[#allocation6 + $0x58]]
        %v2490 = vstv %s2489
        %v2491 = vmul.f32 %v2490, %v794
        %v2492 = vmul.f32 %v2490, %v795
        %v2493 = vmul.f32 %v2490, %v796
        %v2497 = vrot.slane %v2491, 5
        %v2498 = vrot.slane %v2492, 5
        %v2499 = vsel %vm668, %v2497, %v2498
        %v2500 = vrot.slane %v2493, 5
        %v2501 = vsel %vm668, %v2498, %v2500
        %2502 = vrot.lane.b32.xlu0 %v2499, 124
        %v2503 = vpop.permute.xlu0 %2502
        %2504 = vrot.lane.b32.xlu0 %v2501, 124
        %v2505 = vpop.permute.xlu0 %2504
        %v2508 = vadd.f32 %v2487, %v2503
        %v2509 = vadd.f32 %v2488, %v2505
        %s2510 = sld [smem:[#allocation6 + $0x59]]
        %v2511 = vstv %s2510
        %v2512 = vmul.f32 %v2511, %v794
        %v2513 = vmul.f32 %v2511, %v795
        %v2514 = vmul.f32 %v2511, %v796
        %v2518 = vrot.slane %v2512, 5
        %v2519 = vrot.slane %v2513, 5
        %v2520 = vsel %vm668, %v2518, %v2519
        %v2521 = vrot.slane %v2514, 5
        %v2522 = vsel %vm668, %v2519, %v2521
        %2523 = vrot.lane.b32.xlu0 %v2520, 123
        %v2524 = vpop.permute.xlu0 %2523
        %2525 = vrot.lane.b32.xlu0 %v2522, 123
        %v2526 = vpop.permute.xlu0 %2525
        %v2529 = vadd.f32 %v2508, %v2524
        %v2530 = vadd.f32 %v2509, %v2526
        %s2531 = sld [smem:[#allocation6 + $0x5a]]
        %v2532 = vstv %s2531
        %v2533 = vmul.f32 %v2532, %v794
        %v2534 = vmul.f32 %v2532, %v795
        %v2535 = vmul.f32 %v2532, %v796
        %v2539 = vrot.slane %v2533, 5
        %v2540 = vrot.slane %v2534, 5
        %v2541 = vsel %vm668, %v2539, %v2540
        %v2542 = vrot.slane %v2535, 5
        %v2543 = vsel %vm668, %v2540, %v2542
        %2544 = vrot.lane.b32.xlu0 %v2541, 122
        %v2545 = vpop.permute.xlu0 %2544
        %2546 = vrot.lane.b32.xlu0 %v2543, 122
        %v2547 = vpop.permute.xlu0 %2546
        %v2550 = vadd.f32 %v2529, %v2545
        %v2551 = vadd.f32 %v2530, %v2547
        %s2552 = sld [smem:[#allocation6 + $0x5b]]
        %v2553 = vstv %s2552
        %v2554 = vmul.f32 %v2553, %v794
        %v2555 = vmul.f32 %v2553, %v795
        %v2556 = vmul.f32 %v2553, %v796
        %v2560 = vrot.slane %v2554, 6
        %v2561 = vrot.slane %v2555, 6
        %v2562 = vsel %vm449, %v2560, %v2561
        %v2563 = vrot.slane %v2556, 6
        %v2564 = vsel %vm449, %v2561, %v2563
        %v2567 = vadd.f32 %v2550, %v2562
        %v2568 = vadd.f32 %v2551, %v2564
        %s2569 = sld [smem:[#allocation6 + $0x5c]]
        %v2570 = vstv %s2569
        %v2571 = vmul.f32 %v2570, %v794
        %v2572 = vmul.f32 %v2570, %v795
        %v2573 = vmul.f32 %v2570, %v796
        %v2577 = vrot.slane %v2571, 6
        %v2578 = vrot.slane %v2572, 6
        %v2579 = vsel %vm449, %v2577, %v2578
        %v2580 = vrot.slane %v2573, 6
        %v2581 = vsel %vm449, %v2578, %v2580
        %2582 = vrot.lane.b32.xlu0 %v2579, 127
        %v2583 = vpop.permute.xlu0 %2582
        %2584 = vrot.lane.b32.xlu0 %v2581, 127
        %v2585 = vpop.permute.xlu0 %2584
        %v2588 = vadd.f32 %v2567, %v2583
        %v2589 = vadd.f32 %v2568, %v2585
        %s2590 = sld [smem:[#allocation6 + $0x5d]]
        %v2591 = vstv %s2590
        %v2592 = vmul.f32 %v2591, %v794
        %v2593 = vmul.f32 %v2591, %v795
        %v2594 = vmul.f32 %v2591, %v796
        %v2598 = vrot.slane %v2592, 6
        %v2599 = vrot.slane %v2593, 6
        %v2600 = vsel %vm449, %v2598, %v2599
        %v2601 = vrot.slane %v2594, 6
        %v2602 = vsel %vm449, %v2599, %v2601
        %2603 = vrot.lane.b32.xlu0 %v2600, 126
        %v2604 = vpop.permute.xlu0 %2603
        %2605 = vrot.lane.b32.xlu0 %v2602, 126
        %v2606 = vpop.permute.xlu0 %2605
        %v2609 = vadd.f32 %v2588, %v2604
        %v2610 = vadd.f32 %v2589, %v2606
        %s2611 = sld [smem:[#allocation6 + $0x5e]]
        %v2612 = vstv %s2611
        %v2613 = vmul.f32 %v2612, %v794
        %v2614 = vmul.f32 %v2612, %v795
        %v2615 = vmul.f32 %v2612, %v796
        %v2619 = vrot.slane %v2613, 6
        %v2620 = vrot.slane %v2614, 6
        %v2621 = vsel %vm449, %v2619, %v2620
        %v2622 = vrot.slane %v2615, 6
        %v2623 = vsel %vm449, %v2620, %v2622
        %2624 = vrot.lane.b32.xlu0 %v2621, 125
        %v2625 = vpop.permute.xlu0 %2624
        %2626 = vrot.lane.b32.xlu0 %v2623, 125
        %v2627 = vpop.permute.xlu0 %2626
        %v2630 = vadd.f32 %v2609, %v2625
        %v2631 = vadd.f32 %v2610, %v2627
        %s2632 = sld [smem:[#allocation6 + $0x5f]]
        %v2633 = vstv %s2632
        %v2634 = vmul.f32 %v2633, %v794
        %v2635 = vmul.f32 %v2633, %v795
        %v2636 = vmul.f32 %v2633, %v796
        %v2640 = vrot.slane %v2634, 6
        %v2641 = vrot.slane %v2635, 6
        %v2642 = vsel %vm449, %v2640, %v2641
        %v2643 = vrot.slane %v2636, 6
        %v2644 = vsel %vm449, %v2641, %v2643
        %2645 = vrot.lane.b32.xlu0 %v2642, 124
        %v2646 = vpop.permute.xlu0 %2645
        %2647 = vrot.lane.b32.xlu0 %v2644, 124
        %v2648 = vpop.permute.xlu0 %2647
        %v2651 = vadd.f32 %v2630, %v2646
        %v2652 = vadd.f32 %v2631, %v2648
        %s2653 = sld [smem:[#allocation6 + $0x60]]
        %v2654 = vstv %s2653
        %v2655 = vmul.f32 %v2654, %v794
        %v2656 = vmul.f32 %v2654, %v795
        %v2657 = vmul.f32 %v2654, %v796
        %v2661 = vrot.slane %v2655, 6
        %v2662 = vrot.slane %v2656, 6
        %v2663 = vsel %vm449, %v2661, %v2662
        %v2664 = vrot.slane %v2657, 6
        %v2665 = vsel %vm449, %v2662, %v2664
        %2666 = vrot.lane.b32.xlu0 %v2663, 123
        %v2667 = vpop.permute.xlu0 %2666
        %2668 = vrot.lane.b32.xlu0 %v2665, 123
        %v2669 = vpop.permute.xlu0 %2668
        %v2672 = vadd.f32 %v2651, %v2667
        %v2673 = vadd.f32 %v2652, %v2669
        %s2674 = sld [smem:[#allocation6 + $0x61]]
        %v2675 = vstv %s2674
        %v2676 = vmul.f32 %v2675, %v794
        %v2677 = vmul.f32 %v2675, %v795
        %v2678 = vmul.f32 %v2675, %v796
        %v2682 = vrot.slane %v2676, 6
        %v2683 = vrot.slane %v2677, 6
        %v2684 = vsel %vm449, %v2682, %v2683
        %v2685 = vrot.slane %v2678, 6
        %v2686 = vsel %vm449, %v2683, %v2685
        %2687 = vrot.lane.b32.xlu0 %v2684, 122
        %v2688 = vpop.permute.xlu0 %2687
        %2689 = vrot.lane.b32.xlu0 %v2686, 122
        %v2690 = vpop.permute.xlu0 %2689
        %v2693 = vadd.f32 %v2672, %v2688
        %v2694 = vadd.f32 %v2673, %v2690
        %v2695 = vxor.u32 %v2693, 2147483648
        %v2696 = vxor.u32 %v2694, 2147483648
        %v2697 = vmul.f32 %v2695, 1.442695
        %v2698 = vpow.pop %v2697
        %v2699 = vmul.f32 %v2696, 1.442695
        %v2700 = vpow.pop %v2699
        %v2701 = vadd.f32 %v2698, 1.0
        %v2702 = vadd.f32 %v2700, 1.0
        %v2703 = vrcp.pop %v2701
        %v2704 = vmul.f32 1.0, %v2703
        %v2705 = vrcp.pop %v2702
        %v2706 = vmul.f32 1.0, %v2705
        %v2708 = vrot.slane %v2704, 1
        %2709 = vrot.lane.b32.xlu0 %v2708, 16
        %v2710 = vpop.permute.xlu0 %2709
        %v2712 = vrot.slane %v2704, 2
        %2713 = vrot.lane.b32.xlu0 %v2712, 32
        %v2714 = vpop.permute.xlu0 %2713
        %v2716 = vrot.slane %v2704, 3
        %2717 = vrot.lane.b32.xlu0 %v2716, 48
        %v2718 = vpop.permute.xlu0 %2717
        %v2720 = vrot.slane %v2704, 4
        %2721 = vrot.lane.b32.xlu0 %v2720, 64
        %v2722 = vpop.permute.xlu0 %2721
        %v2724 = vrot.slane %v2704, 5
        %2725 = vrot.lane.b32.xlu0 %v2724, 80
        %v2726 = vpop.permute.xlu0 %2725
        %v2728 = vrot.slane %v2704, 6
        %2729 = vrot.lane.b32.xlu0 %v2728, 96
        %v2730 = vpop.permute.xlu0 %2729
        %v2732 = vrot.slane %v2704, 7
        %2733 = vrot.lane.b32.xlu0 %v2732, 112
        %v2734 = vpop.permute.xlu0 %2733
        %v2737 = vrot.slane %v2706, 1
        %2738 = vrot.lane.b32.xlu0 %v2737, 16
        %v2739 = vpop.permute.xlu0 %2738
        %v2741 = vrot.slane %v2706, 2
        %2742 = vrot.lane.b32.xlu0 %v2741, 32
        %v2743 = vpop.permute.xlu0 %2742
        %v2745 = vrot.slane %v2706, 3
        %2746 = vrot.lane.b32.xlu0 %v2745, 48
        %v2747 = vpop.permute.xlu0 %2746
        %v2749 = vrot.slane %v2706, 4
        %2750 = vrot.lane.b32.xlu0 %v2749, 64
        %v2751 = vpop.permute.xlu0 %2750
        %v2753 = vrot.slane %v2706, 5
        %2754 = vrot.lane.b32.xlu0 %v2753, 80
        %v2755 = vpop.permute.xlu0 %2754
        %v2757 = vrot.slane %v2706, 6
        %2758 = vrot.lane.b32.xlu0 %v2757, 96
        %v2759 = vpop.permute.xlu0 %2758
        %v2761 = vrot.slane %v2706, 7
        %2762 = vrot.lane.b32.xlu0 %v2761, 112
        %v2763 = vpop.permute.xlu0 %2762
        %vm2765 = vcmask 130048
        %v2766 = vsel %vm2765, %v2704, %v2710
        %v2767 = vsel %vm333, %v2766, %v2714
        %vm2768 = vcmask 392192
        %v2769 = vsel %vm2768, %v2767, %v2718
        %vm2770 = vcmask 523264
        %v2771 = vsel %vm2770, %v2769, %v2722
        %vm2772 = vcmask 654336
        %v2773 = vsel %vm2772, %v2771, %v2726
        %vm2774 = vcmask 785408
        %v2775 = vsel %vm2774, %v2773, %v2730
        %vm2776 = vcmask 916480
        %v2777 = vsel %vm2776, %v2775, %v2734
        %v2778 = vsel %vm2765, %v2706, %v2739
        %v2779 = vsel %vm333, %v2778, %v2743
        %v2780 = vsel %vm2768, %v2779, %v2747
        %v2781 = vsel %vm2770, %v2780, %v2751
        %v2782 = vsel %vm2772, %v2781, %v2755
        %v2783 = vsel %vm2774, %v2782, %v2759
        %v2784 = vsel %vm2776, %v2783, %v2763
        %2786 = vset.pattern.permute.xlu0 0
        %2787 = vperm.xlu0 %2786, %v575
        %v2788 = vpop.permute.xlu0 %2787
        %2791 = vset.pattern.permute.xlu0 0
        %2792 = vperm.xlu0 %2791, %v577
        %v2793 = vpop.permute.xlu0 %2792
        %2796 = vset.pattern.permute.xlu0 0
        %2797 = vperm.xlu0 %2796, %v579
        %v2798 = vpop.permute.xlu0 %2797
        %2801 = vset.pattern.permute.xlu0 0
        %2802 = vperm.xlu0 %2801, %v581
        %v2803 = vpop.permute.xlu0 %2802
        %v2805 = vlaneseq
        %v2806 = vshrl.u32 %v2805, 7
        %v2807 = vsub.s32 0, %v2806
        %v2808 = vrot.slane %v2777, %v2807
        %v2809 = vlaneseq
        %v2810 = vshrl.u32 %v2809, 7
        %v2811 = vsub.s32 0, %v2810
        %v2812 = vrot.slane %v2784, %v2811
        %v2813 = vmul.f32 %v2788, %v2808
        %v2814 = vmul.f32 %v2788, %v2812
        %v2815 = vmul.f32 %v2793, %v2808
        %v2816 = vmul.f32 %v2793, %v2812
        %v2817 = vmul.f32 %v2798, %v2808
        %v2818 = vmul.f32 %v2798, %v2812
        %v2819 = vmul.f32 %v2803, %v2808
        %v2820 = vmul.f32 %v2803, %v2812
        %2821 = vst [vmem:[%s283] sm:$0xff] %v2813
        %2822 = vst [vmem:[%s283 + $0x8] sm:$0xff] %v2814
        %2823 = vst [vmem:[%s283 + $0x10] sm:$0xff] %v2815
        %2824 = vst [vmem:[%s283 + $0x18] sm:$0xff] %v2816
        %2825 = vst [vmem:[%s283 + $0x20] sm:$0xff] %v2817
        %2826 = vst [vmem:[%s283 + $0x28] sm:$0xff] %v2818
        %2827 = vst [vmem:[%s283 + $0x30] sm:$0xff] %v2819
        %2828 = vst [vmem:[%s283 + $0x38] sm:$0xff] %v2820
        %s2829 = sand.u32 %s163, 1
        %s2830 = scalar_lea.sflag [#allocation4], %s2829
        %s2831 = sand.u32 %s163, 1
        %s2832 = smul.addr %s2831, 64
        %s2833 = scalar_lea.vmem [#allocation7], %s2832
        // Predicated region
        $region53: #{tpu_custom_call.1} parent=43 // pred_check
          %p2834 = pneg %p173
        $region54: #{tpu_custom_call.1} parent=43 // pred_check_branch
          %2836 = sbr.rel (%p2834) target = $region56
        $region55: #{tpu_custom_call.1} parent=43 // pred_region
          %s2838 = ssub.s32 1024, 1024
          %2839 = vsyncadd %s2830, %s2838
          %s2840 = smul.addr %s24, 8
          %s2841 = smul.addr %s2840, 128
          %s2842 = scalar_lea.hbm %s6, %s2841
          %s2843 = sshll.u32 %s2833, 4
          %s2844 = int_to_ptr.vmem [resolvable:$true] %s2843
          %2849 = dma.vmem_to_hbm [thread:$0]  %s2844, 1024, %s2842, %s2830, 256, 256, 16
        $region56: #{tpu_custom_call.1} parent=43 // pred_fallthru
          _
      $region44: #{tpu_custom_call.1} parent=5 // pred_fallthru
        _
      %p2850 = scmp.le.s32.totalorder 2, %s19
      // Predicated region
      $region57: #{tpu_custom_call.1} parent=5 // pred_check
        %p2851 = pneg %p2850
      $region58: #{tpu_custom_call.1} parent=5 // pred_check_branch
        %2853 = sbr.rel (%p2851) target = $region60
      $region59: #{tpu_custom_call.1} parent=5 // pred_region
        %s2854 = ssub.s32 %s19, 2
        // Predicated region
        $region61: #{tpu_custom_call.1} parent=59 // pred_check
          %p2855 = pneg %p179
        $region62: #{tpu_custom_call.1} parent=59 // pred_check_branch
          %2857 = sbr.rel (%p2855) target = $region64
        $region63: #{tpu_custom_call.1} parent=59 // pred_region
          %s2858 = sand.u32 %s164, 1
          %s2859 = scalar_lea.sflag [#allocation4], %s2858
          %s2860 = sand.u32 %s164, 1
          %s2861 = smul.addr %s2860, 64
          %s2862 = scalar_lea.vmem [#allocation7], %s2861
          %2863 = dma.done %s2859, 1024
        $region64: #{tpu_custom_call.1} parent=59 // pred_fallthru
          _
      $region60: #{tpu_custom_call.1} parent=5 // pred_fallthru
        _
    $region6: #{tpu_custom_call.1} parent=1 // loop_footer
      %s23 = sadd.s32 1, %s19
    $region7: #{tpu_custom_call.1} parent=1 // loop_footer_branch
      %18 = sbr.rel target = $region3
    $region8: #{tpu_custom_call.1} parent=1 // loop_exit
      _
    %2864 = vsyncpa [#allocation3], 1
    %s2865 = scalar_lea.sflag [#allocation3], 1
    %2866 = vsyncpa %s2865, 1
    %2867 = vsyncpa [#allocation4], 1
    %s2868 = scalar_lea.sflag [#allocation4], 1
    %2869 = vsyncpa %s2868, 1
    %2870 = vsyncpa [#allocation5], 1
    %s2871 = scalar_lea.sflag [#allocation5], 1
    %2872 = vsyncpa %s2871, 1

</llo_original>
